<compile_context>
chip_gen: v7x
topology: tpu7x:2x2x1
jax: 0.10.0
libtpu: 0.0.40
codegen_flags: <defaults>
</compile_context>

<pallas_src>
import functools

import jax
import jax.numpy as jnp
from jax import lax
from jax.experimental import pallas as pl
from jax.experimental.pallas import tpu as pltpu


def _resnet_block_kernel(x_ref, w1_ref, s1_ref, b1_ref,
                         w2_ref, s2_ref, b2_ref,
                         wd_ref, sd_ref, bd_ref,
                         o_ref,
                         col_ref, y1p_ref, res_ref,
                         *, H, W, Cin_p, Cout_p, K):
    """One batch element per grid step (batch axis is 'parallel')."""
    pad = (K - 1) // 2
    Hp, Wp = H + 2 * pad, W + 2 * pad
    HW = H * W
    KK = K * K

    # ---- im2col for conv1: the K*K shifted (HW, Cin_p) windows of the padded
    #      input, cast to bf16, written to 128-aligned column slots (unmasked
    #      stores: full sublane extent, lane-aligned columns).
    for dh in range(K):
        for dw in range(K):
            t = dh * K + dw
            patch = x_ref[dh:dh + H, dw:dw + W, :].reshape(HW, Cin_p)
            col_ref[:, t * Cin_p:(t + 1) * Cin_p] = patch.astype(jnp.bfloat16)

    # ---- downsample residual (1x1 conv + BN): reuse the centre-tap columns of
    #      the im2col buffer instead of re-slicing / re-laying-out x.
    tc = pad * K + pad
    centre = col_ref[:, tc * Cin_p:(tc + 1) * Cin_p]
    res = jnp.dot(centre, wd_ref[...], preferred_element_type=jnp.float32)
    res_ref[...] = res * sd_ref[...] + bd_ref[...]

    # ---- conv1 as one fat MXU matmul: (HW, K*K*Cin_p) @ (K*K*Cin_p, Cout_p),
    #      bf16 operands, f32 accumulation.  BN1 affine + relu6 in f32.
    acc1 = jnp.dot(col_ref[:, :KK * Cin_p], w1_ref[...],
                   preferred_element_type=jnp.float32)
    y1 = jnp.clip(acc1 * s1_ref[...] + b1_ref[...], 0.0, 6.0)

    # ---- stage y1 in the spatially padded scratch for conv2.  Only the 1-px
    #      halo needs zeros; the interior is fully overwritten every step
    #      (so no reliance on scratch state across 'parallel' grid steps).
    if pad > 0:
        zrow = jnp.zeros((pad, Wp, Cout_p), jnp.float32)
        zcol = jnp.zeros((Hp, pad, Cout_p), jnp.float32)
        y1p_ref[0:pad, :, :] = zrow
        y1p_ref[pad + H:Hp, :, :] = zrow
        y1p_ref[:, 0:pad, :] = zcol
        y1p_ref[:, pad + W:Wp, :] = zcol
    # TODO(synk): this interior store starts at sublane offset `pad`; padding y1
    #             along W in registers would make it an unmasked full-row store.
    y1p_ref[pad:pad + H, pad:pad + W, :] = y1.reshape(H, W, Cout_p)

    # ---- im2col for conv2 (reuses the col scratch), one fat matmul + BN2.
    #      Windows are sliced per tap directly from the ref (small live ranges).
    for dh in range(K):
        for dw in range(K):
            t = dh * K + dw
            patch = y1p_ref[dh:dh + H, dw:dw + W, :].reshape(HW, Cout_p)
            col_ref[:, t * Cout_p:(t + 1) * Cout_p] = patch.astype(jnp.bfloat16)
    acc2 = jnp.dot(col_ref[:, :KK * Cout_p], w2_ref[...],
                   preferred_element_type=jnp.float32)
    y2 = acc2 * s2_ref[...] + b2_ref[...]

    # ---- residual add + relu6; lane-dense output store (last dim = Cout_p).
    out = jnp.clip(y2 + res_ref[...], 0.0, 6.0)
    o_ref[...] = out.reshape(H, W, Cout_p).astype(o_ref.dtype)


def _round_up(x, m):
    return ((x + m - 1) // m) * m


def resnet2d_basic_block(x_nchw, params, *, kernel_size=3):
    """Pallas implementation of ResNet2dBasicBlock.forward (stride=1, eval BN)."""
    K = kernel_size
    pad = (K - 1) // 2
    KK = K * K
    N, Cin, H, W = x_nchw.shape
    Cout = params["w1"].shape[-1]

    LANE = 128
    Cin_p = _round_up(Cin, LANE)      # lane-dense channel layout
    Cout_p = _round_up(Cout, LANE)
    Cmax = max(Cin_p, Cout_p)
    Hp, Wp = H + 2 * pad, W + 2 * pad

    # NCHW -> NHWC; a single jnp.pad fuses the spatial halo with the channel
    # padding (the channel-padded HBM copy is needed anyway for lane density).
    x_nhwc = jnp.transpose(x_nchw, (0, 2, 3, 1))
    x_pad = jnp.pad(x_nhwc, ((0, 0), (pad, pad), (pad, pad), (0, Cin_p - Cin)))

    # Weights: pad channels to 128 multiples, flatten the K*K taps into the
    # contraction dim (im2col layout), ship as bf16 for the MXU.
    w1f = jnp.pad(params["w1"],
                  ((0, 0), (0, 0), (0, Cin_p - Cin), (0, Cout_p - Cout)))
    w1f = w1f.reshape(KK * Cin_p, Cout_p).astype(jnp.bfloat16)
    w2f = jnp.pad(params["w2"],
                  ((0, 0), (0, 0), (0, Cout_p - Cout), (0, Cout_p - Cout)))
    w2f = w2f.reshape(KK * Cout_p, Cout_p).astype(jnp.bfloat16)
    wdp = jnp.pad(params["wd"],
                  ((0, Cin_p - Cin), (0, Cout_p - Cout))).astype(jnp.bfloat16)

    def _padv(v):  # (1, Cout) -> (1, Cout_p); padded channels get scale/shift 0
        return jnp.pad(v, ((0, 0), (0, Cout_p - Cout)))

    s1, b1 = _padv(params["s1"]), _padv(params["b1"])
    s2, b2 = _padv(params["s2"]), _padv(params["b2"])
    sd, bd = _padv(params["sd"]), _padv(params["bd"])

    kernel = functools.partial(_resnet_block_kernel, H=H, W=W,
                               Cin_p=Cin_p, Cout_p=Cout_p, K=K)

    vec_spec = pl.BlockSpec((1, Cout_p), lambda b: (0, 0))
    grid_spec = pltpu.PrefetchScalarGridSpec(
        num_scalar_prefetch=0,
        grid=(N,),
        in_specs=[
            pl.BlockSpec((None, Hp, Wp, Cin_p), lambda b: (b, 0, 0, 0)),
            pl.BlockSpec((KK * Cin_p, Cout_p), lambda b: (0, 0)),
            vec_spec, vec_spec,
            pl.BlockSpec((KK * Cout_p, Cout_p), lambda b: (0, 0)),
            vec_spec, vec_spec,
            pl.BlockSpec((Cin_p, Cout_p), lambda b: (0, 0)),
            vec_spec, vec_spec,
        ],
        out_specs=pl.BlockSpec((None, H, W, Cout_p), lambda b: (b, 0, 0, 0)),
        scratch_shapes=[
            pltpu.VMEM((H * W, KK * Cmax), jnp.bfloat16),   # im2col buffer
            pltpu.VMEM((Hp, Wp, Cout_p), jnp.float32),      # spatially padded y1
            pltpu.VMEM((H * W, Cout_p), jnp.float32),       # downsample residual
        ],
    )

    flops = 2 * N * H * W * (KK * Cin_p + KK * Cout_p + Cin_p) * Cout_p
    bytes_accessed = int(x_pad.size * 4 + w1f.size * 2 + w2f.size * 2
                         + wdp.size * 2 + N * H * W * Cout_p * 4)

    out_nhwc = pl.pallas_call(
        kernel,
        out_shape=jax.ShapeDtypeStruct((N, H, W, Cout_p), x_nchw.dtype),
        grid_spec=grid_spec,
        compiler_params=pltpu.CompilerParams(
            dimension_semantics=("parallel",),          # batch elems independent
            vmem_limit_bytes=32 * 1024 * 1024),
        cost_estimate=pl.CostEstimate(flops=flops, transcendentals=0,
                                      bytes_accessed=bytes_accessed),
    )(x_pad, w1f, s1, b1, w2f, s2, b2, wdp, sd, bd)

    # Drop channel padding, NHWC -> NCHW to match the PyTorch convention.
    return jnp.transpose(out_nhwc[..., :Cout], (0, 3, 1, 2))


def _fold_bn(gamma, beta, rmean, rvar, eps=1e-5):
    scale = gamma / jnp.sqrt(rvar + eps)
    shift = beta - rmean * scale
    return scale.reshape(1, -1), shift.reshape(1, -1)


def make_params(key, in_channels, channels, kernel_size=3):
    """Random eval-mode parameters.  Conv weights are rounded to bf16-exact f32
    values so the kernel's bf16 MXU cast of the weights is lossless."""
    K = kernel_size
    ks = jax.random.split(key, 6)
    q = lambda a: a.astype(jnp.bfloat16).astype(jnp.float32)
    w1 = q(0.2 * jax.random.normal(ks[0], (K, K, in_channels, channels), jnp.float32))
    w2 = q(0.2 * jax.random.normal(ks[1], (K, K, channels, channels), jnp.float32))
    wd = q(0.2 * jax.random.normal(ks[2], (in_channels, channels), jnp.float32))

    def bn(k):
        k1, k2, k3, k4 = jax.random.split(k, 4)
        gamma = 1.0 + 0.1 * jax.random.normal(k1, (channels,), jnp.float32)
        beta = 0.1 * jax.random.normal(k2, (channels,), jnp.float32)
        rmean = 0.1 * jax.random.normal(k3, (channels,), jnp.float32)
        rvar = jnp.abs(jax.random.normal(k4, (channels,), jnp.float32)) + 0.5
        return gamma, beta, rmean, rvar

    s1, b1 = _fold_bn(*bn(ks[3]))
    s2, b2 = _fold_bn(*bn(ks[4]))
    sd, bd = _fold_bn(*bn(ks[5]))
    return {"w1": w1, "s1": s1, "b1": b1,
            "w2": w2, "s2": s2, "b2": b2,
            "wd": wd, "sd": sd, "bd": bd}


def reference(x_nchw, params):
    """Pure-JAX f32 reference (same math as the PyTorch forward, eval-mode BN)."""
    hi = lax.Precision.HIGHEST
    x = jnp.transpose(x_nchw, (0, 2, 3, 1))   # NHWC
    dn = ("NHWC", "HWIO", "NHWC")
    y = lax.conv_general_dilated(x, params["w1"], (1, 1), "SAME",
                                 dimension_numbers=dn, precision=hi)
    y = jnp.clip(y * params["s1"] + params["b1"], 0.0, 6.0)
    y = lax.conv_general_dilated(y, params["w2"], (1, 1), "SAME",
                                 dimension_numbers=dn, precision=hi)
    y = y * params["s2"] + params["b2"]
    res = jnp.einsum("nhwc,cd->nhwd", x, params["wd"], precision=hi)
    res = res * params["sd"] + params["bd"]
    out = jnp.clip(y + res, 0.0, 6.0)
    return jnp.transpose(out, (0, 3, 1, 2))


if __name__ == "__main__":
    key = jax.random.PRNGKey(0)
    kx, kp = jax.random.split(key)

    N, Cin, Cout, H, W = 2, 4, 8, 16, 16
    x = jax.random.normal(kx, (N, Cin, H, W), jnp.float32)
    x = x.astype(jnp.bfloat16).astype(jnp.float32)   # bf16-exact test data
    params = make_params(kp, Cin, Cout, kernel_size=3)

    out = jax.block_until_ready(resnet2d_basic_block(x, params))
    ref = jax.block_until_ready(reference(x, params))

    assert out.shape == (N, Cout, H, W), out.shape
    # bf16 MXU operands (f32 accumulation) vs a pure-f32 reference -> ~1e-2-level
    # mixed-precision noise on the intermediate activation; 5e-2 tolerance is
    # tight enough to catch any tap/layout/BN bug (those give O(1) errors).
    max_err = float(jnp.max(jnp.abs(out - ref)))
    assert jnp.allclose(out, ref, rtol=5e-2, atol=5e-2), max_err
    print("KERNEL_OK")
</pallas_src>

<mosaic_0001>
module attributes {stable_mosaic.version = 11 : i64} {
  func.func @_resnet_block_kernel(%arg0: i32, %arg1: memref<1x18x18x128xf32, #tpu.memory_space<vmem>>, %arg2: memref<1152x128xbf16, #tpu.memory_space<vmem>>, %arg3: memref<1x128xf32, #tpu.memory_space<vmem>>, %arg4: memref<1x128xf32, #tpu.memory_space<vmem>>, %arg5: memref<1152x128xbf16, #tpu.memory_space<vmem>>, %arg6: memref<1x128xf32, #tpu.memory_space<vmem>>, %arg7: memref<1x128xf32, #tpu.memory_space<vmem>>, %arg8: memref<128x128xbf16, #tpu.memory_space<vmem>>, %arg9: memref<1x128xf32, #tpu.memory_space<vmem>>, %arg10: memref<1x128xf32, #tpu.memory_space<vmem>>, %arg11: memref<1x16x16x128xf32, #tpu.memory_space<vmem>>, %arg12: memref<256x1152xbf16, #tpu.memory_space<vmem>>, %arg13: memref<18x18x128xf32, #tpu.memory_space<vmem>>, %arg14: memref<256x128xf32, #tpu.memory_space<vmem>>) attributes {dimension_semantics = [#tpu.dimension_semantics<parallel>], iteration_bounds = array<i64: 2>, scalar_prefetch = 0 : i64, scratch_operands = 3 : i64, tpu.core_type = #tpu.core_type<tc>, window_params = [{transform_indices = @transform_0, window_bounds = array<i64: 1, 18, 18, 128>}, {pipeline_mode = #tpu.pipeline_mode<synchronous>, transform_indices = @transform_1, window_bounds = array<i64: 1152, 128>}, {pipeline_mode = #tpu.pipeline_mode<synchronous>, transform_indices = @transform_2, window_bounds = array<i64: 1, 128>}, {pipeline_mode = #tpu.pipeline_mode<synchronous>, transform_indices = @transform_3, window_bounds = array<i64: 1, 128>}, {pipeline_mode = #tpu.pipeline_mode<synchronous>, transform_indices = @transform_4, window_bounds = array<i64: 1152, 128>}, {pipeline_mode = #tpu.pipeline_mode<synchronous>, transform_indices = @transform_5, window_bounds = array<i64: 1, 128>}, {pipeline_mode = #tpu.pipeline_mode<synchronous>, transform_indices = @transform_6, window_bounds = array<i64: 1, 128>}, {pipeline_mode = #tpu.pipeline_mode<synchronous>, transform_indices = @transform_7, window_bounds = array<i64: 128, 128>}, {pipeline_mode = #tpu.pipeline_mode<synchronous>, transform_indices = @transform_8, window_bounds = array<i64: 1, 128>}, {pipeline_mode = #tpu.pipeline_mode<synchronous>, transform_indices = @transform_9, window_bounds = array<i64: 1, 128>}, {transform_indices = @transform_10, window_bounds = array<i64: 1, 16, 16, 128>}]} {
    %c0 = arith.constant 0 : index
    %c0_0 = arith.constant 0 : index
    %c0_1 = arith.constant 0 : index
    %c0_2 = arith.constant 0 : index
    %0 = vector.load %arg1[%c0, %c0_0, %c0_1, %c0_2] : memref<1x18x18x128xf32, #tpu.memory_space<vmem>>, vector<1x16x16x128xf32>
    %1 = vector.shape_cast %0 : vector<1x16x16x128xf32> to vector<16x16x128xf32>
    %2 = vector.shape_cast %1 : vector<16x16x128xf32> to vector<256x128xf32>
    %3 = arith.truncf %2 : vector<256x128xf32> to vector<256x128xbf16>
    %c0_3 = arith.constant 0 : index
    %c0_4 = arith.constant 0 : index
    %4 = vector.load %arg12[%c0_3, %c0_4] : memref<256x1152xbf16, #tpu.memory_space<vmem>>, vector<256x128xbf16>
    tpu.vector_store %arg12[%c0_3, %c0_4], %3 {strides = array<i32>} : memref<256x1152xbf16, #tpu.memory_space<vmem>>, vector<256x128xbf16>,
    %c0_5 = arith.constant 0 : index
    %c0_6 = arith.constant 0 : index
    %c1 = arith.constant 1 : index
    %c0_7 = arith.constant 0 : index
    %5 = vector.load %arg1[%c0_5, %c0_6, %c1, %c0_7] : memref<1x18x18x128xf32, #tpu.memory_space<vmem>>, vector<1x16x16x128xf32>
    %6 = vector.shape_cast %5 : vector<1x16x16x128xf32> to vector<16x16x128xf32>
    %7 = vector.shape_cast %6 : vector<16x16x128xf32> to vector<256x128xf32>
    %8 = arith.truncf %7 : vector<256x128xf32> to vector<256x128xbf16>
    %c0_8 = arith.constant 0 : index
    %c128 = arith.constant 128 : index
    %9 = vector.load %arg12[%c0_8, %c128] : memref<256x1152xbf16, #tpu.memory_space<vmem>>, vector<256x128xbf16>
    tpu.vector_store %arg12[%c0_8, %c128], %8 {strides = array<i32>} : memref<256x1152xbf16, #tpu.memory_space<vmem>>, vector<256x128xbf16>,
    %c0_9 = arith.constant 0 : index
    %c0_10 = arith.constant 0 : index
    %c2 = arith.constant 2 : index
    %c0_11 = arith.constant 0 : index
    %10 = vector.load %arg1[%c0_9, %c0_10, %c2, %c0_11] : memref<1x18x18x128xf32, #tpu.memory_space<vmem>>, vector<1x16x16x128xf32>
    %11 = vector.shape_cast %10 : vector<1x16x16x128xf32> to vector<16x16x128xf32>
    %12 = vector.shape_cast %11 : vector<16x16x128xf32> to vector<256x128xf32>
    %13 = arith.truncf %12 : vector<256x128xf32> to vector<256x128xbf16>
    %c0_12 = arith.constant 0 : index
    %c256 = arith.constant 256 : index
    %14 = vector.load %arg12[%c0_12, %c256] : memref<256x1152xbf16, #tpu.memory_space<vmem>>, vector<256x128xbf16>
    tpu.vector_store %arg12[%c0_12, %c256], %13 {strides = array<i32>} : memref<256x1152xbf16, #tpu.memory_space<vmem>>, vector<256x128xbf16>,
    %c0_13 = arith.constant 0 : index
    %c1_14 = arith.constant 1 : index
    %c0_15 = arith.constant 0 : index
    %c0_16 = arith.constant 0 : index
    %15 = vector.load %arg1[%c0_13, %c1_14, %c0_15, %c0_16] : memref<1x18x18x128xf32, #tpu.memory_space<vmem>>, vector<1x16x16x128xf32>
    %16 = vector.shape_cast %15 : vector<1x16x16x128xf32> to vector<16x16x128xf32>
    %17 = vector.shape_cast %16 : vector<16x16x128xf32> to vector<256x128xf32>
    %18 = arith.truncf %17 : vector<256x128xf32> to vector<256x128xbf16>
    %c0_17 = arith.constant 0 : index
    %c384 = arith.constant 384 : index
    %19 = vector.load %arg12[%c0_17, %c384] : memref<256x1152xbf16, #tpu.memory_space<vmem>>, vector<256x128xbf16>
    tpu.vector_store %arg12[%c0_17, %c384], %18 {strides = array<i32>} : memref<256x1152xbf16, #tpu.memory_space<vmem>>, vector<256x128xbf16>,
    %c0_18 = arith.constant 0 : index
    %c1_19 = arith.constant 1 : index
    %c1_20 = arith.constant 1 : index
    %c0_21 = arith.constant 0 : index
    %20 = vector.load %arg1[%c0_18, %c1_19, %c1_20, %c0_21] : memref<1x18x18x128xf32, #tpu.memory_space<vmem>>, vector<1x16x16x128xf32>
    %21 = vector.shape_cast %20 : vector<1x16x16x128xf32> to vector<16x16x128xf32>
    %22 = vector.shape_cast %21 : vector<16x16x128xf32> to vector<256x128xf32>
    %23 = arith.truncf %22 : vector<256x128xf32> to vector<256x128xbf16>
    %c0_22 = arith.constant 0 : index
    %c512 = arith.constant 512 : index
    %24 = vector.load %arg12[%c0_22, %c512] : memref<256x1152xbf16, #tpu.memory_space<vmem>>, vector<256x128xbf16>
    tpu.vector_store %arg12[%c0_22, %c512], %23 {strides = array<i32>} : memref<256x1152xbf16, #tpu.memory_space<vmem>>, vector<256x128xbf16>,
    %c0_23 = arith.constant 0 : index
    %c1_24 = arith.constant 1 : index
    %c2_25 = arith.constant 2 : index
    %c0_26 = arith.constant 0 : index
    %25 = vector.load %arg1[%c0_23, %c1_24, %c2_25, %c0_26] : memref<1x18x18x128xf32, #tpu.memory_space<vmem>>, vector<1x16x16x128xf32>
    %26 = vector.shape_cast %25 : vector<1x16x16x128xf32> to vector<16x16x128xf32>
    %27 = vector.shape_cast %26 : vector<16x16x128xf32> to vector<256x128xf32>
    %28 = arith.truncf %27 : vector<256x128xf32> to vector<256x128xbf16>
    %c0_27 = arith.constant 0 : index
    %c640 = arith.constant 640 : index
    %29 = vector.load %arg12[%c0_27, %c640] : memref<256x1152xbf16, #tpu.memory_space<vmem>>, vector<256x128xbf16>
    tpu.vector_store %arg12[%c0_27, %c640], %28 {strides = array<i32>} : memref<256x1152xbf16, #tpu.memory_space<vmem>>, vector<256x128xbf16>,
    %c0_28 = arith.constant 0 : index
    %c2_29 = arith.constant 2 : index
    %c0_30 = arith.constant 0 : index
    %c0_31 = arith.constant 0 : index
    %30 = vector.load %arg1[%c0_28, %c2_29, %c0_30, %c0_31] : memref<1x18x18x128xf32, #tpu.memory_space<vmem>>, vector<1x16x16x128xf32>
    %31 = vector.shape_cast %30 : vector<1x16x16x128xf32> to vector<16x16x128xf32>
    %32 = vector.shape_cast %31 : vector<16x16x128xf32> to vector<256x128xf32>
    %33 = arith.truncf %32 : vector<256x128xf32> to vector<256x128xbf16>
    %c0_32 = arith.constant 0 : index
    %c768 = arith.constant 768 : index
    %34 = vector.load %arg12[%c0_32, %c768] : memref<256x1152xbf16, #tpu.memory_space<vmem>>, vector<256x128xbf16>
    tpu.vector_store %arg12[%c0_32, %c768], %33 {strides = array<i32>} : memref<256x1152xbf16, #tpu.memory_space<vmem>>, vector<256x128xbf16>,
    %c0_33 = arith.constant 0 : index
    %c2_34 = arith.constant 2 : index
    %c1_35 = arith.constant 1 : index
    %c0_36 = arith.constant 0 : index
    %35 = vector.load %arg1[%c0_33, %c2_34, %c1_35, %c0_36] : memref<1x18x18x128xf32, #tpu.memory_space<vmem>>, vector<1x16x16x128xf32>
    %36 = vector.shape_cast %35 : vector<1x16x16x128xf32> to vector<16x16x128xf32>
    %37 = vector.shape_cast %36 : vector<16x16x128xf32> to vector<256x128xf32>
    %38 = arith.truncf %37 : vector<256x128xf32> to vector<256x128xbf16>
    %c0_37 = arith.constant 0 : index
    %c896 = arith.constant 896 : index
    %39 = vector.load %arg12[%c0_37, %c896] : memref<256x1152xbf16, #tpu.memory_space<vmem>>, vector<256x128xbf16>
    tpu.vector_store %arg12[%c0_37, %c896], %38 {strides = array<i32>} : memref<256x1152xbf16, #tpu.memory_space<vmem>>, vector<256x128xbf16>,
    %c0_38 = arith.constant 0 : index
    %c2_39 = arith.constant 2 : index
    %c2_40 = arith.constant 2 : index
    %c0_41 = arith.constant 0 : index
    %40 = vector.load %arg1[%c0_38, %c2_39, %c2_40, %c0_41] : memref<1x18x18x128xf32, #tpu.memory_space<vmem>>, vector<1x16x16x128xf32>
    %41 = vector.shape_cast %40 : vector<1x16x16x128xf32> to vector<16x16x128xf32>
    %42 = vector.shape_cast %41 : vector<16x16x128xf32> to vector<256x128xf32>
    %43 = arith.truncf %42 : vector<256x128xf32> to vector<256x128xbf16>
    %c0_42 = arith.constant 0 : index
    %c1024 = arith.constant 1024 : index
    %44 = vector.load %arg12[%c0_42, %c1024] : memref<256x1152xbf16, #tpu.memory_space<vmem>>, vector<256x128xbf16>
    tpu.vector_store %arg12[%c0_42, %c1024], %43 {strides = array<i32>} : memref<256x1152xbf16, #tpu.memory_space<vmem>>, vector<256x128xbf16>,
    %c0_43 = arith.constant 0 : index
    %c512_44 = arith.constant 512 : index
    %45 = vector.load %arg12[%c0_43, %c512_44] : memref<256x1152xbf16, #tpu.memory_space<vmem>>, vector<256x128xbf16>
    %c0_45 = arith.constant 0 : index
    %c0_46 = arith.constant 0 : index
    %46 = vector.load %arg8[%c0_45, %c0_46] : memref<128x128xbf16, #tpu.memory_space<vmem>>, vector<128x128xbf16>
    %cst = arith.constant dense<0.000000e+00> : vector<256x128xf32>
    %47 = tpu.matmul %45, %46, %cst {dimension_numbers = #tpu.dot_dimension_numbers<[1], [0], [0], [1], [0, 0, 1, 1], [], []>} : vector<256x128xbf16>, vector<128x128xbf16>, vector<256x128xf32> -> vector<256x128xf32>
    %c0_47 = arith.constant 0 : index
    %c0_48 = arith.constant 0 : index
    %48 = vector.load %arg9[%c0_47, %c0_48] : memref<1x128xf32, #tpu.memory_space<vmem>>, vector<1x128xf32>
    %49 = vector.broadcast %48 : vector<1x128xf32> to vector<256x128xf32>
    %50 = arith.mulf %47, %49 : vector<256x128xf32>
    %c0_49 = arith.constant 0 : index
    %c0_50 = arith.constant 0 : index
    %51 = vector.load %arg10[%c0_49, %c0_50] : memref<1x128xf32, #tpu.memory_space<vmem>>, vector<1x128xf32>
    %52 = vector.broadcast %51 : vector<1x128xf32> to vector<256x128xf32>
    %53 = arith.addf %50, %52 : vector<256x128xf32>
    %c0_51 = arith.constant 0 : index
    %c0_52 = arith.constant 0 : index
    %54 = vector.load %arg14[%c0_51, %c0_52] : memref<256x128xf32, #tpu.memory_space<vmem>>, vector<256x128xf32>
    tpu.vector_store %arg14[%c0_51, %c0_52], %53 {strides = array<i32>} : memref<256x128xf32, #tpu.memory_space<vmem>>, vector<256x128xf32>,
    %c0_53 = arith.constant 0 : index
    %c0_54 = arith.constant 0 : index
    %55 = vector.load %arg12[%c0_53, %c0_54] : memref<256x1152xbf16, #tpu.memory_space<vmem>>, vector<256x1152xbf16>
    %c0_55 = arith.constant 0 : index
    %c0_56 = arith.constant 0 : index
    %56 = vector.load %arg2[%c0_55, %c0_56] : memref<1152x128xbf16, #tpu.memory_space<vmem>>, vector<1152x128xbf16>
    %cst_57 = arith.constant dense<0.000000e+00> : vector<256x128xf32>
    %57 = tpu.matmul %55, %56, %cst_57 {dimension_numbers = #tpu.dot_dimension_numbers<[1], [0], [0], [1], [0, 0, 1, 1], [], []>} : vector<256x1152xbf16>, vector<1152x128xbf16>, vector<256x128xf32> -> vector<256x128xf32>
    %c0_58 = arith.constant 0 : index
    %c0_59 = arith.constant 0 : index
    %58 = vector.load %arg3[%c0_58, %c0_59] : memref<1x128xf32, #tpu.memory_space<vmem>>, vector<1x128xf32>
    %59 = vector.broadcast %58 : vector<1x128xf32> to vector<256x128xf32>
    %60 = arith.mulf %57, %59 : vector<256x128xf32>
    %c0_60 = arith.constant 0 : index
    %c0_61 = arith.constant 0 : index
    %61 = vector.load %arg4[%c0_60, %c0_61] : memref<1x128xf32, #tpu.memory_space<vmem>>, vector<1x128xf32>
    %62 = vector.broadcast %61 : vector<1x128xf32> to vector<256x128xf32>
    %63 = arith.addf %60, %62 : vector<256x128xf32>
    %cst_62 = arith.constant 0.000000e+00 : f32
    %cst_63 = arith.constant 6.000000e+00 : f32
    %64 = vector.broadcast %cst_62 : f32 to vector<256x128xf32>
    %65 = arith.maximumf %64, %63 : vector<256x128xf32>
    %66 = vector.broadcast %cst_63 : f32 to vector<256x128xf32>
    %67 = arith.minimumf %66, %65 : vector<256x128xf32>
    %cst_64 = arith.constant 0.000000e+00 : f32
    %68 = vector.broadcast %cst_64 : f32 to vector<1x18x128xf32>
    %cst_65 = arith.constant 0.000000e+00 : f32
    %69 = vector.broadcast %cst_65 : f32 to vector<18x1x128xf32>
    %c0_66 = arith.constant 0 : index
    %c0_67 = arith.constant 0 : index
    %c0_68 = arith.constant 0 : index
    %70 = vector.load %arg13[%c0_66, %c0_67, %c0_68] : memref<18x18x128xf32, #tpu.memory_space<vmem>>, vector<1x18x128xf32>
    tpu.vector_store %arg13[%c0_66, %c0_67, %c0_68], %68 {strides = array<i32>} : memref<18x18x128xf32, #tpu.memory_space<vmem>>, vector<1x18x128xf32>,
    %c17 = arith.constant 17 : index
    %c0_69 = arith.constant 0 : index
    %c0_70 = arith.constant 0 : index
    %71 = vector.load %arg13[%c17, %c0_69, %c0_70] : memref<18x18x128xf32, #tpu.memory_space<vmem>>, vector<1x18x128xf32>
    tpu.vector_store %arg13[%c17, %c0_69, %c0_70], %68 {strides = array<i32>} : memref<18x18x128xf32, #tpu.memory_space<vmem>>, vector<1x18x128xf32>,
    %c0_71 = arith.constant 0 : index
    %c0_72 = arith.constant 0 : index
    %c0_73 = arith.constant 0 : index
    %72 = vector.load %arg13[%c0_71, %c0_72, %c0_73] : memref<18x18x128xf32, #tpu.memory_space<vmem>>, vector<18x1x128xf32>
    tpu.vector_store %arg13[%c0_71, %c0_72, %c0_73], %69 {strides = array<i32>} : memref<18x18x128xf32, #tpu.memory_space<vmem>>, vector<18x1x128xf32>,
    %c0_74 = arith.constant 0 : index
    %c17_75 = arith.constant 17 : index
    %c0_76 = arith.constant 0 : index
    %73 = vector.load %arg13[%c0_74, %c17_75, %c0_76] : memref<18x18x128xf32, #tpu.memory_space<vmem>>, vector<18x1x128xf32>
    tpu.vector_store %arg13[%c0_74, %c17_75, %c0_76], %69 {strides = array<i32>} : memref<18x18x128xf32, #tpu.memory_space<vmem>>, vector<18x1x128xf32>,
    %74 = vector.shape_cast %67 : vector<256x128xf32> to vector<16x16x128xf32>
    %c1_77 = arith.constant 1 : index
    %c1_78 = arith.constant 1 : index
    %c0_79 = arith.constant 0 : index
    %75 = vector.load %arg13[%c1_77, %c1_78, %c0_79] : memref<18x18x128xf32, #tpu.memory_space<vmem>>, vector<16x16x128xf32>
    tpu.vector_store %arg13[%c1_77, %c1_78, %c0_79], %74 {strides = array<i32>} : memref<18x18x128xf32, #tpu.memory_space<vmem>>, vector<16x16x128xf32>,
    %c0_80 = arith.constant 0 : index
    %c0_81 = arith.constant 0 : index
    %c0_82 = arith.constant 0 : index
    %76 = vector.load %arg13[%c0_80, %c0_81, %c0_82] : memref<18x18x128xf32, #tpu.memory_space<vmem>>, vector<16x16x128xf32>
    %77 = vector.shape_cast %76 : vector<16x16x128xf32> to vector<256x128xf32>
    %78 = arith.truncf %77 : vector<256x128xf32> to vector<256x128xbf16>
    %c0_83 = arith.constant 0 : index
    %c0_84 = arith.constant 0 : index
    %79 = vector.load %arg12[%c0_83, %c0_84] : memref<256x1152xbf16, #tpu.memory_space<vmem>>, vector<256x128xbf16>
    tpu.vector_store %arg12[%c0_83, %c0_84], %78 {strides = array<i32>} : memref<256x1152xbf16, #tpu.memory_space<vmem>>, vector<256x128xbf16>,
    %c0_85 = arith.constant 0 : index
    %c1_86 = arith.constant 1 : index
    %c0_87 = arith.constant 0 : index
    %80 = vector.load %arg13[%c0_85, %c1_86, %c0_87] : memref<18x18x128xf32, #tpu.memory_space<vmem>>, vector<16x16x128xf32>
    %81 = vector.shape_cast %80 : vector<16x16x128xf32> to vector<256x128xf32>
    %82 = arith.truncf %81 : vector<256x128xf32> to vector<256x128xbf16>
    %c0_88 = arith.constant 0 : index
    %c128_89 = arith.constant 128 : index
    %83 = vector.load %arg12[%c0_88, %c128_89] : memref<256x1152xbf16, #tpu.memory_space<vmem>>, vector<256x128xbf16>
    tpu.vector_store %arg12[%c0_88, %c128_89], %82 {strides = array<i32>} : memref<256x1152xbf16, #tpu.memory_space<vmem>>, vector<256x128xbf16>,
    %c0_90 = arith.constant 0 : index
    %c2_91 = arith.constant 2 : index
    %c0_92 = arith.constant 0 : index
    %84 = vector.load %arg13[%c0_90, %c2_91, %c0_92] : memref<18x18x128xf32, #tpu.memory_space<vmem>>, vector<16x16x128xf32>
    %85 = vector.shape_cast %84 : vector<16x16x128xf32> to vector<256x128xf32>
    %86 = arith.truncf %85 : vector<256x128xf32> to vector<256x128xbf16>
    %c0_93 = arith.constant 0 : index
    %c256_94 = arith.constant 256 : index
    %87 = vector.load %arg12[%c0_93, %c256_94] : memref<256x1152xbf16, #tpu.memory_space<vmem>>, vector<256x128xbf16>
    tpu.vector_store %arg12[%c0_93, %c256_94], %86 {strides = array<i32>} : memref<256x1152xbf16, #tpu.memory_space<vmem>>, vector<256x128xbf16>,
    %c1_95 = arith.constant 1 : index
    %c0_96 = arith.constant 0 : index
    %c0_97 = arith.constant 0 : index
    %88 = vector.load %arg13[%c1_95, %c0_96, %c0_97] : memref<18x18x128xf32, #tpu.memory_space<vmem>>, vector<16x16x128xf32>
    %89 = vector.shape_cast %88 : vector<16x16x128xf32> to vector<256x128xf32>
    %90 = arith.truncf %89 : vector<256x128xf32> to vector<256x128xbf16>
    %c0_98 = arith.constant 0 : index
    %c384_99 = arith.constant 384 : index
    %91 = vector.load %arg12[%c0_98, %c384_99] : memref<256x1152xbf16, #tpu.memory_space<vmem>>, vector<256x128xbf16>
    tpu.vector_store %arg12[%c0_98, %c384_99], %90 {strides = array<i32>} : memref<256x1152xbf16, #tpu.memory_space<vmem>>, vector<256x128xbf16>,
    %c1_100 = arith.constant 1 : index
    %c1_101 = arith.constant 1 : index
    %c0_102 = arith.constant 0 : index
    %92 = vector.load %arg13[%c1_100, %c1_101, %c0_102] : memref<18x18x128xf32, #tpu.memory_space<vmem>>, vector<16x16x128xf32>
    %93 = vector.shape_cast %92 : vector<16x16x128xf32> to vector<256x128xf32>
    %94 = arith.truncf %93 : vector<256x128xf32> to vector<256x128xbf16>
    %c0_103 = arith.constant 0 : index
    %c512_104 = arith.constant 512 : index
    %95 = vector.load %arg12[%c0_103, %c512_104] : memref<256x1152xbf16, #tpu.memory_space<vmem>>, vector<256x128xbf16>
    tpu.vector_store %arg12[%c0_103, %c512_104], %94 {strides = array<i32>} : memref<256x1152xbf16, #tpu.memory_space<vmem>>, vector<256x128xbf16>,
    %c1_105 = arith.constant 1 : index
    %c2_106 = arith.constant 2 : index
    %c0_107 = arith.constant 0 : index
    %96 = vector.load %arg13[%c1_105, %c2_106, %c0_107] : memref<18x18x128xf32, #tpu.memory_space<vmem>>, vector<16x16x128xf32>
    %97 = vector.shape_cast %96 : vector<16x16x128xf32> to vector<256x128xf32>
    %98 = arith.truncf %97 : vector<256x128xf32> to vector<256x128xbf16>
    %c0_108 = arith.constant 0 : index
    %c640_109 = arith.constant 640 : index
    %99 = vector.load %arg12[%c0_108, %c640_109] : memref<256x1152xbf16, #tpu.memory_space<vmem>>, vector<256x128xbf16>
    tpu.vector_store %arg12[%c0_108, %c640_109], %98 {strides = array<i32>} : memref<256x1152xbf16, #tpu.memory_space<vmem>>, vector<256x128xbf16>,
    %c2_110 = arith.constant 2 : index
    %c0_111 = arith.constant 0 : index
    %c0_112 = arith.constant 0 : index
    %100 = vector.load %arg13[%c2_110, %c0_111, %c0_112] : memref<18x18x128xf32, #tpu.memory_space<vmem>>, vector<16x16x128xf32>
    %101 = vector.shape_cast %100 : vector<16x16x128xf32> to vector<256x128xf32>
    %102 = arith.truncf %101 : vector<256x128xf32> to vector<256x128xbf16>
    %c0_113 = arith.constant 0 : index
    %c768_114 = arith.constant 768 : index
    %103 = vector.load %arg12[%c0_113, %c768_114] : memref<256x1152xbf16, #tpu.memory_space<vmem>>, vector<256x128xbf16>
    tpu.vector_store %arg12[%c0_113, %c768_114], %102 {strides = array<i32>} : memref<256x1152xbf16, #tpu.memory_space<vmem>>, vector<256x128xbf16>,
    %c2_115 = arith.constant 2 : index
    %c1_116 = arith.constant 1 : index
    %c0_117 = arith.constant 0 : index
    %104 = vector.load %arg13[%c2_115, %c1_116, %c0_117] : memref<18x18x128xf32, #tpu.memory_space<vmem>>, vector<16x16x128xf32>
    %105 = vector.shape_cast %104 : vector<16x16x128xf32> to vector<256x128xf32>
    %106 = arith.truncf %105 : vector<256x128xf32> to vector<256x128xbf16>
    %c0_118 = arith.constant 0 : index
    %c896_119 = arith.constant 896 : index
    %107 = vector.load %arg12[%c0_118, %c896_119] : memref<256x1152xbf16, #tpu.memory_space<vmem>>, vector<256x128xbf16>
    tpu.vector_store %arg12[%c0_118, %c896_119], %106 {strides = array<i32>} : memref<256x1152xbf16, #tpu.memory_space<vmem>>, vector<256x128xbf16>,
    %c2_120 = arith.constant 2 : index
    %c2_121 = arith.constant 2 : index
    %c0_122 = arith.constant 0 : index
    %108 = vector.load %arg13[%c2_120, %c2_121, %c0_122] : memref<18x18x128xf32, #tpu.memory_space<vmem>>, vector<16x16x128xf32>
    %109 = vector.shape_cast %108 : vector<16x16x128xf32> to vector<256x128xf32>
    %110 = arith.truncf %109 : vector<256x128xf32> to vector<256x128xbf16>
    %c0_123 = arith.constant 0 : index
    %c1024_124 = arith.constant 1024 : index
    %111 = vector.load %arg12[%c0_123, %c1024_124] : memref<256x1152xbf16, #tpu.memory_space<vmem>>, vector<256x128xbf16>
    tpu.vector_store %arg12[%c0_123, %c1024_124], %110 {strides = array<i32>} : memref<256x1152xbf16, #tpu.memory_space<vmem>>, vector<256x128xbf16>,
    %c0_125 = arith.constant 0 : index
    %c0_126 = arith.constant 0 : index
    %112 = vector.load %arg12[%c0_125, %c0_126] : memref<256x1152xbf16, #tpu.memory_space<vmem>>, vector<256x1152xbf16>
    %c0_127 = arith.constant 0 : index
    %c0_128 = arith.constant 0 : index
    %113 = vector.load %arg5[%c0_127, %c0_128] : memref<1152x128xbf16, #tpu.memory_space<vmem>>, vector<1152x128xbf16>
    %cst_129 = arith.constant dense<0.000000e+00> : vector<256x128xf32>
    %114 = tpu.matmul %112, %113, %cst_129 {dimension_numbers = #tpu.dot_dimension_numbers<[1], [0], [0], [1], [0, 0, 1, 1], [], []>} : vector<256x1152xbf16>, vector<1152x128xbf16>, vector<256x128xf32> -> vector<256x128xf32>
    %c0_130 = arith.constant 0 : index
    %c0_131 = arith.constant 0 : index
    %115 = vector.load %arg6[%c0_130, %c0_131] : memref<1x128xf32, #tpu.memory_space<vmem>>, vector<1x128xf32>
    %116 = vector.broadcast %115 : vector<1x128xf32> to vector<256x128xf32>
    %117 = arith.mulf %114, %116 : vector<256x128xf32>
    %c0_132 = arith.constant 0 : index
    %c0_133 = arith.constant 0 : index
    %118 = vector.load %arg7[%c0_132, %c0_133] : memref<1x128xf32, #tpu.memory_space<vmem>>, vector<1x128xf32>
    %119 = vector.broadcast %118 : vector<1x128xf32> to vector<256x128xf32>
    %120 = arith.addf %117, %119 : vector<256x128xf32>
    %c0_134 = arith.constant 0 : index
    %c0_135 = arith.constant 0 : index
    %121 = vector.load %arg14[%c0_134, %c0_135] : memref<256x128xf32, #tpu.memory_space<vmem>>, vector<256x128xf32>
    %122 = arith.addf %120, %121 : vector<256x128xf32>
    %cst_136 = arith.constant 0.000000e+00 : f32
    %cst_137 = arith.constant 6.000000e+00 : f32
    %123 = vector.broadcast %cst_136 : f32 to vector<256x128xf32>
    %124 = arith.maximumf %123, %122 : vector<256x128xf32>
    %125 = vector.broadcast %cst_137 : f32 to vector<256x128xf32>
    %126 = arith.minimumf %125, %124 : vector<256x128xf32>
    %127 = vector.shape_cast %126 : vector<256x128xf32> to vector<16x16x128xf32>
    %c0_138 = arith.constant 0 : index
    %c0_139 = arith.constant 0 : index
    %c0_140 = arith.constant 0 : index
    %c0_141 = arith.constant 0 : index
    %128 = vector.load %arg11[%c0_138, %c0_139, %c0_140, %c0_141] : memref<1x16x16x128xf32, #tpu.memory_space<vmem>>, vector<1x16x16x128xf32>
    %129 = vector.shape_cast %128 : vector<1x16x16x128xf32> to vector<16x16x128xf32>
    %130 = vector.shape_cast %127 : vector<16x16x128xf32> to vector<1x16x16x128xf32>
    tpu.vector_store %arg11[%c0_138, %c0_139, %c0_140, %c0_141], %130 {strides = array<i32>} : memref<1x16x16x128xf32, #tpu.memory_space<vmem>>, vector<1x16x16x128xf32>,
    return
  }
  func.func @transform_0(%arg0: i32) -> (i32, i32, i32, i32) {
    %c0_i32 = arith.constant 0 : i32
    %c0_i32_0 = arith.constant 0 : i32
    %c0_i32_1 = arith.constant 0 : i32
    %c0_i32_2 = arith.constant 0 : i32
    return %arg0, %c0_i32, %c0_i32_0, %c0_i32_1 : i32, i32, i32, i32
  }
  func.func @transform_1(%arg0: i32) -> (i32, i32) {
    %c0_i32 = arith.constant 0 : i32
    %c0_i32_0 = arith.constant 0 : i32
    %c0_i32_1 = arith.constant 0 : i32
    return %c0_i32, %c0_i32_0 : i32, i32
  }
  func.func @transform_2(%arg0: i32) -> (i32, i32) {
    %c0_i32 = arith.constant 0 : i32
    %c0_i32_0 = arith.constant 0 : i32
    %c0_i32_1 = arith.constant 0 : i32
    return %c0_i32, %c0_i32_0 : i32, i32
  }
  func.func @transform_3(%arg0: i32) -> (i32, i32) {
    %c0_i32 = arith.constant 0 : i32
    %c0_i32_0 = arith.constant 0 : i32
    %c0_i32_1 = arith.constant 0 : i32
    return %c0_i32, %c0_i32_0 : i32, i32
  }
  func.func @transform_4(%arg0: i32) -> (i32, i32) {
    %c0_i32 = arith.constant 0 : i32
    %c0_i32_0 = arith.constant 0 : i32
    %c0_i32_1 = arith.constant 0 : i32
    return %c0_i32, %c0_i32_0 : i32, i32
  }
  func.func @transform_5(%arg0: i32) -> (i32, i32) {
    %c0_i32 = arith.constant 0 : i32
    %c0_i32_0 = arith.constant 0 : i32
    %c0_i32_1 = arith.constant 0 : i32
    return %c0_i32, %c0_i32_0 : i32, i32
  }
  func.func @transform_6(%arg0: i32) -> (i32, i32) {
    %c0_i32 = arith.constant 0 : i32
    %c0_i32_0 = arith.constant 0 : i32
    %c0_i32_1 = arith.constant 0 : i32
    return %c0_i32, %c0_i32_0 : i32, i32
  }
  func.func @transform_7(%arg0: i32) -> (i32, i32) {
    %c0_i32 = arith.constant 0 : i32
    %c0_i32_0 = arith.constant 0 : i32
    %c0_i32_1 = arith.constant 0 : i32
    return %c0_i32, %c0_i32_0 : i32, i32
  }
  func.func @transform_8(%arg0: i32) -> (i32, i32) {
    %c0_i32 = arith.constant 0 : i32
    %c0_i32_0 = arith.constant 0 : i32
    %c0_i32_1 = arith.constant 0 : i32
    return %c0_i32, %c0_i32_0 : i32, i32
  }
  func.func @transform_9(%arg0: i32) -> (i32, i32) {
    %c0_i32 = arith.constant 0 : i32
    %c0_i32_0 = arith.constant 0 : i32
    %c0_i32_1 = arith.constant 0 : i32
    return %c0_i32, %c0_i32_0 : i32, i32
  }
  func.func @transform_10(%arg0: i32) -> (i32, i32, i32, i32) {
    %c0_i32 = arith.constant 0 : i32
    %c0_i32_0 = arith.constant 0 : i32
    %c0_i32_1 = arith.constant 0 : i32
    %c0_i32_2 = arith.constant 0 : i32
    return %arg0, %c0_i32, %c0_i32_0, %c0_i32_1 : i32, i32, i32, i32
  }
}

</mosaic_0001>

<llo_original>
// kernel: tpu_custom_call.1
$region0: #{tpu_custom_call.1}
  #allocation0 [shape = 'u32[]', space=smem, size = 0x4, offset = 0x4, fixed_abs, tag = 'smem constant byte address 0x4 - core index']
  #allocation1 [shape = 'u32[144,128]{1,0:T(1,128)}', space=vmem, size = 0x12000, scoped, tag = 'internal scratch']
  #allocation2 [shape = 'bf16[256,1152]{1,0:T(16,128)(2,1)}', space=vmem, size = 0x90000, scoped, tag = 'scratch operand']
  #allocation3 [shape = 'f32[18,18,128]{2,1,0:T(8,128)}', space=vmem, size = 0x36000, scoped, tag = 'scratch operand']
  #allocation4 [shape = 'f32[256,128]{1,0:T(8,128)}', space=vmem, size = 0x20000, scoped, tag = 'scratch operand']
  %s0 = inlined_call_operand.vmem [shape: f32[2,18,18,128], index: 0, kind: input, shape index: {}]
  %s1 = inlined_call_operand.vmem [shape: bf16[1152,128], index: 1, kind: input, shape index: {}]
  %s2 = inlined_call_operand.vmem [shape: f32[1,128], index: 2, kind: input, shape index: {}]
  %s3 = inlined_call_operand.vmem [shape: f32[1,128], index: 3, kind: input, shape index: {}]
  %s4 = inlined_call_operand.vmem [shape: bf16[1152,128], index: 4, kind: input, shape index: {}]
  %s5 = inlined_call_operand.vmem [shape: f32[1,128], index: 5, kind: input, shape index: {}]
  %s6 = inlined_call_operand.vmem [shape: f32[1,128], index: 6, kind: input, shape index: {}]
  %s7 = inlined_call_operand.vmem [shape: bf16[128,128], index: 7, kind: input, shape index: {}]
  %s8 = inlined_call_operand.vmem [shape: f32[1,128], index: 8, kind: input, shape index: {}]
  %s9 = inlined_call_operand.vmem [shape: f32[1,128], index: 9, kind: input, shape index: {}]
  %s10 = inlined_call_operand.hbm [shape: f32[2,16,16,128], index: 10, kind: output, shape index: {}]
  %s11 = sld [smem:[#allocation0]]
  $region73: #{tpu_custom_call.1} parent=0
    _
  %s13 = ssub.s32 1, %s11
  %s14 = scalar_select 0, %s13, %s11
  $region1: #{tpu_custom_call.1} parent=0
    #allocation5 [shape = 'u8[262144]{0}', space=vmem, size = 0x40000, scoped, tag = 'output window, operand 0']
    #allocation6 [shape = 's32[2]{0}', space=sflag, size = 0x8, scoped, tag = 'scoped memory for tpu_custom_call.1']
    %15 = vsyncpa [#allocation6], 0
    %s16 = scalar_lea.sflag [#allocation6], 1
    %17 = vsyncpa %s16, 0
    loop: start=0, step=1, limit=4
    $region2: #{tpu_custom_call.1} parent=1 // loop_pre_header
      _
    $region3: #{tpu_custom_call.1} parent=1 // loop_header
      %s19 = sphi 0, %s23
      %p20 = scmp.ge.s32.totalorder %s19, 4
      %s29 = sphi 0, %s31
      %s32 = sphi 0, %s29
      %s33 = sphi 0, %s32
      %s49 = sphi 0, %s33
      %s53 = sphi 0, %s53
      %s55 = sphi 0, %s53
      %s56 = sphi 0, %s55
      %s70 = sphi 0, %s56
      %s74 = sphi 0, %s74
      %s76 = sphi 0, %s74
      %s77 = sphi 0, %s76
      %s91 = sphi 0, %s77
      %s95 = sphi 0, %s95
      %s97 = sphi 0, %s95
      %s98 = sphi 0, %s97
      %s112 = sphi 0, %s98
      %s116 = sphi 0, %s116
      %s118 = sphi 0, %s116
      %s119 = sphi 0, %s118
      %s133 = sphi 0, %s119
      %s137 = sphi 0, %s137
      %s139 = sphi 0, %s137
      %s140 = sphi 0, %s139
      %s154 = sphi 0, %s140
      %s158 = sphi 0, %s158
      %s160 = sphi 0, %s158
      %s161 = sphi 0, %s160
      %s175 = sphi 0, %s161
      %s179 = sphi 0, %s179
      %s181 = sphi 0, %s179
      %s182 = sphi 0, %s181
      %s196 = sphi 0, %s182
      %s200 = sphi 0, %s200
      %s202 = sphi 0, %s200
      %s203 = sphi 0, %s202
      %s217 = sphi 0, %s203
      %s221 = sphi 0, %s221
      %s223 = sphi 0, %s221
      %s224 = sphi 0, %s223
      %s238 = sphi 0, %s224
      %s244 = sphi 0, %s246
      %s247 = sphi 0, %s244
      %s248 = sphi 0, %s247
      %s264 = sphi 0, %s248
    $region4: #{tpu_custom_call.1} parent=1 // loop_header_branch
      %22 = sbr.rel (%p20) target = $region8
    $region5: #{tpu_custom_call.1} parent=1 // loop_body
      %s24 = ssub.s32 %s19, 1
      %s25 = ssub.s32 %s19, 2
      %s26 = sadd.s32 %s19, 1
      %s27 = ssub.s32 %s19, %s26
      %p28 = scmp.eq.s32.totalorder %s27, 0
      %s30 = sadd.s32 %s29, 1
      %s31 = scalar_select %p28, %s29, %s30
      %p34 = pneg %p28
      %p35 = scmp.eq.s32.totalorder %s19, 1
      %p36 = por %p34, %p35
      %p37 = scmp.ne.s32.totalorder %s29, %s32
      %p38 = scmp.eq.s32.totalorder %s19, 0
      %p39 = por %p37, %p38
      %p40 = scmp.ne.s32.totalorder %s29, %s32
      %p41 = scmp.eq.s32.totalorder %s24, 1
      %p42 = por %p40, %p41
      %p43 = scmp.ne.s32.totalorder %s32, %s33
      %p44 = scmp.eq.s32.totalorder %s24, 0
      %p45 = por %p43, %p44
      %p46 = scmp.ne.s32.totalorder %s32, %s33
      %p47 = scmp.eq.s32.totalorder %s25, 1
      %p48 = por %p46, %p47
      %p50 = scmp.ne.s32.totalorder %s33, %s49
      %p51 = scmp.eq.s32.totalorder %s25, 0
      %p52 = por %p50, %p51
      %s54 = sadd.s32 %s53, 1
      %p57 = scmp.eq.s32.totalorder %s19, 1
      %p58 = scmp.ne.s32.totalorder %s53, %s55
      %p59 = scmp.eq.s32.totalorder %s19, 0
      %p60 = por %p58, %p59
      %p61 = scmp.ne.s32.totalorder %s53, %s55
      %p62 = scmp.eq.s32.totalorder %s24, 1
      %p63 = por %p61, %p62
      %p64 = scmp.ne.s32.totalorder %s55, %s56
      %p65 = scmp.eq.s32.totalorder %s24, 0
      %p66 = por %p64, %p65
      %p67 = scmp.ne.s32.totalorder %s55, %s56
      %p68 = scmp.eq.s32.totalorder %s25, 1
      %p69 = por %p67, %p68
      %p71 = scmp.ne.s32.totalorder %s56, %s70
      %p72 = scmp.eq.s32.totalorder %s25, 0
      %p73 = por %p71, %p72
      %s75 = sadd.s32 %s74, 1
      %p78 = scmp.eq.s32.totalorder %s19, 1
      %p79 = scmp.ne.s32.totalorder %s74, %s76
      %p80 = scmp.eq.s32.totalorder %s19, 0
      %p81 = por %p79, %p80
      %p82 = scmp.ne.s32.totalorder %s74, %s76
      %p83 = scmp.eq.s32.totalorder %s24, 1
      %p84 = por %p82, %p83
      %p85 = scmp.ne.s32.totalorder %s76, %s77
      %p86 = scmp.eq.s32.totalorder %s24, 0
      %p87 = por %p85, %p86
      %p88 = scmp.ne.s32.totalorder %s76, %s77
      %p89 = scmp.eq.s32.totalorder %s25, 1
      %p90 = por %p88, %p89
      %p92 = scmp.ne.s32.totalorder %s77, %s91
      %p93 = scmp.eq.s32.totalorder %s25, 0
      %p94 = por %p92, %p93
      %s96 = sadd.s32 %s95, 1
      %p99 = scmp.eq.s32.totalorder %s19, 1
      %p100 = scmp.ne.s32.totalorder %s95, %s97
      %p101 = scmp.eq.s32.totalorder %s19, 0
      %p102 = por %p100, %p101
      %p103 = scmp.ne.s32.totalorder %s95, %s97
      %p104 = scmp.eq.s32.totalorder %s24, 1
      %p105 = por %p103, %p104
      %p106 = scmp.ne.s32.totalorder %s97, %s98
      %p107 = scmp.eq.s32.totalorder %s24, 0
      %p108 = por %p106, %p107
      %p109 = scmp.ne.s32.totalorder %s97, %s98
      %p110 = scmp.eq.s32.totalorder %s25, 1
      %p111 = por %p109, %p110
      %p113 = scmp.ne.s32.totalorder %s98, %s112
      %p114 = scmp.eq.s32.totalorder %s25, 0
      %p115 = por %p113, %p114
      %s117 = sadd.s32 %s116, 1
      %p120 = scmp.eq.s32.totalorder %s19, 1
      %p121 = scmp.ne.s32.totalorder %s116, %s118
      %p122 = scmp.eq.s32.totalorder %s19, 0
      %p123 = por %p121, %p122
      %p124 = scmp.ne.s32.totalorder %s116, %s118
      %p125 = scmp.eq.s32.totalorder %s24, 1
      %p126 = por %p124, %p125
      %p127 = scmp.ne.s32.totalorder %s118, %s119
      %p128 = scmp.eq.s32.totalorder %s24, 0
      %p129 = por %p127, %p128
      %p130 = scmp.ne.s32.totalorder %s118, %s119
      %p131 = scmp.eq.s32.totalorder %s25, 1
      %p132 = por %p130, %p131
      %p134 = scmp.ne.s32.totalorder %s119, %s133
      %p135 = scmp.eq.s32.totalorder %s25, 0
      %p136 = por %p134, %p135
      %s138 = sadd.s32 %s137, 1
      %p141 = scmp.eq.s32.totalorder %s19, 1
      %p142 = scmp.ne.s32.totalorder %s137, %s139
      %p143 = scmp.eq.s32.totalorder %s19, 0
      %p144 = por %p142, %p143
      %p145 = scmp.ne.s32.totalorder %s137, %s139
      %p146 = scmp.eq.s32.totalorder %s24, 1
      %p147 = por %p145, %p146
      %p148 = scmp.ne.s32.totalorder %s139, %s140
      %p149 = scmp.eq.s32.totalorder %s24, 0
      %p150 = por %p148, %p149
      %p151 = scmp.ne.s32.totalorder %s139, %s140
      %p152 = scmp.eq.s32.totalorder %s25, 1
      %p153 = por %p151, %p152
      %p155 = scmp.ne.s32.totalorder %s140, %s154
      %p156 = scmp.eq.s32.totalorder %s25, 0
      %p157 = por %p155, %p156
      %s159 = sadd.s32 %s158, 1
      %p162 = scmp.eq.s32.totalorder %s19, 1
      %p163 = scmp.ne.s32.totalorder %s158, %s160
      %p164 = scmp.eq.s32.totalorder %s19, 0
      %p165 = por %p163, %p164
      %p166 = scmp.ne.s32.totalorder %s158, %s160
      %p167 = scmp.eq.s32.totalorder %s24, 1
      %p168 = por %p166, %p167
      %p169 = scmp.ne.s32.totalorder %s160, %s161
      %p170 = scmp.eq.s32.totalorder %s24, 0
      %p171 = por %p169, %p170
      %p172 = scmp.ne.s32.totalorder %s160, %s161
      %p173 = scmp.eq.s32.totalorder %s25, 1
      %p174 = por %p172, %p173
      %p176 = scmp.ne.s32.totalorder %s161, %s175
      %p177 = scmp.eq.s32.totalorder %s25, 0
      %p178 = por %p176, %p177
      %s180 = sadd.s32 %s179, 1
      %p183 = scmp.eq.s32.totalorder %s19, 1
      %p184 = scmp.ne.s32.totalorder %s179, %s181
      %p185 = scmp.eq.s32.totalorder %s19, 0
      %p186 = por %p184, %p185
      %p187 = scmp.ne.s32.totalorder %s179, %s181
      %p188 = scmp.eq.s32.totalorder %s24, 1
      %p189 = por %p187, %p188
      %p190 = scmp.ne.s32.totalorder %s181, %s182
      %p191 = scmp.eq.s32.totalorder %s24, 0
      %p192 = por %p190, %p191
      %p193 = scmp.ne.s32.totalorder %s181, %s182
      %p194 = scmp.eq.s32.totalorder %s25, 1
      %p195 = por %p193, %p194
      %p197 = scmp.ne.s32.totalorder %s182, %s196
      %p198 = scmp.eq.s32.totalorder %s25, 0
      %p199 = por %p197, %p198
      %s201 = sadd.s32 %s200, 1
      %p204 = scmp.eq.s32.totalorder %s19, 1
      %p205 = scmp.ne.s32.totalorder %s200, %s202
      %p206 = scmp.eq.s32.totalorder %s19, 0
      %p207 = por %p205, %p206
      %p208 = scmp.ne.s32.totalorder %s200, %s202
      %p209 = scmp.eq.s32.totalorder %s24, 1
      %p210 = por %p208, %p209
      %p211 = scmp.ne.s32.totalorder %s202, %s203
      %p212 = scmp.eq.s32.totalorder %s24, 0
      %p213 = por %p211, %p212
      %p214 = scmp.ne.s32.totalorder %s202, %s203
      %p215 = scmp.eq.s32.totalorder %s25, 1
      %p216 = por %p214, %p215
      %p218 = scmp.ne.s32.totalorder %s203, %s217
      %p219 = scmp.eq.s32.totalorder %s25, 0
      %p220 = por %p218, %p219
      %s222 = sadd.s32 %s221, 1
      %p225 = scmp.eq.s32.totalorder %s19, 1
      %p226 = scmp.ne.s32.totalorder %s221, %s223
      %p227 = scmp.eq.s32.totalorder %s19, 0
      %p228 = por %p226, %p227
      %p229 = scmp.ne.s32.totalorder %s221, %s223
      %p230 = scmp.eq.s32.totalorder %s24, 1
      %p231 = por %p229, %p230
      %p232 = scmp.ne.s32.totalorder %s223, %s224
      %p233 = scmp.eq.s32.totalorder %s24, 0
      %p234 = por %p232, %p233
      %p235 = scmp.ne.s32.totalorder %s223, %s224
      %p236 = scmp.eq.s32.totalorder %s25, 1
      %p237 = por %p235, %p236
      %p239 = scmp.ne.s32.totalorder %s224, %s238
      %p240 = scmp.eq.s32.totalorder %s25, 0
      %p241 = por %p239, %p240
      %s242 = ssub.s32 %s19, %s26
      %p243 = scmp.eq.s32.totalorder %s242, 0
      %s245 = sadd.s32 %s244, 1
      %s246 = scalar_select %p243, %s244, %s245
      %p249 = pneg %p243
      %p250 = scmp.eq.s32.totalorder %s19, 1
      %p251 = por %p249, %p250
      %p252 = scmp.ne.s32.totalorder %s244, %s247
      %p253 = scmp.eq.s32.totalorder %s19, 0
      %p254 = por %p252, %p253
      %p255 = scmp.ne.s32.totalorder %s244, %s247
      %p256 = scmp.eq.s32.totalorder %s24, 1
      %p257 = por %p255, %p256
      %p258 = scmp.ne.s32.totalorder %s247, %s248
      %p259 = scmp.eq.s32.totalorder %s24, 0
      %p260 = por %p258, %p259
      %p261 = scmp.ne.s32.totalorder %s247, %s248
      %p262 = scmp.eq.s32.totalorder %s25, 1
      %p263 = por %p261, %p262
      %p265 = scmp.ne.s32.totalorder %s248, %s264
      %p266 = scmp.eq.s32.totalorder %s25, 0
      %p267 = por %p265, %p266
      %p268 = scmp.le.s32.totalorder 1, %s19
      %p269 = scmp.lt.s32.totalorder %s19, 3
      %p270 = pnand %p268, %p269
      %p271 = pneg %p270
      // Predicated region
      $region9: #{tpu_custom_call.1} parent=5 // pred_check
        _
      $region10: #{tpu_custom_call.1} parent=5 // pred_check_branch
        %273 = sbr.rel (%p270) target = $region12
      $region11: #{tpu_custom_call.1} parent=5 // pred_region
        %s274 = ssub.s32 %s19, 1
        // Predicated region
        $region13: #{tpu_custom_call.1} parent=11 // pred_check
          %p275 = pneg %p66
        $region14: #{tpu_custom_call.1} parent=11 // pred_check_branch
          %277 = sbr.rel (%p275) target = $region16
        $region15: #{tpu_custom_call.1} parent=11 // pred_region
          _
        $region16: #{tpu_custom_call.1} parent=11 // pred_fallthru
          _
        // Predicated region
        $region17: #{tpu_custom_call.1} parent=11 // pred_check
          %p278 = pneg %p87
        $region18: #{tpu_custom_call.1} parent=11 // pred_check_branch
          %280 = sbr.rel (%p278) target = $region20
        $region19: #{tpu_custom_call.1} parent=11 // pred_region
          _
        $region20: #{tpu_custom_call.1} parent=11 // pred_fallthru
          _
        // Predicated region
        $region21: #{tpu_custom_call.1} parent=11 // pred_check
          %p281 = pneg %p108
        $region22: #{tpu_custom_call.1} parent=11 // pred_check_branch
          %283 = sbr.rel (%p281) target = $region24
        $region23: #{tpu_custom_call.1} parent=11 // pred_region
          _
        $region24: #{tpu_custom_call.1} parent=11 // pred_fallthru
          _
        // Predicated region
        $region25: #{tpu_custom_call.1} parent=11 // pred_check
          %p284 = pneg %p129
        $region26: #{tpu_custom_call.1} parent=11 // pred_check_branch
          %286 = sbr.rel (%p284) target = $region28
        $region27: #{tpu_custom_call.1} parent=11 // pred_region
          _
        $region28: #{tpu_custom_call.1} parent=11 // pred_fallthru
          _
        // Predicated region
        $region29: #{tpu_custom_call.1} parent=11 // pred_check
          %p287 = pneg %p150
        $region30: #{tpu_custom_call.1} parent=11 // pred_check_branch
          %289 = sbr.rel (%p287) target = $region32
        $region31: #{tpu_custom_call.1} parent=11 // pred_region
          _
        $region32: #{tpu_custom_call.1} parent=11 // pred_fallthru
          _
        // Predicated region
        $region33: #{tpu_custom_call.1} parent=11 // pred_check
          %p290 = pneg %p171
        $region34: #{tpu_custom_call.1} parent=11 // pred_check_branch
          %292 = sbr.rel (%p290) target = $region36
        $region35: #{tpu_custom_call.1} parent=11 // pred_region
          _
        $region36: #{tpu_custom_call.1} parent=11 // pred_fallthru
          _
        // Predicated region
        $region37: #{tpu_custom_call.1} parent=11 // pred_check
          %p293 = pneg %p192
        $region38: #{tpu_custom_call.1} parent=11 // pred_check_branch
          %295 = sbr.rel (%p293) target = $region40
        $region39: #{tpu_custom_call.1} parent=11 // pred_region
          _
        $region40: #{tpu_custom_call.1} parent=11 // pred_fallthru
          _
        // Predicated region
        $region41: #{tpu_custom_call.1} parent=11 // pred_check
          %p296 = pneg %p213
        $region42: #{tpu_custom_call.1} parent=11 // pred_check_branch
          %298 = sbr.rel (%p296) target = $region44
        $region43: #{tpu_custom_call.1} parent=11 // pred_region
          _
        $region44: #{tpu_custom_call.1} parent=11 // pred_fallthru
          _
        // Predicated region
        $region45: #{tpu_custom_call.1} parent=11 // pred_check
          %p299 = pneg %p234
        $region46: #{tpu_custom_call.1} parent=11 // pred_check_branch
          %301 = sbr.rel (%p299) target = $region48
        $region47: #{tpu_custom_call.1} parent=11 // pred_region
          _
        $region48: #{tpu_custom_call.1} parent=11 // pred_fallthru
          _
      $region12: #{tpu_custom_call.1} parent=5 // pred_fallthru
        _
      %p302 = scmp.lt.s32.totalorder %s19, 2
      // Predicated region
      $region49: #{tpu_custom_call.1} parent=5 // pred_check
        %p303 = pneg %p302
      $region50: #{tpu_custom_call.1} parent=5 // pred_check_branch
        %305 = sbr.rel (%p303) target = $region52
      $region51: #{tpu_custom_call.1} parent=5 // pred_region
        // Predicated region
        $region53: #{tpu_custom_call.1} parent=51 // pred_check
          %p306 = pneg %p39
        $region54: #{tpu_custom_call.1} parent=51 // pred_check_branch
          %308 = sbr.rel (%p306) target = $region56
        $region55: #{tpu_custom_call.1} parent=51 // pred_region
          %p309 = scmp.lt.s32.totalorder %s19, 1
          %s310 = scalar_select %p309, %s19, 1
          %s311 = smul.addr %s310, 54
          %s312 = smul.addr %s311, 8
          %s313 = scalar_lea.vmem %s0, %s312
        $region56: #{tpu_custom_call.1} parent=51 // pred_fallthru
          _
      $region52: #{tpu_custom_call.1} parent=5 // pred_fallthru
        _
      %p314 = scmp.le.s32.totalorder 1, %s19
      %p315 = scmp.lt.s32.totalorder %s19, 3
      %p316 = pnand %p314, %p315
      %p317 = pneg %p316
      // Predicated region
      $region57: #{tpu_custom_call.1} parent=5 // pred_check
        _
      $region58: #{tpu_custom_call.1} parent=5 // pred_check_branch
        %319 = sbr.rel (%p316) target = $region60
      $region59: #{tpu_custom_call.1} parent=5 // pred_region
        %s320 = ssub.s32 %s19, 1
        %p321 = scmp.lt.s32.totalorder %s24, 1
        %s322 = scalar_select %p321, %s24, 1
        %s323 = smul.addr %s322, 54
        %s324 = smul.addr %s323, 8
        %s325 = scalar_lea.vmem %s0, %s324
        %p326 = pneg %p45
        %p327 = pneg %p42
        %p328 = pneg %p66
        %p329 = pneg %p63
        %p330 = pneg %p87
        %p331 = pneg %p84
        %p332 = pneg %p108
        %p333 = pneg %p105
        %p334 = pneg %p129
        %p335 = pneg %p126
        %p336 = pneg %p150
        %p337 = pneg %p147
        %p338 = pneg %p171
        %p339 = pneg %p168
        %p340 = pneg %p192
        %p341 = pneg %p189
        %p342 = pneg %p213
        %p343 = pneg %p210
        %p344 = pneg %p234
        %p345 = pneg %p231
        %p346 = pneg %p260
        %p347 = pneg %p257
        %s348 = sand.u32 %s247, 1
        %s349 = scalar_lea.sflag [#allocation6], %s348
        %s350 = sand.u32 %s247, 1
        %s351 = smul.addr %s350, 256
        %s352 = scalar_lea.vmem [#allocation5], %s351
        %p353 = scmp.lt.s32.totalorder %s24, 1
        %s354 = scalar_select %p353, %s24, 1
        %s355 = smul.addr %s354, 54
        %s356 = smul.addr %s355, 8
        %s357 = scalar_lea.vmem %s0, %s356
        %v359 = vld [vmem:[%s357] sm:$0xff]
        %v360 = vld [vmem:[%s357 + $0x8] sm:$0xff]
        %v361 = vld [vmem:[%s357 + $0x18] sm:$0xff]
        %v362 = vld [vmem:[%s357 + $0x20] sm:$0xff]
        %v363 = vld [vmem:[%s357 + $0x30] sm:$0xff]
        %v364 = vld [vmem:[%s357 + $0x38] sm:$0xff]
        %v365 = vld [vmem:[%s357 + $0x48] sm:$0xff]
        %v366 = vld [vmem:[%s357 + $0x50] sm:$0xff]
        %v367 = vld [vmem:[%s357 + $0x60] sm:$0xff]
        %v368 = vld [vmem:[%s357 + $0x68] sm:$0xff]
        %v369 = vld [vmem:[%s357 + $0x78] sm:$0xff]
        %v370 = vld [vmem:[%s357 + $0x80] sm:$0xff]
        %v371 = vld [vmem:[%s357 + $0x90] sm:$0xff]
        %v372 = vld [vmem:[%s357 + $0x98] sm:$0xff]
        %v373 = vld [vmem:[%s357 + $0xa8] sm:$0xff]
        %v374 = vld [vmem:[%s357 + $0xb0] sm:$0xff]
        %v375 = vld [vmem:[%s357 + $0xc0] sm:$0xff]
        %v376 = vld [vmem:[%s357 + $0xc8] sm:$0xff]
        %v377 = vld [vmem:[%s357 + $0xd8] sm:$0xff]
        %v378 = vld [vmem:[%s357 + $0xe0] sm:$0xff]
        %v379 = vld [vmem:[%s357 + $0xf0] sm:$0xff]
        %v380 = vld [vmem:[%s357 + $0xf8] sm:$0xff]
        %v381 = vld [vmem:[%s357 + $0x108] sm:$0xff]
        %v382 = vld [vmem:[%s357 + $0x110] sm:$0xff]
        %v383 = vld [vmem:[%s357 + $0x120] sm:$0xff]
        %v384 = vld [vmem:[%s357 + $0x128] sm:$0xff]
        %v385 = vld [vmem:[%s357 + $0x138] sm:$0xff]
        %v386 = vld [vmem:[%s357 + $0x140] sm:$0xff]
        %v387 = vld [vmem:[%s357 + $0x150] sm:$0xff]
        %v388 = vld [vmem:[%s357 + $0x158] sm:$0xff]
        %v389 = vld [vmem:[%s357 + $0x168] sm:$0xff]
        %v390 = vld [vmem:[%s357 + $0x170] sm:$0xff]
        %v391 = vpack.c.bf16 %v360, %v359
        %v392 = vpack.c.bf16 %v362, %v361
        %v393 = vpack.c.bf16 %v364, %v363
        %v394 = vpack.c.bf16 %v366, %v365
        %v395 = vpack.c.bf16 %v368, %v367
        %v396 = vpack.c.bf16 %v370, %v369
        %v397 = vpack.c.bf16 %v372, %v371
        %v398 = vpack.c.bf16 %v374, %v373
        %v399 = vpack.c.bf16 %v376, %v375
        %v400 = vpack.c.bf16 %v378, %v377
        %v401 = vpack.c.bf16 %v380, %v379
        %v402 = vpack.c.bf16 %v382, %v381
        %v403 = vpack.c.bf16 %v384, %v383
        %v404 = vpack.c.bf16 %v386, %v385
        %v405 = vpack.c.bf16 %v388, %v387
        %v406 = vpack.c.bf16 %v390, %v389
        %407 = vst [vmem:[#allocation2] sm:$0xff] %v391
        %408 = vst [vmem:[#allocation2 + $0x48] sm:$0xff] %v392
        %409 = vst [vmem:[#allocation2 + $0x90] sm:$0xff] %v393
        %410 = vst [vmem:[#allocation2 + $0xd8] sm:$0xff] %v394
        %411 = vst [vmem:[#allocation2 + $0x120] sm:$0xff] %v395
        %412 = vst [vmem:[#allocation2 + $0x168] sm:$0xff] %v396
        %413 = vst [vmem:[#allocation2 + $0x1b0] sm:$0xff] %v397
        %414 = vst [vmem:[#allocation2 + $0x1f8] sm:$0xff] %v398
        %415 = vst [vmem:[#allocation2 + $0x240] sm:$0xff] %v399
        %416 = vst [vmem:[#allocation2 + $0x288] sm:$0xff] %v400
        %417 = vst [vmem:[#allocation2 + $0x2d0] sm:$0xff] %v401
        %418 = vst [vmem:[#allocation2 + $0x318] sm:$0xff] %v402
        %419 = vst [vmem:[#allocation2 + $0x360] sm:$0xff] %v403
        %420 = vst [vmem:[#allocation2 + $0x3a8] sm:$0xff] %v404
        %421 = vst [vmem:[#allocation2 + $0x3f0] sm:$0xff] %v405
        %422 = vst [vmem:[#allocation2 + $0x438] sm:$0xff] %v406
        %v423 = vld [vmem:[%s357 + $0x1] sm:$0xff]
        %v424 = vld [vmem:[%s357 + $0x9] sm:$0xff]
        %v425 = vld [vmem:[%s357 + $0x19] sm:$0xff]
        %v426 = vld [vmem:[%s357 + $0x21] sm:$0xff]
        %v427 = vld [vmem:[%s357 + $0x31] sm:$0xff]
        %v428 = vld [vmem:[%s357 + $0x39] sm:$0xff]
        %v429 = vld [vmem:[%s357 + $0x49] sm:$0xff]
        %v430 = vld [vmem:[%s357 + $0x51] sm:$0xff]
        %v431 = vld [vmem:[%s357 + $0x61] sm:$0xff]
        %v432 = vld [vmem:[%s357 + $0x69] sm:$0xff]
        %v433 = vld [vmem:[%s357 + $0x79] sm:$0xff]
        %v434 = vld [vmem:[%s357 + $0x81] sm:$0xff]
        %v435 = vld [vmem:[%s357 + $0x91] sm:$0xff]
        %v436 = vld [vmem:[%s357 + $0x99] sm:$0xff]
        %v437 = vld [vmem:[%s357 + $0xa9] sm:$0xff]
        %v438 = vld [vmem:[%s357 + $0xb1] sm:$0xff]
        %v439 = vld [vmem:[%s357 + $0xc1] sm:$0xff]
        %v440 = vld [vmem:[%s357 + $0xc9] sm:$0xff]
        %v441 = vld [vmem:[%s357 + $0xd9] sm:$0xff]
        %v442 = vld [vmem:[%s357 + $0xe1] sm:$0xff]
        %v443 = vld [vmem:[%s357 + $0xf1] sm:$0xff]
        %v444 = vld [vmem:[%s357 + $0xf9] sm:$0xff]
        %v445 = vld [vmem:[%s357 + $0x109] sm:$0xff]
        %v446 = vld [vmem:[%s357 + $0x111] sm:$0xff]
        %v447 = vld [vmem:[%s357 + $0x121] sm:$0xff]
        %v448 = vld [vmem:[%s357 + $0x129] sm:$0xff]
        %v449 = vld [vmem:[%s357 + $0x139] sm:$0xff]
        %v450 = vld [vmem:[%s357 + $0x141] sm:$0xff]
        %v451 = vld [vmem:[%s357 + $0x151] sm:$0xff]
        %v452 = vld [vmem:[%s357 + $0x159] sm:$0xff]
        %v453 = vld [vmem:[%s357 + $0x169] sm:$0xff]
        %v454 = vld [vmem:[%s357 + $0x171] sm:$0xff]
        %v455 = vpack.c.bf16 %v424, %v423
        %v456 = vpack.c.bf16 %v426, %v425
        %v457 = vpack.c.bf16 %v428, %v427
        %v458 = vpack.c.bf16 %v430, %v429
        %v459 = vpack.c.bf16 %v432, %v431
        %v460 = vpack.c.bf16 %v434, %v433
        %v461 = vpack.c.bf16 %v436, %v435
        %v462 = vpack.c.bf16 %v438, %v437
        %v463 = vpack.c.bf16 %v440, %v439
        %v464 = vpack.c.bf16 %v442, %v441
        %v465 = vpack.c.bf16 %v444, %v443
        %v466 = vpack.c.bf16 %v446, %v445
        %v467 = vpack.c.bf16 %v448, %v447
        %v468 = vpack.c.bf16 %v450, %v449
        %v469 = vpack.c.bf16 %v452, %v451
        %v470 = vpack.c.bf16 %v454, %v453
        %471 = vst [vmem:[#allocation2 + $0x8] sm:$0xff] %v455
        %472 = vst [vmem:[#allocation2 + $0x50] sm:$0xff] %v456
        %473 = vst [vmem:[#allocation2 + $0x98] sm:$0xff] %v457
        %474 = vst [vmem:[#allocation2 + $0xe0] sm:$0xff] %v458
        %475 = vst [vmem:[#allocation2 + $0x128] sm:$0xff] %v459
        %476 = vst [vmem:[#allocation2 + $0x170] sm:$0xff] %v460
        %477 = vst [vmem:[#allocation2 + $0x1b8] sm:$0xff] %v461
        %478 = vst [vmem:[#allocation2 + $0x200] sm:$0xff] %v462
        %479 = vst [vmem:[#allocation2 + $0x248] sm:$0xff] %v463
        %480 = vst [vmem:[#allocation2 + $0x290] sm:$0xff] %v464
        %481 = vst [vmem:[#allocation2 + $0x2d8] sm:$0xff] %v465
        %482 = vst [vmem:[#allocation2 + $0x320] sm:$0xff] %v466
        %483 = vst [vmem:[#allocation2 + $0x368] sm:$0xff] %v467
        %484 = vst [vmem:[#allocation2 + $0x3b0] sm:$0xff] %v468
        %485 = vst [vmem:[#allocation2 + $0x3f8] sm:$0xff] %v469
        %486 = vst [vmem:[#allocation2 + $0x440] sm:$0xff] %v470
        %v487 = vld [vmem:[%s357 + $0x2] sm:$0xff]
        %v488 = vld [vmem:[%s357 + $0xa] sm:$0xff]
        %v489 = vld [vmem:[%s357 + $0x1a] sm:$0xff]
        %v490 = vld [vmem:[%s357 + $0x22] sm:$0xff]
        %v491 = vld [vmem:[%s357 + $0x32] sm:$0xff]
        %v492 = vld [vmem:[%s357 + $0x3a] sm:$0xff]
        %v493 = vld [vmem:[%s357 + $0x4a] sm:$0xff]
        %v494 = vld [vmem:[%s357 + $0x52] sm:$0xff]
        %v495 = vld [vmem:[%s357 + $0x62] sm:$0xff]
        %v496 = vld [vmem:[%s357 + $0x6a] sm:$0xff]
        %v497 = vld [vmem:[%s357 + $0x7a] sm:$0xff]
        %v498 = vld [vmem:[%s357 + $0x82] sm:$0xff]
        %v499 = vld [vmem:[%s357 + $0x92] sm:$0xff]
        %v500 = vld [vmem:[%s357 + $0x9a] sm:$0xff]
        %v501 = vld [vmem:[%s357 + $0xaa] sm:$0xff]
        %v502 = vld [vmem:[%s357 + $0xb2] sm:$0xff]
        %v503 = vld [vmem:[%s357 + $0xc2] sm:$0xff]
        %v504 = vld [vmem:[%s357 + $0xca] sm:$0xff]
        %v505 = vld [vmem:[%s357 + $0xda] sm:$0xff]
        %v506 = vld [vmem:[%s357 + $0xe2] sm:$0xff]
        %v507 = vld [vmem:[%s357 + $0xf2] sm:$0xff]
        %v508 = vld [vmem:[%s357 + $0xfa] sm:$0xff]
        %v509 = vld [vmem:[%s357 + $0x10a] sm:$0xff]
        %v510 = vld [vmem:[%s357 + $0x112] sm:$0xff]
        %v511 = vld [vmem:[%s357 + $0x122] sm:$0xff]
        %v512 = vld [vmem:[%s357 + $0x12a] sm:$0xff]
        %v513 = vld [vmem:[%s357 + $0x13a] sm:$0xff]
        %v514 = vld [vmem:[%s357 + $0x142] sm:$0xff]
        %v515 = vld [vmem:[%s357 + $0x152] sm:$0xff]
        %v516 = vld [vmem:[%s357 + $0x15a] sm:$0xff]
        %v517 = vld [vmem:[%s357 + $0x16a] sm:$0xff]
        %v518 = vld [vmem:[%s357 + $0x172] sm:$0xff]
        %v519 = vpack.c.bf16 %v488, %v487
        %v520 = vpack.c.bf16 %v490, %v489
        %v521 = vpack.c.bf16 %v492, %v491
        %v522 = vpack.c.bf16 %v494, %v493
        %v523 = vpack.c.bf16 %v496, %v495
        %v524 = vpack.c.bf16 %v498, %v497
        %v525 = vpack.c.bf16 %v500, %v499
        %v526 = vpack.c.bf16 %v502, %v501
        %v527 = vpack.c.bf16 %v504, %v503
        %v528 = vpack.c.bf16 %v506, %v505
        %v529 = vpack.c.bf16 %v508, %v507
        %v530 = vpack.c.bf16 %v510, %v509
        %v531 = vpack.c.bf16 %v512, %v511
        %v532 = vpack.c.bf16 %v514, %v513
        %v533 = vpack.c.bf16 %v516, %v515
        %v534 = vpack.c.bf16 %v518, %v517
        %535 = vst [vmem:[#allocation2 + $0x10] sm:$0xff] %v519
        %536 = vst [vmem:[#allocation2 + $0x58] sm:$0xff] %v520
        %537 = vst [vmem:[#allocation2 + $0xa0] sm:$0xff] %v521
        %538 = vst [vmem:[#allocation2 + $0xe8] sm:$0xff] %v522
        %539 = vst [vmem:[#allocation2 + $0x130] sm:$0xff] %v523
        %540 = vst [vmem:[#allocation2 + $0x178] sm:$0xff] %v524
        %541 = vst [vmem:[#allocation2 + $0x1c0] sm:$0xff] %v525
        %542 = vst [vmem:[#allocation2 + $0x208] sm:$0xff] %v526
        %543 = vst [vmem:[#allocation2 + $0x250] sm:$0xff] %v527
        %544 = vst [vmem:[#allocation2 + $0x298] sm:$0xff] %v528
        %545 = vst [vmem:[#allocation2 + $0x2e0] sm:$0xff] %v529
        %546 = vst [vmem:[#allocation2 + $0x328] sm:$0xff] %v530
        %547 = vst [vmem:[#allocation2 + $0x370] sm:$0xff] %v531
        %548 = vst [vmem:[#allocation2 + $0x3b8] sm:$0xff] %v532
        %549 = vst [vmem:[#allocation2 + $0x400] sm:$0xff] %v533
        %550 = vst [vmem:[#allocation2 + $0x448] sm:$0xff] %v534
        %s551 = scalar_lea.vmem %s357, 24
        %v552 = vld [vmem:[%s551] sm:$0xff]
        %v553 = vld [vmem:[%s551 + $0x8] sm:$0xff]
        %v554 = vld [vmem:[%s551 + $0x18] sm:$0xff]
        %v555 = vld [vmem:[%s551 + $0x20] sm:$0xff]
        %v556 = vld [vmem:[%s551 + $0x30] sm:$0xff]
        %v557 = vld [vmem:[%s551 + $0x38] sm:$0xff]
        %v558 = vld [vmem:[%s551 + $0x48] sm:$0xff]
        %v559 = vld [vmem:[%s551 + $0x50] sm:$0xff]
        %v560 = vld [vmem:[%s551 + $0x60] sm:$0xff]
        %v561 = vld [vmem:[%s551 + $0x68] sm:$0xff]
        %v562 = vld [vmem:[%s551 + $0x78] sm:$0xff]
        %v563 = vld [vmem:[%s551 + $0x80] sm:$0xff]
        %v564 = vld [vmem:[%s551 + $0x90] sm:$0xff]
        %v565 = vld [vmem:[%s551 + $0x98] sm:$0xff]
        %v566 = vld [vmem:[%s551 + $0xa8] sm:$0xff]
        %v567 = vld [vmem:[%s551 + $0xb0] sm:$0xff]
        %v568 = vld [vmem:[%s551 + $0xc0] sm:$0xff]
        %v569 = vld [vmem:[%s551 + $0xc8] sm:$0xff]
        %v570 = vld [vmem:[%s551 + $0xd8] sm:$0xff]
        %v571 = vld [vmem:[%s551 + $0xe0] sm:$0xff]
        %v572 = vld [vmem:[%s551 + $0xf0] sm:$0xff]
        %v573 = vld [vmem:[%s551 + $0xf8] sm:$0xff]
        %v574 = vld [vmem:[%s551 + $0x108] sm:$0xff]
        %v575 = vld [vmem:[%s551 + $0x110] sm:$0xff]
        %v576 = vld [vmem:[%s551 + $0x120] sm:$0xff]
        %v577 = vld [vmem:[%s551 + $0x128] sm:$0xff]
        %v578 = vld [vmem:[%s551 + $0x138] sm:$0xff]
        %v579 = vld [vmem:[%s551 + $0x140] sm:$0xff]
        %v580 = vld [vmem:[%s551 + $0x150] sm:$0xff]
        %v581 = vld [vmem:[%s551 + $0x158] sm:$0xff]
        %v582 = vld [vmem:[%s551 + $0x168] sm:$0xff]
        %v583 = vld [vmem:[%s551 + $0x170] sm:$0xff]
        %v584 = vpack.c.bf16 %v553, %v552
        %v585 = vpack.c.bf16 %v555, %v554
        %v586 = vpack.c.bf16 %v557, %v556
        %v587 = vpack.c.bf16 %v559, %v558
        %v588 = vpack.c.bf16 %v561, %v560
        %v589 = vpack.c.bf16 %v563, %v562
        %v590 = vpack.c.bf16 %v565, %v564
        %v591 = vpack.c.bf16 %v567, %v566
        %v592 = vpack.c.bf16 %v569, %v568
        %v593 = vpack.c.bf16 %v571, %v570
        %v594 = vpack.c.bf16 %v573, %v572
        %v595 = vpack.c.bf16 %v575, %v574
        %v596 = vpack.c.bf16 %v577, %v576
        %v597 = vpack.c.bf16 %v579, %v578
        %v598 = vpack.c.bf16 %v581, %v580
        %v599 = vpack.c.bf16 %v583, %v582
        %600 = vst [vmem:[#allocation2 + $0x18] sm:$0xff] %v584
        %601 = vst [vmem:[#allocation2 + $0x60] sm:$0xff] %v585
        %602 = vst [vmem:[#allocation2 + $0xa8] sm:$0xff] %v586
        %603 = vst [vmem:[#allocation2 + $0xf0] sm:$0xff] %v587
        %604 = vst [vmem:[#allocation2 + $0x138] sm:$0xff] %v588
        %605 = vst [vmem:[#allocation2 + $0x180] sm:$0xff] %v589
        %606 = vst [vmem:[#allocation2 + $0x1c8] sm:$0xff] %v590
        %607 = vst [vmem:[#allocation2 + $0x210] sm:$0xff] %v591
        %608 = vst [vmem:[#allocation2 + $0x258] sm:$0xff] %v592
        %609 = vst [vmem:[#allocation2 + $0x2a0] sm:$0xff] %v593
        %610 = vst [vmem:[#allocation2 + $0x2e8] sm:$0xff] %v594
        %611 = vst [vmem:[#allocation2 + $0x330] sm:$0xff] %v595
        %612 = vst [vmem:[#allocation2 + $0x378] sm:$0xff] %v596
        %613 = vst [vmem:[#allocation2 + $0x3c0] sm:$0xff] %v597
        %614 = vst [vmem:[#allocation2 + $0x408] sm:$0xff] %v598
        %615 = vst [vmem:[#allocation2 + $0x450] sm:$0xff] %v599
        %v616 = vld [vmem:[%s551 + $0x1] sm:$0xff]
        %v617 = vld [vmem:[%s551 + $0x9] sm:$0xff]
        %v618 = vld [vmem:[%s551 + $0x19] sm:$0xff]
        %v619 = vld [vmem:[%s551 + $0x21] sm:$0xff]
        %v620 = vld [vmem:[%s551 + $0x31] sm:$0xff]
        %v621 = vld [vmem:[%s551 + $0x39] sm:$0xff]
        %v622 = vld [vmem:[%s551 + $0x49] sm:$0xff]
        %v623 = vld [vmem:[%s551 + $0x51] sm:$0xff]
        %v624 = vld [vmem:[%s551 + $0x61] sm:$0xff]
        %v625 = vld [vmem:[%s551 + $0x69] sm:$0xff]
        %v626 = vld [vmem:[%s551 + $0x79] sm:$0xff]
        %v627 = vld [vmem:[%s551 + $0x81] sm:$0xff]
        %v628 = vld [vmem:[%s551 + $0x91] sm:$0xff]
        %v629 = vld [vmem:[%s551 + $0x99] sm:$0xff]
        %v630 = vld [vmem:[%s551 + $0xa9] sm:$0xff]
        %v631 = vld [vmem:[%s551 + $0xb1] sm:$0xff]
        %v632 = vld [vmem:[%s551 + $0xc1] sm:$0xff]
        %v633 = vld [vmem:[%s551 + $0xc9] sm:$0xff]
        %v634 = vld [vmem:[%s551 + $0xd9] sm:$0xff]
        %v635 = vld [vmem:[%s551 + $0xe1] sm:$0xff]
        %v636 = vld [vmem:[%s551 + $0xf1] sm:$0xff]
        %v637 = vld [vmem:[%s551 + $0xf9] sm:$0xff]
        %v638 = vld [vmem:[%s551 + $0x109] sm:$0xff]
        %v639 = vld [vmem:[%s551 + $0x111] sm:$0xff]
        %v640 = vld [vmem:[%s551 + $0x121] sm:$0xff]
        %v641 = vld [vmem:[%s551 + $0x129] sm:$0xff]
        %v642 = vld [vmem:[%s551 + $0x139] sm:$0xff]
        %v643 = vld [vmem:[%s551 + $0x141] sm:$0xff]
        %v644 = vld [vmem:[%s551 + $0x151] sm:$0xff]
        %v645 = vld [vmem:[%s551 + $0x159] sm:$0xff]
        %v646 = vld [vmem:[%s551 + $0x169] sm:$0xff]
        %v647 = vld [vmem:[%s551 + $0x171] sm:$0xff]
        %v648 = vpack.c.bf16 %v617, %v616
        %v649 = vpack.c.bf16 %v619, %v618
        %v650 = vpack.c.bf16 %v621, %v620
        %v651 = vpack.c.bf16 %v623, %v622
        %v652 = vpack.c.bf16 %v625, %v624
        %v653 = vpack.c.bf16 %v627, %v626
        %v654 = vpack.c.bf16 %v629, %v628
        %v655 = vpack.c.bf16 %v631, %v630
        %v656 = vpack.c.bf16 %v633, %v632
        %v657 = vpack.c.bf16 %v635, %v634
        %v658 = vpack.c.bf16 %v637, %v636
        %v659 = vpack.c.bf16 %v639, %v638
        %v660 = vpack.c.bf16 %v641, %v640
        %v661 = vpack.c.bf16 %v643, %v642
        %v662 = vpack.c.bf16 %v645, %v644
        %v663 = vpack.c.bf16 %v647, %v646
        %664 = vst [vmem:[#allocation2 + $0x20] sm:$0xff] %v648
        %665 = vst [vmem:[#allocation2 + $0x68] sm:$0xff] %v649
        %666 = vst [vmem:[#allocation2 + $0xb0] sm:$0xff] %v650
        %667 = vst [vmem:[#allocation2 + $0xf8] sm:$0xff] %v651
        %668 = vst [vmem:[#allocation2 + $0x140] sm:$0xff] %v652
        %669 = vst [vmem:[#allocation2 + $0x188] sm:$0xff] %v653
        %670 = vst [vmem:[#allocation2 + $0x1d0] sm:$0xff] %v654
        %671 = vst [vmem:[#allocation2 + $0x218] sm:$0xff] %v655
        %672 = vst [vmem:[#allocation2 + $0x260] sm:$0xff] %v656
        %673 = vst [vmem:[#allocation2 + $0x2a8] sm:$0xff] %v657
        %674 = vst [vmem:[#allocation2 + $0x2f0] sm:$0xff] %v658
        %675 = vst [vmem:[#allocation2 + $0x338] sm:$0xff] %v659
        %676 = vst [vmem:[#allocation2 + $0x380] sm:$0xff] %v660
        %677 = vst [vmem:[#allocation2 + $0x3c8] sm:$0xff] %v661
        %678 = vst [vmem:[#allocation2 + $0x410] sm:$0xff] %v662
        %679 = vst [vmem:[#allocation2 + $0x458] sm:$0xff] %v663
        %v680 = vld [vmem:[%s551 + $0x2] sm:$0xff]
        %v681 = vld [vmem:[%s551 + $0xa] sm:$0xff]
        %v682 = vld [vmem:[%s551 + $0x1a] sm:$0xff]
        %v683 = vld [vmem:[%s551 + $0x22] sm:$0xff]
        %v684 = vld [vmem:[%s551 + $0x32] sm:$0xff]
        %v685 = vld [vmem:[%s551 + $0x3a] sm:$0xff]
        %v686 = vld [vmem:[%s551 + $0x4a] sm:$0xff]
        %v687 = vld [vmem:[%s551 + $0x52] sm:$0xff]
        %v688 = vld [vmem:[%s551 + $0x62] sm:$0xff]
        %v689 = vld [vmem:[%s551 + $0x6a] sm:$0xff]
        %v690 = vld [vmem:[%s551 + $0x7a] sm:$0xff]
        %v691 = vld [vmem:[%s551 + $0x82] sm:$0xff]
        %v692 = vld [vmem:[%s551 + $0x92] sm:$0xff]
        %v693 = vld [vmem:[%s551 + $0x9a] sm:$0xff]
        %v694 = vld [vmem:[%s551 + $0xaa] sm:$0xff]
        %v695 = vld [vmem:[%s551 + $0xb2] sm:$0xff]
        %v696 = vld [vmem:[%s551 + $0xc2] sm:$0xff]
        %v697 = vld [vmem:[%s551 + $0xca] sm:$0xff]
        %v698 = vld [vmem:[%s551 + $0xda] sm:$0xff]
        %v699 = vld [vmem:[%s551 + $0xe2] sm:$0xff]
        %v700 = vld [vmem:[%s551 + $0xf2] sm:$0xff]
        %v701 = vld [vmem:[%s551 + $0xfa] sm:$0xff]
        %v702 = vld [vmem:[%s551 + $0x10a] sm:$0xff]
        %v703 = vld [vmem:[%s551 + $0x112] sm:$0xff]
        %v704 = vld [vmem:[%s551 + $0x122] sm:$0xff]
        %v705 = vld [vmem:[%s551 + $0x12a] sm:$0xff]
        %v706 = vld [vmem:[%s551 + $0x13a] sm:$0xff]
        %v707 = vld [vmem:[%s551 + $0x142] sm:$0xff]
        %v708 = vld [vmem:[%s551 + $0x152] sm:$0xff]
        %v709 = vld [vmem:[%s551 + $0x15a] sm:$0xff]
        %v710 = vld [vmem:[%s551 + $0x16a] sm:$0xff]
        %v711 = vld [vmem:[%s551 + $0x172] sm:$0xff]
        %v712 = vpack.c.bf16 %v681, %v680
        %v713 = vpack.c.bf16 %v683, %v682
        %v714 = vpack.c.bf16 %v685, %v684
        %v715 = vpack.c.bf16 %v687, %v686
        %v716 = vpack.c.bf16 %v689, %v688
        %v717 = vpack.c.bf16 %v691, %v690
        %v718 = vpack.c.bf16 %v693, %v692
        %v719 = vpack.c.bf16 %v695, %v694
        %v720 = vpack.c.bf16 %v697, %v696
        %v721 = vpack.c.bf16 %v699, %v698
        %v722 = vpack.c.bf16 %v701, %v700
        %v723 = vpack.c.bf16 %v703, %v702
        %v724 = vpack.c.bf16 %v705, %v704
        %v725 = vpack.c.bf16 %v707, %v706
        %v726 = vpack.c.bf16 %v709, %v708
        %v727 = vpack.c.bf16 %v711, %v710
        %728 = vst [vmem:[#allocation2 + $0x28] sm:$0xff] %v712
        %729 = vst [vmem:[#allocation2 + $0x70] sm:$0xff] %v713
        %730 = vst [vmem:[#allocation2 + $0xb8] sm:$0xff] %v714
        %731 = vst [vmem:[#allocation2 + $0x100] sm:$0xff] %v715
        %732 = vst [vmem:[#allocation2 + $0x148] sm:$0xff] %v716
        %733 = vst [vmem:[#allocation2 + $0x190] sm:$0xff] %v717
        %734 = vst [vmem:[#allocation2 + $0x1d8] sm:$0xff] %v718
        %735 = vst [vmem:[#allocation2 + $0x220] sm:$0xff] %v719
        %736 = vst [vmem:[#allocation2 + $0x268] sm:$0xff] %v720
        %737 = vst [vmem:[#allocation2 + $0x2b0] sm:$0xff] %v721
        %738 = vst [vmem:[#allocation2 + $0x2f8] sm:$0xff] %v722
        %739 = vst [vmem:[#allocation2 + $0x340] sm:$0xff] %v723
        %740 = vst [vmem:[#allocation2 + $0x388] sm:$0xff] %v724
        %741 = vst [vmem:[#allocation2 + $0x3d0] sm:$0xff] %v725
        %742 = vst [vmem:[#allocation2 + $0x418] sm:$0xff] %v726
        %743 = vst [vmem:[#allocation2 + $0x460] sm:$0xff] %v727
        %s744 = scalar_lea.vmem %s357, 48
        %v745 = vld [vmem:[%s744] sm:$0xff]
        %v746 = vld [vmem:[%s744 + $0x8] sm:$0xff]
        %v747 = vld [vmem:[%s744 + $0x18] sm:$0xff]
        %v748 = vld [vmem:[%s744 + $0x20] sm:$0xff]
        %v749 = vld [vmem:[%s744 + $0x30] sm:$0xff]
        %v750 = vld [vmem:[%s744 + $0x38] sm:$0xff]
        %v751 = vld [vmem:[%s744 + $0x48] sm:$0xff]
        %v752 = vld [vmem:[%s744 + $0x50] sm:$0xff]
        %v753 = vld [vmem:[%s744 + $0x60] sm:$0xff]
        %v754 = vld [vmem:[%s744 + $0x68] sm:$0xff]
        %v755 = vld [vmem:[%s744 + $0x78] sm:$0xff]
        %v756 = vld [vmem:[%s744 + $0x80] sm:$0xff]
        %v757 = vld [vmem:[%s744 + $0x90] sm:$0xff]
        %v758 = vld [vmem:[%s744 + $0x98] sm:$0xff]
        %v759 = vld [vmem:[%s744 + $0xa8] sm:$0xff]
        %v760 = vld [vmem:[%s744 + $0xb0] sm:$0xff]
        %v761 = vld [vmem:[%s744 + $0xc0] sm:$0xff]
        %v762 = vld [vmem:[%s744 + $0xc8] sm:$0xff]
        %v763 = vld [vmem:[%s744 + $0xd8] sm:$0xff]
        %v764 = vld [vmem:[%s744 + $0xe0] sm:$0xff]
        %v765 = vld [vmem:[%s744 + $0xf0] sm:$0xff]
        %v766 = vld [vmem:[%s744 + $0xf8] sm:$0xff]
        %v767 = vld [vmem:[%s744 + $0x108] sm:$0xff]
        %v768 = vld [vmem:[%s744 + $0x110] sm:$0xff]
        %v769 = vld [vmem:[%s744 + $0x120] sm:$0xff]
        %v770 = vld [vmem:[%s744 + $0x128] sm:$0xff]
        %v771 = vld [vmem:[%s744 + $0x138] sm:$0xff]
        %v772 = vld [vmem:[%s744 + $0x140] sm:$0xff]
        %v773 = vld [vmem:[%s744 + $0x150] sm:$0xff]
        %v774 = vld [vmem:[%s744 + $0x158] sm:$0xff]
        %v775 = vld [vmem:[%s744 + $0x168] sm:$0xff]
        %v776 = vld [vmem:[%s744 + $0x170] sm:$0xff]
        %v777 = vpack.c.bf16 %v746, %v745
        %v778 = vpack.c.bf16 %v748, %v747
        %v779 = vpack.c.bf16 %v750, %v749
        %v780 = vpack.c.bf16 %v752, %v751
        %v781 = vpack.c.bf16 %v754, %v753
        %v782 = vpack.c.bf16 %v756, %v755
        %v783 = vpack.c.bf16 %v758, %v757
        %v784 = vpack.c.bf16 %v760, %v759
        %v785 = vpack.c.bf16 %v762, %v761
        %v786 = vpack.c.bf16 %v764, %v763
        %v787 = vpack.c.bf16 %v766, %v765
        %v788 = vpack.c.bf16 %v768, %v767
        %v789 = vpack.c.bf16 %v770, %v769
        %v790 = vpack.c.bf16 %v772, %v771
        %v791 = vpack.c.bf16 %v774, %v773
        %v792 = vpack.c.bf16 %v776, %v775
        %793 = vst [vmem:[#allocation2 + $0x30] sm:$0xff] %v777
        %794 = vst [vmem:[#allocation2 + $0x78] sm:$0xff] %v778
        %795 = vst [vmem:[#allocation2 + $0xc0] sm:$0xff] %v779
        %796 = vst [vmem:[#allocation2 + $0x108] sm:$0xff] %v780
        %797 = vst [vmem:[#allocation2 + $0x150] sm:$0xff] %v781
        %798 = vst [vmem:[#allocation2 + $0x198] sm:$0xff] %v782
        %799 = vst [vmem:[#allocation2 + $0x1e0] sm:$0xff] %v783
        %800 = vst [vmem:[#allocation2 + $0x228] sm:$0xff] %v784
        %801 = vst [vmem:[#allocation2 + $0x270] sm:$0xff] %v785
        %802 = vst [vmem:[#allocation2 + $0x2b8] sm:$0xff] %v786
        %803 = vst [vmem:[#allocation2 + $0x300] sm:$0xff] %v787
        %804 = vst [vmem:[#allocation2 + $0x348] sm:$0xff] %v788
        %805 = vst [vmem:[#allocation2 + $0x390] sm:$0xff] %v789
        %806 = vst [vmem:[#allocation2 + $0x3d8] sm:$0xff] %v790
        %807 = vst [vmem:[#allocation2 + $0x420] sm:$0xff] %v791
        %808 = vst [vmem:[#allocation2 + $0x468] sm:$0xff] %v792
        %v809 = vld [vmem:[%s744 + $0x1] sm:$0xff]
        %v810 = vld [vmem:[%s744 + $0x9] sm:$0xff]
        %v811 = vld [vmem:[%s744 + $0x19] sm:$0xff]
        %v812 = vld [vmem:[%s744 + $0x21] sm:$0xff]
        %v813 = vld [vmem:[%s744 + $0x31] sm:$0xff]
        %v814 = vld [vmem:[%s744 + $0x39] sm:$0xff]
        %v815 = vld [vmem:[%s744 + $0x49] sm:$0xff]
        %v816 = vld [vmem:[%s744 + $0x51] sm:$0xff]
        %v817 = vld [vmem:[%s744 + $0x61] sm:$0xff]
        %v818 = vld [vmem:[%s744 + $0x69] sm:$0xff]
        %v819 = vld [vmem:[%s744 + $0x79] sm:$0xff]
        %v820 = vld [vmem:[%s744 + $0x81] sm:$0xff]
        %v821 = vld [vmem:[%s744 + $0x91] sm:$0xff]
        %v822 = vld [vmem:[%s744 + $0x99] sm:$0xff]
        %v823 = vld [vmem:[%s744 + $0xa9] sm:$0xff]
        %v824 = vld [vmem:[%s744 + $0xb1] sm:$0xff]
        %v825 = vld [vmem:[%s744 + $0xc1] sm:$0xff]
        %v826 = vld [vmem:[%s744 + $0xc9] sm:$0xff]
        %v827 = vld [vmem:[%s744 + $0xd9] sm:$0xff]
        %v828 = vld [vmem:[%s744 + $0xe1] sm:$0xff]
        %v829 = vld [vmem:[%s744 + $0xf1] sm:$0xff]
        %v830 = vld [vmem:[%s744 + $0xf9] sm:$0xff]
        %v831 = vld [vmem:[%s744 + $0x109] sm:$0xff]
        %v832 = vld [vmem:[%s744 + $0x111] sm:$0xff]
        %v833 = vld [vmem:[%s744 + $0x121] sm:$0xff]
        %v834 = vld [vmem:[%s744 + $0x129] sm:$0xff]
        %v835 = vld [vmem:[%s744 + $0x139] sm:$0xff]
        %v836 = vld [vmem:[%s744 + $0x141] sm:$0xff]
        %v837 = vld [vmem:[%s744 + $0x151] sm:$0xff]
        %v838 = vld [vmem:[%s744 + $0x159] sm:$0xff]
        %v839 = vld [vmem:[%s744 + $0x169] sm:$0xff]
        %v840 = vld [vmem:[%s744 + $0x171] sm:$0xff]
        %v841 = vpack.c.bf16 %v810, %v809
        %v842 = vpack.c.bf16 %v812, %v811
        %v843 = vpack.c.bf16 %v814, %v813
        %v844 = vpack.c.bf16 %v816, %v815
        %v845 = vpack.c.bf16 %v818, %v817
        %v846 = vpack.c.bf16 %v820, %v819
        %v847 = vpack.c.bf16 %v822, %v821
        %v848 = vpack.c.bf16 %v824, %v823
        %v849 = vpack.c.bf16 %v826, %v825
        %v850 = vpack.c.bf16 %v828, %v827
        %v851 = vpack.c.bf16 %v830, %v829
        %v852 = vpack.c.bf16 %v832, %v831
        %v853 = vpack.c.bf16 %v834, %v833
        %v854 = vpack.c.bf16 %v836, %v835
        %v855 = vpack.c.bf16 %v838, %v837
        %v856 = vpack.c.bf16 %v840, %v839
        %857 = vst [vmem:[#allocation2 + $0x38] sm:$0xff] %v841
        %858 = vst [vmem:[#allocation2 + $0x80] sm:$0xff] %v842
        %859 = vst [vmem:[#allocation2 + $0xc8] sm:$0xff] %v843
        %860 = vst [vmem:[#allocation2 + $0x110] sm:$0xff] %v844
        %861 = vst [vmem:[#allocation2 + $0x158] sm:$0xff] %v845
        %862 = vst [vmem:[#allocation2 + $0x1a0] sm:$0xff] %v846
        %863 = vst [vmem:[#allocation2 + $0x1e8] sm:$0xff] %v847
        %864 = vst [vmem:[#allocation2 + $0x230] sm:$0xff] %v848
        %865 = vst [vmem:[#allocation2 + $0x278] sm:$0xff] %v849
        %866 = vst [vmem:[#allocation2 + $0x2c0] sm:$0xff] %v850
        %867 = vst [vmem:[#allocation2 + $0x308] sm:$0xff] %v851
        %868 = vst [vmem:[#allocation2 + $0x350] sm:$0xff] %v852
        %869 = vst [vmem:[#allocation2 + $0x398] sm:$0xff] %v853
        %870 = vst [vmem:[#allocation2 + $0x3e0] sm:$0xff] %v854
        %871 = vst [vmem:[#allocation2 + $0x428] sm:$0xff] %v855
        %872 = vst [vmem:[#allocation2 + $0x470] sm:$0xff] %v856
        %v873 = vld [vmem:[%s744 + $0x2] sm:$0xff]
        %v874 = vld [vmem:[%s744 + $0xa] sm:$0xff]
        %v875 = vld [vmem:[%s744 + $0x1a] sm:$0xff]
        %v876 = vld [vmem:[%s744 + $0x22] sm:$0xff]
        %v877 = vld [vmem:[%s744 + $0x32] sm:$0xff]
        %v878 = vld [vmem:[%s744 + $0x3a] sm:$0xff]
        %v879 = vld [vmem:[%s744 + $0x4a] sm:$0xff]
        %v880 = vld [vmem:[%s744 + $0x52] sm:$0xff]
        %v881 = vld [vmem:[%s744 + $0x62] sm:$0xff]
        %v882 = vld [vmem:[%s744 + $0x6a] sm:$0xff]
        %v883 = vld [vmem:[%s744 + $0x7a] sm:$0xff]
        %v884 = vld [vmem:[%s744 + $0x82] sm:$0xff]
        %v885 = vld [vmem:[%s744 + $0x92] sm:$0xff]
        %v886 = vld [vmem:[%s744 + $0x9a] sm:$0xff]
        %v887 = vld [vmem:[%s744 + $0xaa] sm:$0xff]
        %v888 = vld [vmem:[%s744 + $0xb2] sm:$0xff]
        %v889 = vld [vmem:[%s744 + $0xc2] sm:$0xff]
        %v890 = vld [vmem:[%s744 + $0xca] sm:$0xff]
        %v891 = vld [vmem:[%s744 + $0xda] sm:$0xff]
        %v892 = vld [vmem:[%s744 + $0xe2] sm:$0xff]
        %v893 = vld [vmem:[%s744 + $0xf2] sm:$0xff]
        %v894 = vld [vmem:[%s744 + $0xfa] sm:$0xff]
        %v895 = vld [vmem:[%s744 + $0x10a] sm:$0xff]
        %v896 = vld [vmem:[%s744 + $0x112] sm:$0xff]
        %v897 = vld [vmem:[%s744 + $0x122] sm:$0xff]
        %v898 = vld [vmem:[%s744 + $0x12a] sm:$0xff]
        %v899 = vld [vmem:[%s744 + $0x13a] sm:$0xff]
        %v900 = vld [vmem:[%s744 + $0x142] sm:$0xff]
        %v901 = vld [vmem:[%s744 + $0x152] sm:$0xff]
        %v902 = vld [vmem:[%s744 + $0x15a] sm:$0xff]
        %v903 = vld [vmem:[%s744 + $0x16a] sm:$0xff]
        %v904 = vld [vmem:[%s744 + $0x172] sm:$0xff]
        %v905 = vpack.c.bf16 %v874, %v873
        %v906 = vpack.c.bf16 %v876, %v875
        %v907 = vpack.c.bf16 %v878, %v877
        %v908 = vpack.c.bf16 %v880, %v879
        %v909 = vpack.c.bf16 %v882, %v881
        %v910 = vpack.c.bf16 %v884, %v883
        %v911 = vpack.c.bf16 %v886, %v885
        %v912 = vpack.c.bf16 %v888, %v887
        %v913 = vpack.c.bf16 %v890, %v889
        %v914 = vpack.c.bf16 %v892, %v891
        %v915 = vpack.c.bf16 %v894, %v893
        %v916 = vpack.c.bf16 %v896, %v895
        %v917 = vpack.c.bf16 %v898, %v897
        %v918 = vpack.c.bf16 %v900, %v899
        %v919 = vpack.c.bf16 %v902, %v901
        %v920 = vpack.c.bf16 %v904, %v903
        %921 = vst [vmem:[#allocation2 + $0x40] sm:$0xff] %v905
        %922 = vst [vmem:[#allocation2 + $0x88] sm:$0xff] %v906
        %923 = vst [vmem:[#allocation2 + $0xd0] sm:$0xff] %v907
        %924 = vst [vmem:[#allocation2 + $0x118] sm:$0xff] %v908
        %925 = vst [vmem:[#allocation2 + $0x160] sm:$0xff] %v909
        %926 = vst [vmem:[#allocation2 + $0x1a8] sm:$0xff] %v910
        %927 = vst [vmem:[#allocation2 + $0x1f0] sm:$0xff] %v911
        %928 = vst [vmem:[#allocation2 + $0x238] sm:$0xff] %v912
        %929 = vst [vmem:[#allocation2 + $0x280] sm:$0xff] %v913
        %930 = vst [vmem:[#allocation2 + $0x2c8] sm:$0xff] %v914
        %931 = vst [vmem:[#allocation2 + $0x310] sm:$0xff] %v915
        %932 = vst [vmem:[#allocation2 + $0x358] sm:$0xff] %v916
        %933 = vst [vmem:[#allocation2 + $0x3a0] sm:$0xff] %v917
        %934 = vst [vmem:[#allocation2 + $0x3e8] sm:$0xff] %v918
        %935 = vst [vmem:[#allocation2 + $0x430] sm:$0xff] %v919
        %936 = vst [vmem:[#allocation2 + $0x478] sm:$0xff] %v920
        %v937 = vld [vmem:[#allocation2 + $0x20] sm:$0xff]
        %v938 = vld [vmem:[#allocation2 + $0x68] sm:$0xff]
        %v939 = vld [vmem:[#allocation2 + $0xb0] sm:$0xff]
        %v940 = vld [vmem:[#allocation2 + $0xf8] sm:$0xff]
        %v941 = vld [vmem:[#allocation2 + $0x140] sm:$0xff]
        %v942 = vld [vmem:[#allocation2 + $0x188] sm:$0xff]
        %v943 = vld [vmem:[#allocation2 + $0x1d0] sm:$0xff]
        %v944 = vld [vmem:[#allocation2 + $0x218] sm:$0xff]
        %v945 = vld [vmem:[#allocation2 + $0x260] sm:$0xff]
        %v946 = vld [vmem:[#allocation2 + $0x2a8] sm:$0xff]
        %v947 = vld [vmem:[#allocation2 + $0x2f0] sm:$0xff]
        %v948 = vld [vmem:[#allocation2 + $0x338] sm:$0xff]
        %v949 = vld [vmem:[#allocation2 + $0x380] sm:$0xff]
        %v950 = vld [vmem:[#allocation2 + $0x3c8] sm:$0xff]
        %v951 = vld [vmem:[#allocation2 + $0x410] sm:$0xff]
        %v952 = vld [vmem:[#allocation2 + $0x458] sm:$0xff]
        %v953 = vld [vmem:[%s7] sm:$0xf]
        %v954 = vld [vmem:[%s7 + $0x4] sm:$0xf]
        %v955 = vld [vmem:[%s7 + $0x8] sm:$0xf]
        %v956 = vld [vmem:[%s7 + $0xc] sm:$0xf]
        %v957 = vld [vmem:[%s7 + $0x10] sm:$0xf]
        %v958 = vld [vmem:[%s7 + $0x14] sm:$0xf]
        %v959 = vld [vmem:[%s7 + $0x18] sm:$0xf]
        %v960 = vld [vmem:[%s7 + $0x1c] sm:$0xf]
        %v961 = vld [vmem:[%s7 + $0x20] sm:$0xf]
        %v962 = vld [vmem:[%s7 + $0x24] sm:$0xf]
        %v963 = vld [vmem:[%s7 + $0x28] sm:$0xf]
        %v964 = vld [vmem:[%s7 + $0x2c] sm:$0xf]
        %v965 = vld [vmem:[%s7 + $0x30] sm:$0xf]
        %v966 = vld [vmem:[%s7 + $0x34] sm:$0xf]
        %v967 = vld [vmem:[%s7 + $0x38] sm:$0xf]
        %v968 = vld [vmem:[%s7 + $0x3c] sm:$0xf]
        %v985 = vunpack.c.l.b16 %v953
        %v986 = vunpack.c.l.b16 %v954
        %v987 = vunpack.c.l.b16 %v955
        %v988 = vunpack.c.l.b16 %v956
        %v989 = vunpack.c.l.b16 %v957
        %v990 = vunpack.c.l.b16 %v958
        %v991 = vunpack.c.l.b16 %v959
        %v992 = vunpack.c.l.b16 %v960
        %v993 = vunpack.c.l.b16 %v961
        %v994 = vunpack.c.l.b16 %v962
        %v995 = vunpack.c.l.b16 %v963
        %v996 = vunpack.c.l.b16 %v964
        %v997 = vunpack.c.l.b16 %v965
        %v998 = vunpack.c.l.b16 %v966
        %v999 = vunpack.c.l.b16 %v967
        %v1000 = vunpack.c.l.b16 %v968
        %v1001 = vpack.c.b16 %v986, %v985
        %v1002 = vpack.c.b16 %v988, %v987
        %v1003 = vpack.c.b16 %v990, %v989
        %v1004 = vpack.c.b16 %v992, %v991
        %v1005 = vpack.c.b16 %v994, %v993
        %v1006 = vpack.c.b16 %v996, %v995
        %v1007 = vpack.c.b16 %v998, %v997
        %v1008 = vpack.c.b16 %v1000, %v999
        %1017 = vmatprep.subr.bf16.mxu0 0
        %1018 = vmatpush1.bf16.msra.mxu0 %v1001
        %1019 = vmatprep.subr.bf16.mxu0 0
        %1020 = vmatpush1.bf16.msra.mxu0 %v1002
        %1021 = vmatprep.subr.bf16.mxu0 0
        %1022 = vmatpush1.bf16.msra.mxu0 %v1003
        %1023 = vmatprep.subr.bf16.mxu0 0
        %1024 = vmatpush1.bf16.msra.mxu0 %v1004
        %1025 = vmatprep.subr.bf16.mxu0 0
        %1026 = vmatpush1.bf16.msra.mxu0 %v1005
        %1027 = vmatprep.subr.bf16.mxu0 0
        %1028 = vmatpush1.bf16.msra.mxu0 %v1006
        %1029 = vmatprep.subr.bf16.mxu0 0
        %1030 = vmatpush1.bf16.msra.mxu0 %v1007
        %1031 = vmatprep.subr.bf16.mxu0 0
        %1032 = vmatpush1.bf16.msra.mxu0 %v1008
        %1033 = vmatprep.subr.bf16.mxu0 0
        %1034 = vmatpush1.bf16.msra.mxu0 0
        %1035 = vmatprep.subr.bf16.mxu0 0
        %1036 = vmatpush1.bf16.msra.mxu0 0
        %1037 = vmatprep.subr.bf16.mxu0 0
        %1038 = vmatpush1.bf16.msra.mxu0 0
        %1039 = vmatprep.subr.bf16.mxu0 0
        %1040 = vmatpush1.bf16.msra.mxu0 0
        %1041 = vmatprep.subr.bf16.mxu0 0
        %1042 = vmatpush1.bf16.msra.mxu0 0
        %1043 = vmatprep.subr.bf16.mxu0 0
        %1044 = vmatpush1.bf16.msra.mxu0 0
        %1045 = vmatprep.subr.bf16.mxu0 0
        %1046 = vmatpush1.bf16.msra.mxu0 0
        %1047 = vmatprep.subr.bf16.mxu0 0
        %1048 = vmatpush1.bf16.msra.mxu0 0
        %1049 = vmatprep.mubr.bf16.mxu0 0
        %1050 = vmatmul.mubr.bf16.gmra.mrb[0].mxu0 %v937
        %v1051 = vpop.f32.mrb[0].mxu0
        %v1052 = vadd.f32 0.0, %v1051
        %v1053 = vpop.f32.mrb[0].mxu0
        %v1054 = vpop.f32.mrb[0].mxu0
        %v1055 = vadd.f32 0.0, %v1054
        %v1056 = vpop.f32.mrb[0].mxu0
        %1057 = vmatprep.mubr.bf16.mxu0 0
        %1058 = vmatmul.mubr.bf16.gmra.mrb[0].mxu0 %v938
        %v1059 = vpop.f32.mrb[0].mxu0
        %v1060 = vadd.f32 0.0, %v1059
        %v1061 = vpop.f32.mrb[0].mxu0
        %v1062 = vpop.f32.mrb[0].mxu0
        %v1063 = vadd.f32 0.0, %v1062
        %v1064 = vpop.f32.mrb[0].mxu0
        %1065 = vmatprep.mubr.bf16.mxu0 0
        %1066 = vmatmul.mubr.bf16.gmra.mrb[0].mxu0 %v939
        %v1067 = vpop.f32.mrb[0].mxu0
        %v1068 = vadd.f32 0.0, %v1067
        %v1069 = vpop.f32.mrb[0].mxu0
        %v1070 = vpop.f32.mrb[0].mxu0
        %v1071 = vadd.f32 0.0, %v1070
        %v1072 = vpop.f32.mrb[0].mxu0
        %1073 = vmatprep.mubr.bf16.mxu0 0
        %1074 = vmatmul.mubr.bf16.gmra.mrb[0].mxu0 %v940
        %v1075 = vpop.f32.mrb[0].mxu0
        %v1076 = vadd.f32 0.0, %v1075
        %v1077 = vpop.f32.mrb[0].mxu0
        %v1078 = vpop.f32.mrb[0].mxu0
        %v1079 = vadd.f32 0.0, %v1078
        %v1080 = vpop.f32.mrb[0].mxu0
        %1081 = vmatprep.mubr.bf16.mxu0 0
        %1082 = vmatmul.mubr.bf16.gmra.mrb[0].mxu0 %v941
        %v1083 = vpop.f32.mrb[0].mxu0
        %v1084 = vadd.f32 0.0, %v1083
        %v1085 = vpop.f32.mrb[0].mxu0
        %v1086 = vpop.f32.mrb[0].mxu0
        %v1087 = vadd.f32 0.0, %v1086
        %v1088 = vpop.f32.mrb[0].mxu0
        %1089 = vmatprep.mubr.bf16.mxu0 0
        %1090 = vmatmul.mubr.bf16.gmra.mrb[0].mxu0 %v942
        %v1091 = vpop.f32.mrb[0].mxu0
        %v1092 = vadd.f32 0.0, %v1091
        %v1093 = vpop.f32.mrb[0].mxu0
        %v1094 = vpop.f32.mrb[0].mxu0
        %v1095 = vadd.f32 0.0, %v1094
        %v1096 = vpop.f32.mrb[0].mxu0
        %1097 = vmatprep.mubr.bf16.mxu0 0
        %1098 = vmatmul.mubr.bf16.gmra.mrb[0].mxu0 %v943
        %v1099 = vpop.f32.mrb[0].mxu0
        %v1100 = vadd.f32 0.0, %v1099
        %v1101 = vpop.f32.mrb[0].mxu0
        %v1102 = vpop.f32.mrb[0].mxu0
        %v1103 = vadd.f32 0.0, %v1102
        %v1104 = vpop.f32.mrb[0].mxu0
        %1105 = vmatprep.mubr.bf16.mxu0 0
        %1106 = vmatmul.mubr.bf16.gmra.mrb[0].mxu0 %v944
        %v1107 = vpop.f32.mrb[0].mxu0
        %v1108 = vadd.f32 0.0, %v1107
        %v1109 = vpop.f32.mrb[0].mxu0
        %v1110 = vpop.f32.mrb[0].mxu0
        %v1111 = vadd.f32 0.0, %v1110
        %v1112 = vpop.f32.mrb[0].mxu0
        %1113 = vmatprep.mubr.bf16.mxu0 0
        %1114 = vmatmul.mubr.bf16.gmra.mrb[0].mxu0 %v945
        %v1115 = vpop.f32.mrb[0].mxu0
        %v1116 = vadd.f32 0.0, %v1115
        %v1117 = vpop.f32.mrb[0].mxu0
        %v1118 = vpop.f32.mrb[0].mxu0
        %v1119 = vadd.f32 0.0, %v1118
        %v1120 = vpop.f32.mrb[0].mxu0
        %1121 = vmatprep.mubr.bf16.mxu0 0
        %1122 = vmatmul.mubr.bf16.gmra.mrb[0].mxu0 %v946
        %v1123 = vpop.f32.mrb[0].mxu0
        %v1124 = vadd.f32 0.0, %v1123
        %v1125 = vpop.f32.mrb[0].mxu0
        %v1126 = vpop.f32.mrb[0].mxu0
        %v1127 = vadd.f32 0.0, %v1126
        %v1128 = vpop.f32.mrb[0].mxu0
        %1129 = vmatprep.mubr.bf16.mxu0 0
        %1130 = vmatmul.mubr.bf16.gmra.mrb[0].mxu0 %v947
        %v1131 = vpop.f32.mrb[0].mxu0
        %v1132 = vadd.f32 0.0, %v1131
        %v1133 = vpop.f32.mrb[0].mxu0
        %v1134 = vpop.f32.mrb[0].mxu0
        %v1135 = vadd.f32 0.0, %v1134
        %v1136 = vpop.f32.mrb[0].mxu0
        %1137 = vmatprep.mubr.bf16.mxu0 0
        %1138 = vmatmul.mubr.bf16.gmra.mrb[0].mxu0 %v948
        %v1139 = vpop.f32.mrb[0].mxu0
        %v1140 = vadd.f32 0.0, %v1139
        %v1141 = vpop.f32.mrb[0].mxu0
        %v1142 = vpop.f32.mrb[0].mxu0
        %v1143 = vadd.f32 0.0, %v1142
        %v1144 = vpop.f32.mrb[0].mxu0
        %1145 = vmatprep.mubr.bf16.mxu0 0
        %1146 = vmatmul.mubr.bf16.gmra.mrb[0].mxu0 %v949
        %v1147 = vpop.f32.mrb[0].mxu0
        %v1148 = vadd.f32 0.0, %v1147
        %v1149 = vpop.f32.mrb[0].mxu0
        %v1150 = vpop.f32.mrb[0].mxu0
        %v1151 = vadd.f32 0.0, %v1150
        %v1152 = vpop.f32.mrb[0].mxu0
        %1153 = vmatprep.mubr.bf16.mxu0 0
        %1154 = vmatmul.mubr.bf16.gmra.mrb[0].mxu0 %v950
        %v1155 = vpop.f32.mrb[0].mxu0
        %v1156 = vadd.f32 0.0, %v1155
        %v1157 = vpop.f32.mrb[0].mxu0
        %v1158 = vpop.f32.mrb[0].mxu0
        %v1159 = vadd.f32 0.0, %v1158
        %v1160 = vpop.f32.mrb[0].mxu0
        %1161 = vmatprep.mubr.bf16.mxu0 0
        %1162 = vmatmul.mubr.bf16.gmra.mrb[0].mxu0 %v951
        %v1163 = vpop.f32.mrb[0].mxu0
        %v1164 = vadd.f32 0.0, %v1163
        %v1165 = vpop.f32.mrb[0].mxu0
        %v1166 = vpop.f32.mrb[0].mxu0
        %v1167 = vadd.f32 0.0, %v1166
        %v1168 = vpop.f32.mrb[0].mxu0
        %1169 = vmatprep.mubr.bf16.mxu0 0
        %1170 = vmatmul.mubr.bf16.gmra.mrb[0].mxu0 %v952
        %v1171 = vpop.f32.mrb[0].mxu0
        %v1172 = vadd.f32 0.0, %v1171
        %v1173 = vpop.f32.mrb[0].mxu0
        %v1174 = vpop.f32.mrb[0].mxu0
        %v1175 = vadd.f32 0.0, %v1174
        %v1176 = vpop.f32.mrb[0].mxu0
        %1177 = vdwg.mxu0
        %v1178 = vld [vmem:[%s8] sm:$0x1]
        %v1180 = vlaneseq
        %v1181 = vshrl.u32 %v1180, 7
        %v1182 = vsub.s32 0, %v1181
        %v1183 = vrot.slane %v1178, %v1182
        %v1185 = vmul.f32 %v1052, %v1183
        %v1186 = vmul.f32 %v1055, %v1183
        %v1187 = vmul.f32 %v1060, %v1183
        %v1188 = vmul.f32 %v1063, %v1183
        %v1189 = vmul.f32 %v1068, %v1183
        %v1190 = vmul.f32 %v1071, %v1183
        %v1191 = vmul.f32 %v1076, %v1183
        %v1192 = vmul.f32 %v1079, %v1183
        %v1193 = vmul.f32 %v1084, %v1183
        %v1194 = vmul.f32 %v1087, %v1183
        %v1195 = vmul.f32 %v1092, %v1183
        %v1196 = vmul.f32 %v1095, %v1183
        %v1197 = vmul.f32 %v1100, %v1183
        %v1198 = vmul.f32 %v1103, %v1183
        %v1199 = vmul.f32 %v1108, %v1183
        %v1200 = vmul.f32 %v1111, %v1183
        %v1201 = vmul.f32 %v1116, %v1183
        %v1202 = vmul.f32 %v1119, %v1183
        %v1203 = vmul.f32 %v1124, %v1183
        %v1204 = vmul.f32 %v1127, %v1183
        %v1205 = vmul.f32 %v1132, %v1183
        %v1206 = vmul.f32 %v1135, %v1183
        %v1207 = vmul.f32 %v1140, %v1183
        %v1208 = vmul.f32 %v1143, %v1183
        %v1209 = vmul.f32 %v1148, %v1183
        %v1210 = vmul.f32 %v1151, %v1183
        %v1211 = vmul.f32 %v1156, %v1183
        %v1212 = vmul.f32 %v1159, %v1183
        %v1213 = vmul.f32 %v1164, %v1183
        %v1214 = vmul.f32 %v1167, %v1183
        %v1215 = vmul.f32 %v1172, %v1183
        %v1216 = vmul.f32 %v1175, %v1183
        %v1217 = vld [vmem:[%s9] sm:$0x1]
        %v1219 = vlaneseq
        %v1220 = vshrl.u32 %v1219, 7
        %v1221 = vsub.s32 0, %v1220
        %v1222 = vrot.slane %v1217, %v1221
        %v1224 = vadd.f32 %v1185, %v1222
        %v1225 = vadd.f32 %v1186, %v1222
        %v1226 = vadd.f32 %v1187, %v1222
        %v1227 = vadd.f32 %v1188, %v1222
        %v1228 = vadd.f32 %v1189, %v1222
        %v1229 = vadd.f32 %v1190, %v1222
        %v1230 = vadd.f32 %v1191, %v1222
        %v1231 = vadd.f32 %v1192, %v1222
        %v1232 = vadd.f32 %v1193, %v1222
        %v1233 = vadd.f32 %v1194, %v1222
        %v1234 = vadd.f32 %v1195, %v1222
        %v1235 = vadd.f32 %v1196, %v1222
        %v1236 = vadd.f32 %v1197, %v1222
        %v1237 = vadd.f32 %v1198, %v1222
        %v1238 = vadd.f32 %v1199, %v1222
        %v1239 = vadd.f32 %v1200, %v1222
        %v1240 = vadd.f32 %v1201, %v1222
        %v1241 = vadd.f32 %v1202, %v1222
        %v1242 = vadd.f32 %v1203, %v1222
        %v1243 = vadd.f32 %v1204, %v1222
        %v1244 = vadd.f32 %v1205, %v1222
        %v1245 = vadd.f32 %v1206, %v1222
        %v1246 = vadd.f32 %v1207, %v1222
        %v1247 = vadd.f32 %v1208, %v1222
        %v1248 = vadd.f32 %v1209, %v1222
        %v1249 = vadd.f32 %v1210, %v1222
        %v1250 = vadd.f32 %v1211, %v1222
        %v1251 = vadd.f32 %v1212, %v1222
        %v1252 = vadd.f32 %v1213, %v1222
        %v1253 = vadd.f32 %v1214, %v1222
        %v1254 = vadd.f32 %v1215, %v1222
        %v1255 = vadd.f32 %v1216, %v1222
        %1256 = vst [vmem:[#allocation4] sm:$0xff] %v1224
        %1257 = vst [vmem:[#allocation4 + $0x8] sm:$0xff] %v1225
        %1258 = vst [vmem:[#allocation4 + $0x10] sm:$0xff] %v1226
        %1259 = vst [vmem:[#allocation4 + $0x18] sm:$0xff] %v1227
        %1260 = vst [vmem:[#allocation4 + $0x20] sm:$0xff] %v1228
        %1261 = vst [vmem:[#allocation4 + $0x28] sm:$0xff] %v1229
        %1262 = vst [vmem:[#allocation4 + $0x30] sm:$0xff] %v1230
        %1263 = vst [vmem:[#allocation4 + $0x38] sm:$0xff] %v1231
        %1264 = vst [vmem:[#allocation4 + $0x40] sm:$0xff] %v1232
        %1265 = vst [vmem:[#allocation4 + $0x48] sm:$0xff] %v1233
        %1266 = vst [vmem:[#allocation4 + $0x50] sm:$0xff] %v1234
        %1267 = vst [vmem:[#allocation4 + $0x58] sm:$0xff] %v1235
        %1268 = vst [vmem:[#allocation4 + $0x60] sm:$0xff] %v1236
        %1269 = vst [vmem:[#allocation4 + $0x68] sm:$0xff] %v1237
        %1270 = vst [vmem:[#allocation4 + $0x70] sm:$0xff] %v1238
        %1271 = vst [vmem:[#allocation4 + $0x78] sm:$0xff] %v1239
        %1272 = vst [vmem:[#allocation4 + $0x80] sm:$0xff] %v1240
        %1273 = vst [vmem:[#allocation4 + $0x88] sm:$0xff] %v1241
        %1274 = vst [vmem:[#allocation4 + $0x90] sm:$0xff] %v1242
        %1275 = vst [vmem:[#allocation4 + $0x98] sm:$0xff] %v1243
        %1276 = vst [vmem:[#allocation4 + $0xa0] sm:$0xff] %v1244
        %1277 = vst [vmem:[#allocation4 + $0xa8] sm:$0xff] %v1245
        %1278 = vst [vmem:[#allocation4 + $0xb0] sm:$0xff] %v1246
        %1279 = vst [vmem:[#allocation4 + $0xb8] sm:$0xff] %v1247
        %1280 = vst [vmem:[#allocation4 + $0xc0] sm:$0xff] %v1248
        %1281 = vst [vmem:[#allocation4 + $0xc8] sm:$0xff] %v1249
        %1282 = vst [vmem:[#allocation4 + $0xd0] sm:$0xff] %v1250
        %1283 = vst [vmem:[#allocation4 + $0xd8] sm:$0xff] %v1251
        %1284 = vst [vmem:[#allocation4 + $0xe0] sm:$0xff] %v1252
        %1285 = vst [vmem:[#allocation4 + $0xe8] sm:$0xff] %v1253
        %1286 = vst [vmem:[#allocation4 + $0xf0] sm:$0xff] %v1254
        %1287 = vst [vmem:[#allocation4 + $0xf8] sm:$0xff] %v1255
        %v1288 = vld [vmem:[#allocation2] sm:$0xff]
        %v1289 = vld [vmem:[#allocation2 + $0x8] sm:$0xff]
        %v1290 = vld [vmem:[#allocation2 + $0x10] sm:$0xff]
        %v1291 = vld [vmem:[#allocation2 + $0x18] sm:$0xff]
        %v1292 = vld [vmem:[#allocation2 + $0x20] sm:$0xff]
        %v1293 = vld [vmem:[#allocation2 + $0x28] sm:$0xff]
        %v1294 = vld [vmem:[#allocation2 + $0x30] sm:$0xff]
        %v1295 = vld [vmem:[#allocation2 + $0x38] sm:$0xff]
        %v1296 = vld [vmem:[#allocation2 + $0x40] sm:$0xff]
        %v1297 = vld [vmem:[#allocation2 + $0x48] sm:$0xff]
        %v1298 = vld [vmem:[#allocation2 + $0x50] sm:$0xff]
        %v1299 = vld [vmem:[#allocation2 + $0x58] sm:$0xff]
        %v1300 = vld [vmem:[#allocation2 + $0x60] sm:$0xff]
        %v1301 = vld [vmem:[#allocation2 + $0x68] sm:$0xff]
        %v1302 = vld [vmem:[#allocation2 + $0x70] sm:$0xff]
        %v1303 = vld [vmem:[#allocation2 + $0x78] sm:$0xff]
        %v1304 = vld [vmem:[#allocation2 + $0x80] sm:$0xff]
        %v1305 = vld [vmem:[#allocation2 + $0x88] sm:$0xff]
        %v1306 = vld [vmem:[#allocation2 + $0x90] sm:$0xff]
        %v1307 = vld [vmem:[#allocation2 + $0x98] sm:$0xff]
        %v1308 = vld [vmem:[#allocation2 + $0xa0] sm:$0xff]
        %v1309 = vld [vmem:[#allocation2 + $0xa8] sm:$0xff]
        %v1310 = vld [vmem:[#allocation2 + $0xb0] sm:$0xff]
        %v1311 = vld [vmem:[#allocation2 + $0xb8] sm:$0xff]
        %v1312 = vld [vmem:[#allocation2 + $0xc0] sm:$0xff]
        %v1313 = vld [vmem:[#allocation2 + $0xc8] sm:$0xff]
        %v1314 = vld [vmem:[#allocation2 + $0xd0] sm:$0xff]
        %v1315 = vld [vmem:[#allocation2 + $0xd8] sm:$0xff]
        %v1316 = vld [vmem:[#allocation2 + $0xe0] sm:$0xff]
        %v1317 = vld [vmem:[#allocation2 + $0xe8] sm:$0xff]
        %v1318 = vld [vmem:[#allocation2 + $0xf0] sm:$0xff]
        %v1319 = vld [vmem:[#allocation2 + $0xf8] sm:$0xff]
        %v1320 = vld [vmem:[#allocation2 + $0x100] sm:$0xff]
        %v1321 = vld [vmem:[#allocation2 + $0x108] sm:$0xff]
        %v1322 = vld [vmem:[#allocation2 + $0x110] sm:$0xff]
        %v1323 = vld [vmem:[#allocation2 + $0x118] sm:$0xff]
        %v1324 = vld [vmem:[#allocation2 + $0x120] sm:$0xff]
        %v1325 = vld [vmem:[#allocation2 + $0x128] sm:$0xff]
        %v1326 = vld [vmem:[#allocation2 + $0x130] sm:$0xff]
        %v1327 = vld [vmem:[#allocation2 + $0x138] sm:$0xff]
        %v1328 = vld [vmem:[#allocation2 + $0x140] sm:$0xff]
        %v1329 = vld [vmem:[#allocation2 + $0x148] sm:$0xff]
        %v1330 = vld [vmem:[#allocation2 + $0x150] sm:$0xff]
        %v1331 = vld [vmem:[#allocation2 + $0x158] sm:$0xff]
        %v1332 = vld [vmem:[#allocation2 + $0x160] sm:$0xff]
        %v1333 = vld [vmem:[#allocation2 + $0x168] sm:$0xff]
        %v1334 = vld [vmem:[#allocation2 + $0x170] sm:$0xff]
        %v1335 = vld [vmem:[#allocation2 + $0x178] sm:$0xff]
        %v1336 = vld [vmem:[#allocation2 + $0x180] sm:$0xff]
        %v1337 = vld [vmem:[#allocation2 + $0x188] sm:$0xff]
        %v1338 = vld [vmem:[#allocation2 + $0x190] sm:$0xff]
        %v1339 = vld [vmem:[#allocation2 + $0x198] sm:$0xff]
        %v1340 = vld [vmem:[#allocation2 + $0x1a0] sm:$0xff]
        %v1341 = vld [vmem:[#allocation2 + $0x1a8] sm:$0xff]
        %v1342 = vld [vmem:[#allocation2 + $0x1b0] sm:$0xff]
        %v1343 = vld [vmem:[#allocation2 + $0x1b8] sm:$0xff]
        %v1344 = vld [vmem:[#allocation2 + $0x1c0] sm:$0xff]
        %v1345 = vld [vmem:[#allocation2 + $0x1c8] sm:$0xff]
        %v1346 = vld [vmem:[#allocation2 + $0x1d0] sm:$0xff]
        %v1347 = vld [vmem:[#allocation2 + $0x1d8] sm:$0xff]
        %v1348 = vld [vmem:[#allocation2 + $0x1e0] sm:$0xff]
        %v1349 = vld [vmem:[#allocation2 + $0x1e8] sm:$0xff]
        %v1350 = vld [vmem:[#allocation2 + $0x1f0] sm:$0xff]
        %v1351 = vld [vmem:[#allocation2 + $0x1f8] sm:$0xff]
        %v1352 = vld [vmem:[#allocation2 + $0x200] sm:$0xff]
        %v1353 = vld [vmem:[#allocation2 + $0x208] sm:$0xff]
        %v1354 = vld [vmem:[#allocation2 + $0x210] sm:$0xff]
        %v1355 = vld [vmem:[#allocation2 + $0x218] sm:$0xff]
        %v1356 = vld [vmem:[#allocation2 + $0x220] sm:$0xff]
        %v1357 = vld [vmem:[#allocation2 + $0x228] sm:$0xff]
        %v1358 = vld [vmem:[#allocation2 + $0x230] sm:$0xff]
        %v1359 = vld [vmem:[#allocation2 + $0x238] sm:$0xff]
        %v1360 = vld [vmem:[#allocation2 + $0x240] sm:$0xff]
        %v1361 = vld [vmem:[#allocation2 + $0x248] sm:$0xff]
        %v1362 = vld [vmem:[#allocation2 + $0x250] sm:$0xff]
        %v1363 = vld [vmem:[#allocation2 + $0x258] sm:$0xff]
        %v1364 = vld [vmem:[#allocation2 + $0x260] sm:$0xff]
        %v1365 = vld [vmem:[#allocation2 + $0x268] sm:$0xff]
        %v1366 = vld [vmem:[#allocation2 + $0x270] sm:$0xff]
        %v1367 = vld [vmem:[#allocation2 + $0x278] sm:$0xff]
        %v1368 = vld [vmem:[#allocation2 + $0x280] sm:$0xff]
        %v1369 = vld [vmem:[#allocation2 + $0x288] sm:$0xff]
        %v1370 = vld [vmem:[#allocation2 + $0x290] sm:$0xff]
        %v1371 = vld [vmem:[#allocation2 + $0x298] sm:$0xff]
        %v1372 = vld [vmem:[#allocation2 + $0x2a0] sm:$0xff]
        %v1373 = vld [vmem:[#allocation2 + $0x2a8] sm:$0xff]
        %v1374 = vld [vmem:[#allocation2 + $0x2b0] sm:$0xff]
        %v1375 = vld [vmem:[#allocation2 + $0x2b8] sm:$0xff]
        %v1376 = vld [vmem:[#allocation2 + $0x2c0] sm:$0xff]
        %v1377 = vld [vmem:[#allocation2 + $0x2c8] sm:$0xff]
        %v1378 = vld [vmem:[#allocation2 + $0x2d0] sm:$0xff]
        %v1379 = vld [vmem:[#allocation2 + $0x2d8] sm:$0xff]
        %v1380 = vld [vmem:[#allocation2 + $0x2e0] sm:$0xff]
        %v1381 = vld [vmem:[#allocation2 + $0x2e8] sm:$0xff]
        %v1382 = vld [vmem:[#allocation2 + $0x2f0] sm:$0xff]
        %v1383 = vld [vmem:[#allocation2 + $0x2f8] sm:$0xff]
        %v1384 = vld [vmem:[#allocation2 + $0x300] sm:$0xff]
        %v1385 = vld [vmem:[#allocation2 + $0x308] sm:$0xff]
        %v1386 = vld [vmem:[#allocation2 + $0x310] sm:$0xff]
        %v1387 = vld [vmem:[#allocation2 + $0x318] sm:$0xff]
        %v1388 = vld [vmem:[#allocation2 + $0x320] sm:$0xff]
        %v1389 = vld [vmem:[#allocation2 + $0x328] sm:$0xff]
        %v1390 = vld [vmem:[#allocation2 + $0x330] sm:$0xff]
        %v1391 = vld [vmem:[#allocation2 + $0x338] sm:$0xff]
        %v1392 = vld [vmem:[#allocation2 + $0x340] sm:$0xff]
        %v1393 = vld [vmem:[#allocation2 + $0x348] sm:$0xff]
        %v1394 = vld [vmem:[#allocation2 + $0x350] sm:$0xff]
        %v1395 = vld [vmem:[#allocation2 + $0x358] sm:$0xff]
        %v1396 = vld [vmem:[#allocation2 + $0x360] sm:$0xff]
        %v1397 = vld [vmem:[#allocation2 + $0x368] sm:$0xff]
        %v1398 = vld [vmem:[#allocation2 + $0x370] sm:$0xff]
        %v1399 = vld [vmem:[#allocation2 + $0x378] sm:$0xff]
        %v1400 = vld [vmem:[#allocation2 + $0x380] sm:$0xff]
        %v1401 = vld [vmem:[#allocation2 + $0x388] sm:$0xff]
        %v1402 = vld [vmem:[#allocation2 + $0x390] sm:$0xff]
        %v1403 = vld [vmem:[#allocation2 + $0x398] sm:$0xff]
        %v1404 = vld [vmem:[#allocation2 + $0x3a0] sm:$0xff]
        %v1405 = vld [vmem:[#allocation2 + $0x3a8] sm:$0xff]
        %v1406 = vld [vmem:[#allocation2 + $0x3b0] sm:$0xff]
        %v1407 = vld [vmem:[#allocation2 + $0x3b8] sm:$0xff]
        %v1408 = vld [vmem:[#allocation2 + $0x3c0] sm:$0xff]
        %v1409 = vld [vmem:[#allocation2 + $0x3c8] sm:$0xff]
        %v1410 = vld [vmem:[#allocation2 + $0x3d0] sm:$0xff]
        %v1411 = vld [vmem:[#allocation2 + $0x3d8] sm:$0xff]
        %v1412 = vld [vmem:[#allocation2 + $0x3e0] sm:$0xff]
        %v1413 = vld [vmem:[#allocation2 + $0x3e8] sm:$0xff]
        %v1414 = vld [vmem:[#allocation2 + $0x3f0] sm:$0xff]
        %v1415 = vld [vmem:[#allocation2 + $0x3f8] sm:$0xff]
        %v1416 = vld [vmem:[#allocation2 + $0x400] sm:$0xff]
        %v1417 = vld [vmem:[#allocation2 + $0x408] sm:$0xff]
        %v1418 = vld [vmem:[#allocation2 + $0x410] sm:$0xff]
        %v1419 = vld [vmem:[#allocation2 + $0x418] sm:$0xff]
        %v1420 = vld [vmem:[#allocation2 + $0x420] sm:$0xff]
        %v1421 = vld [vmem:[#allocation2 + $0x428] sm:$0xff]
        %v1422 = vld [vmem:[#allocation2 + $0x430] sm:$0xff]
        %v1423 = vld [vmem:[#allocation2 + $0x438] sm:$0xff]
        %v1424 = vld [vmem:[#allocation2 + $0x440] sm:$0xff]
        %v1425 = vld [vmem:[#allocation2 + $0x448] sm:$0xff]
        %v1426 = vld [vmem:[#allocation2 + $0x450] sm:$0xff]
        %v1427 = vld [vmem:[#allocation2 + $0x458] sm:$0xff]
        %v1428 = vld [vmem:[#allocation2 + $0x460] sm:$0xff]
        %v1429 = vld [vmem:[#allocation2 + $0x468] sm:$0xff]
        %v1430 = vld [vmem:[#allocation2 + $0x470] sm:$0xff]
        %v1431 = vld [vmem:[#allocation2 + $0x478] sm:$0xff]
        %v1432 = vld [vmem:[%s1] sm:$0xf]
        %v1433 = vld [vmem:[%s1 + $0x4] sm:$0xf]
        %v1434 = vld [vmem:[%s1 + $0x8] sm:$0xf]
        %v1435 = vld [vmem:[%s1 + $0xc] sm:$0xf]
        %v1436 = vld [vmem:[%s1 + $0x10] sm:$0xf]
        %v1437 = vld [vmem:[%s1 + $0x14] sm:$0xf]
        %v1438 = vld [vmem:[%s1 + $0x18] sm:$0xf]
        %v1439 = vld [vmem:[%s1 + $0x1c] sm:$0xf]
        %v1440 = vld [vmem:[%s1 + $0x20] sm:$0xf]
        %v1441 = vld [vmem:[%s1 + $0x24] sm:$0xf]
        %v1442 = vld [vmem:[%s1 + $0x28] sm:$0xf]
        %v1443 = vld [vmem:[%s1 + $0x2c] sm:$0xf]
        %v1444 = vld [vmem:[%s1 + $0x30] sm:$0xf]
        %v1445 = vld [vmem:[%s1 + $0x34] sm:$0xf]
        %v1446 = vld [vmem:[%s1 + $0x38] sm:$0xf]
        %v1447 = vld [vmem:[%s1 + $0x3c] sm:$0xf]
        %v1448 = vld [vmem:[%s1 + $0x40] sm:$0xf]
        %v1449 = vld [vmem:[%s1 + $0x44] sm:$0xf]
        %v1450 = vld [vmem:[%s1 + $0x48] sm:$0xf]
        %v1451 = vld [vmem:[%s1 + $0x4c] sm:$0xf]
        %v1452 = vld [vmem:[%s1 + $0x50] sm:$0xf]
        %v1453 = vld [vmem:[%s1 + $0x54] sm:$0xf]
        %v1454 = vld [vmem:[%s1 + $0x58] sm:$0xf]
        %v1455 = vld [vmem:[%s1 + $0x5c] sm:$0xf]
        %v1456 = vld [vmem:[%s1 + $0x60] sm:$0xf]
        %v1457 = vld [vmem:[%s1 + $0x64] sm:$0xf]
        %v1458 = vld [vmem:[%s1 + $0x68] sm:$0xf]
        %v1459 = vld [vmem:[%s1 + $0x6c] sm:$0xf]
        %v1460 = vld [vmem:[%s1 + $0x70] sm:$0xf]
        %v1461 = vld [vmem:[%s1 + $0x74] sm:$0xf]
        %v1462 = vld [vmem:[%s1 + $0x78] sm:$0xf]
        %v1463 = vld [vmem:[%s1 + $0x7c] sm:$0xf]
        %v1464 = vld [vmem:[%s1 + $0x80] sm:$0xf]
        %v1465 = vld [vmem:[%s1 + $0x84] sm:$0xf]
        %v1466 = vld [vmem:[%s1 + $0x88] sm:$0xf]
        %v1467 = vld [vmem:[%s1 + $0x8c] sm:$0xf]
        %v1468 = vld [vmem:[%s1 + $0x90] sm:$0xf]
        %v1469 = vld [vmem:[%s1 + $0x94] sm:$0xf]
        %v1470 = vld [vmem:[%s1 + $0x98] sm:$0xf]
        %v1471 = vld [vmem:[%s1 + $0x9c] sm:$0xf]
        %v1472 = vld [vmem:[%s1 + $0xa0] sm:$0xf]
        %v1473 = vld [vmem:[%s1 + $0xa4] sm:$0xf]
        %v1474 = vld [vmem:[%s1 + $0xa8] sm:$0xf]
        %v1475 = vld [vmem:[%s1 + $0xac] sm:$0xf]
        %v1476 = vld [vmem:[%s1 + $0xb0] sm:$0xf]
        %v1477 = vld [vmem:[%s1 + $0xb4] sm:$0xf]
        %v1478 = vld [vmem:[%s1 + $0xb8] sm:$0xf]
        %v1479 = vld [vmem:[%s1 + $0xbc] sm:$0xf]
        %v1480 = vld [vmem:[%s1 + $0xc0] sm:$0xf]
        %v1481 = vld [vmem:[%s1 + $0xc4] sm:$0xf]
        %v1482 = vld [vmem:[%s1 + $0xc8] sm:$0xf]
        %v1483 = vld [vmem:[%s1 + $0xcc] sm:$0xf]
        %v1484 = vld [vmem:[%s1 + $0xd0] sm:$0xf]
        %v1485 = vld [vmem:[%s1 + $0xd4] sm:$0xf]
        %v1486 = vld [vmem:[%s1 + $0xd8] sm:$0xf]
        %v1487 = vld [vmem:[%s1 + $0xdc] sm:$0xf]
        %v1488 = vld [vmem:[%s1 + $0xe0] sm:$0xf]
        %v1489 = vld [vmem:[%s1 + $0xe4] sm:$0xf]
        %v1490 = vld [vmem:[%s1 + $0xe8] sm:$0xf]
        %v1491 = vld [vmem:[%s1 + $0xec] sm:$0xf]
        %v1492 = vld [vmem:[%s1 + $0xf0] sm:$0xf]
        %v1493 = vld [vmem:[%s1 + $0xf4] sm:$0xf]
        %v1494 = vld [vmem:[%s1 + $0xf8] sm:$0xf]
        %v1495 = vld [vmem:[%s1 + $0xfc] sm:$0xf]
        %v1496 = vld [vmem:[%s1 + $0x100] sm:$0xf]
        %v1497 = vld [vmem:[%s1 + $0x104] sm:$0xf]
        %v1498 = vld [vmem:[%s1 + $0x108] sm:$0xf]
        %v1499 = vld [vmem:[%s1 + $0x10c] sm:$0xf]
        %v1500 = vld [vmem:[%s1 + $0x110] sm:$0xf]
        %v1501 = vld [vmem:[%s1 + $0x114] sm:$0xf]
        %v1502 = vld [vmem:[%s1 + $0x118] sm:$0xf]
        %v1503 = vld [vmem:[%s1 + $0x11c] sm:$0xf]
        %v1504 = vld [vmem:[%s1 + $0x120] sm:$0xf]
        %v1505 = vld [vmem:[%s1 + $0x124] sm:$0xf]
        %v1506 = vld [vmem:[%s1 + $0x128] sm:$0xf]
        %v1507 = vld [vmem:[%s1 + $0x12c] sm:$0xf]
        %v1508 = vld [vmem:[%s1 + $0x130] sm:$0xf]
        %v1509 = vld [vmem:[%s1 + $0x134] sm:$0xf]
        %v1510 = vld [vmem:[%s1 + $0x138] sm:$0xf]
        %v1511 = vld [vmem:[%s1 + $0x13c] sm:$0xf]
        %v1512 = vld [vmem:[%s1 + $0x140] sm:$0xf]
        %v1513 = vld [vmem:[%s1 + $0x144] sm:$0xf]
        %v1514 = vld [vmem:[%s1 + $0x148] sm:$0xf]
        %v1515 = vld [vmem:[%s1 + $0x14c] sm:$0xf]
        %v1516 = vld [vmem:[%s1 + $0x150] sm:$0xf]
        %v1517 = vld [vmem:[%s1 + $0x154] sm:$0xf]
        %v1518 = vld [vmem:[%s1 + $0x158] sm:$0xf]
        %v1519 = vld [vmem:[%s1 + $0x15c] sm:$0xf]
        %v1520 = vld [vmem:[%s1 + $0x160] sm:$0xf]
        %v1521 = vld [vmem:[%s1 + $0x164] sm:$0xf]
        %v1522 = vld [vmem:[%s1 + $0x168] sm:$0xf]
        %v1523 = vld [vmem:[%s1 + $0x16c] sm:$0xf]
        %v1524 = vld [vmem:[%s1 + $0x170] sm:$0xf]
        %v1525 = vld [vmem:[%s1 + $0x174] sm:$0xf]
        %v1526 = vld [vmem:[%s1 + $0x178] sm:$0xf]
        %v1527 = vld [vmem:[%s1 + $0x17c] sm:$0xf]
        %v1528 = vld [vmem:[%s1 + $0x180] sm:$0xf]
        %v1529 = vld [vmem:[%s1 + $0x184] sm:$0xf]
        %v1530 = vld [vmem:[%s1 + $0x188] sm:$0xf]
        %v1531 = vld [vmem:[%s1 + $0x18c] sm:$0xf]
        %v1532 = vld [vmem:[%s1 + $0x190] sm:$0xf]
        %v1533 = vld [vmem:[%s1 + $0x194] sm:$0xf]
        %v1534 = vld [vmem:[%s1 + $0x198] sm:$0xf]
        %v1535 = vld [vmem:[%s1 + $0x19c] sm:$0xf]
        %v1536 = vld [vmem:[%s1 + $0x1a0] sm:$0xf]
        %v1537 = vld [vmem:[%s1 + $0x1a4] sm:$0xf]
        %v1538 = vld [vmem:[%s1 + $0x1a8] sm:$0xf]
        %v1539 = vld [vmem:[%s1 + $0x1ac] sm:$0xf]
        %v1540 = vld [vmem:[%s1 + $0x1b0] sm:$0xf]
        %v1541 = vld [vmem:[%s1 + $0x1b4] sm:$0xf]
        %v1542 = vld [vmem:[%s1 + $0x1b8] sm:$0xf]
        %v1543 = vld [vmem:[%s1 + $0x1bc] sm:$0xf]
        %v1544 = vld [vmem:[%s1 + $0x1c0] sm:$0xf]
        %v1545 = vld [vmem:[%s1 + $0x1c4] sm:$0xf]
        %v1546 = vld [vmem:[%s1 + $0x1c8] sm:$0xf]
        %v1547 = vld [vmem:[%s1 + $0x1cc] sm:$0xf]
        %v1548 = vld [vmem:[%s1 + $0x1d0] sm:$0xf]
        %v1549 = vld [vmem:[%s1 + $0x1d4] sm:$0xf]
        %v1550 = vld [vmem:[%s1 + $0x1d8] sm:$0xf]
        %v1551 = vld [vmem:[%s1 + $0x1dc] sm:$0xf]
        %v1552 = vld [vmem:[%s1 + $0x1e0] sm:$0xf]
        %v1553 = vld [vmem:[%s1 + $0x1e4] sm:$0xf]
        %v1554 = vld [vmem:[%s1 + $0x1e8] sm:$0xf]
        %v1555 = vld [vmem:[%s1 + $0x1ec] sm:$0xf]
        %v1556 = vld [vmem:[%s1 + $0x1f0] sm:$0xf]
        %v1557 = vld [vmem:[%s1 + $0x1f4] sm:$0xf]
        %v1558 = vld [vmem:[%s1 + $0x1f8] sm:$0xf]
        %v1559 = vld [vmem:[%s1 + $0x1fc] sm:$0xf]
        %v1560 = vld [vmem:[%s1 + $0x200] sm:$0xf]
        %v1561 = vld [vmem:[%s1 + $0x204] sm:$0xf]
        %v1562 = vld [vmem:[%s1 + $0x208] sm:$0xf]
        %v1563 = vld [vmem:[%s1 + $0x20c] sm:$0xf]
        %v1564 = vld [vmem:[%s1 + $0x210] sm:$0xf]
        %v1565 = vld [vmem:[%s1 + $0x214] sm:$0xf]
        %v1566 = vld [vmem:[%s1 + $0x218] sm:$0xf]
        %v1567 = vld [vmem:[%s1 + $0x21c] sm:$0xf]
        %v1568 = vld [vmem:[%s1 + $0x220] sm:$0xf]
        %v1569 = vld [vmem:[%s1 + $0x224] sm:$0xf]
        %v1570 = vld [vmem:[%s1 + $0x228] sm:$0xf]
        %v1571 = vld [vmem:[%s1 + $0x22c] sm:$0xf]
        %v1572 = vld [vmem:[%s1 + $0x230] sm:$0xf]
        %v1573 = vld [vmem:[%s1 + $0x234] sm:$0xf]
        %v1574 = vld [vmem:[%s1 + $0x238] sm:$0xf]
        %v1575 = vld [vmem:[%s1 + $0x23c] sm:$0xf]
        %v1720 = vunpack.c.l.b16 %v1432
        %v1721 = vunpack.c.l.b16 %v1433
        %v1722 = vunpack.c.l.b16 %v1434
        %v1723 = vunpack.c.l.b16 %v1435
        %v1724 = vunpack.c.l.b16 %v1436
        %v1725 = vunpack.c.l.b16 %v1437
        %v1726 = vunpack.c.l.b16 %v1438
        %v1727 = vunpack.c.l.b16 %v1439
        %v1728 = vunpack.c.l.b16 %v1440
        %v1729 = vunpack.c.l.b16 %v1441
        %v1730 = vunpack.c.l.b16 %v1442
        %v1731 = vunpack.c.l.b16 %v1443
        %v1732 = vunpack.c.l.b16 %v1444
        %v1733 = vunpack.c.l.b16 %v1445
        %v1734 = vunpack.c.l.b16 %v1446
        %v1735 = vunpack.c.l.b16 %v1447
        %v1736 = vunpack.c.l.b16 %v1448
        %v1737 = vunpack.c.l.b16 %v1449
        %v1738 = vunpack.c.l.b16 %v1450
        %v1739 = vunpack.c.l.b16 %v1451
        %v1740 = vunpack.c.l.b16 %v1452
        %v1741 = vunpack.c.l.b16 %v1453
        %v1742 = vunpack.c.l.b16 %v1454
        %v1743 = vunpack.c.l.b16 %v1455
        %v1744 = vunpack.c.l.b16 %v1456
        %v1745 = vunpack.c.l.b16 %v1457
        %v1746 = vunpack.c.l.b16 %v1458
        %v1747 = vunpack.c.l.b16 %v1459
        %v1748 = vunpack.c.l.b16 %v1460
        %v1749 = vunpack.c.l.b16 %v1461
        %v1750 = vunpack.c.l.b16 %v1462
        %v1751 = vunpack.c.l.b16 %v1463
        %v1752 = vunpack.c.l.b16 %v1464
        %v1753 = vunpack.c.l.b16 %v1465
        %v1754 = vunpack.c.l.b16 %v1466
        %v1755 = vunpack.c.l.b16 %v1467
        %v1756 = vunpack.c.l.b16 %v1468
        %v1757 = vunpack.c.l.b16 %v1469
        %v1758 = vunpack.c.l.b16 %v1470
        %v1759 = vunpack.c.l.b16 %v1471
        %v1760 = vunpack.c.l.b16 %v1472
        %v1761 = vunpack.c.l.b16 %v1473
        %v1762 = vunpack.c.l.b16 %v1474
        %v1763 = vunpack.c.l.b16 %v1475
        %v1764 = vunpack.c.l.b16 %v1476
        %v1765 = vunpack.c.l.b16 %v1477
        %v1766 = vunpack.c.l.b16 %v1478
        %v1767 = vunpack.c.l.b16 %v1479
        %v1768 = vunpack.c.l.b16 %v1480
        %v1769 = vunpack.c.l.b16 %v1481
        %v1770 = vunpack.c.l.b16 %v1482
        %v1771 = vunpack.c.l.b16 %v1483
        %v1772 = vunpack.c.l.b16 %v1484
        %v1773 = vunpack.c.l.b16 %v1485
        %v1774 = vunpack.c.l.b16 %v1486
        %v1775 = vunpack.c.l.b16 %v1487
        %v1776 = vunpack.c.l.b16 %v1488
        %v1777 = vunpack.c.l.b16 %v1489
        %v1778 = vunpack.c.l.b16 %v1490
        %v1779 = vunpack.c.l.b16 %v1491
        %v1780 = vunpack.c.l.b16 %v1492
        %v1781 = vunpack.c.l.b16 %v1493
        %v1782 = vunpack.c.l.b16 %v1494
        %v1783 = vunpack.c.l.b16 %v1495
        %v1784 = vunpack.c.l.b16 %v1496
        %v1785 = vunpack.c.l.b16 %v1497
        %v1786 = vunpack.c.l.b16 %v1498
        %v1787 = vunpack.c.l.b16 %v1499
        %v1788 = vunpack.c.l.b16 %v1500
        %v1789 = vunpack.c.l.b16 %v1501
        %v1790 = vunpack.c.l.b16 %v1502
        %v1791 = vunpack.c.l.b16 %v1503
        %v1792 = vunpack.c.l.b16 %v1504
        %v1793 = vunpack.c.l.b16 %v1505
        %v1794 = vunpack.c.l.b16 %v1506
        %v1795 = vunpack.c.l.b16 %v1507
        %v1796 = vunpack.c.l.b16 %v1508
        %v1797 = vunpack.c.l.b16 %v1509
        %v1798 = vunpack.c.l.b16 %v1510
        %v1799 = vunpack.c.l.b16 %v1511
        %v1800 = vunpack.c.l.b16 %v1512
        %v1801 = vunpack.c.l.b16 %v1513
        %v1802 = vunpack.c.l.b16 %v1514
        %v1803 = vunpack.c.l.b16 %v1515
        %v1804 = vunpack.c.l.b16 %v1516
        %v1805 = vunpack.c.l.b16 %v1517
        %v1806 = vunpack.c.l.b16 %v1518
        %v1807 = vunpack.c.l.b16 %v1519
        %v1808 = vunpack.c.l.b16 %v1520
        %v1809 = vunpack.c.l.b16 %v1521
        %v1810 = vunpack.c.l.b16 %v1522
        %v1811 = vunpack.c.l.b16 %v1523
        %v1812 = vunpack.c.l.b16 %v1524
        %v1813 = vunpack.c.l.b16 %v1525
        %v1814 = vunpack.c.l.b16 %v1526
        %v1815 = vunpack.c.l.b16 %v1527
        %v1816 = vunpack.c.l.b16 %v1528
        %v1817 = vunpack.c.l.b16 %v1529
        %v1818 = vunpack.c.l.b16 %v1530
        %v1819 = vunpack.c.l.b16 %v1531
        %v1820 = vunpack.c.l.b16 %v1532
        %v1821 = vunpack.c.l.b16 %v1533
        %v1822 = vunpack.c.l.b16 %v1534
        %v1823 = vunpack.c.l.b16 %v1535
        %v1824 = vunpack.c.l.b16 %v1536
        %v1825 = vunpack.c.l.b16 %v1537
        %v1826 = vunpack.c.l.b16 %v1538
        %v1827 = vunpack.c.l.b16 %v1539
        %v1828 = vunpack.c.l.b16 %v1540
        %v1829 = vunpack.c.l.b16 %v1541
        %v1830 = vunpack.c.l.b16 %v1542
        %v1831 = vunpack.c.l.b16 %v1543
        %v1832 = vunpack.c.l.b16 %v1544
        %v1833 = vunpack.c.l.b16 %v1545
        %v1834 = vunpack.c.l.b16 %v1546
        %v1835 = vunpack.c.l.b16 %v1547
        %v1836 = vunpack.c.l.b16 %v1548
        %v1837 = vunpack.c.l.b16 %v1549
        %v1838 = vunpack.c.l.b16 %v1550
        %v1839 = vunpack.c.l.b16 %v1551
        %v1840 = vunpack.c.l.b16 %v1552
        %v1841 = vunpack.c.l.b16 %v1553
        %v1842 = vunpack.c.l.b16 %v1554
        %v1843 = vunpack.c.l.b16 %v1555
        %v1844 = vunpack.c.l.b16 %v1556
        %v1845 = vunpack.c.l.b16 %v1557
        %v1846 = vunpack.c.l.b16 %v1558
        %v1847 = vunpack.c.l.b16 %v1559
        %v1848 = vunpack.c.l.b16 %v1560
        %v1849 = vunpack.c.l.b16 %v1561
        %v1850 = vunpack.c.l.b16 %v1562
        %v1851 = vunpack.c.l.b16 %v1563
        %v1852 = vunpack.c.l.b16 %v1564
        %v1853 = vunpack.c.l.b16 %v1565
        %v1854 = vunpack.c.l.b16 %v1566
        %v1855 = vunpack.c.l.b16 %v1567
        %v1856 = vunpack.c.l.b16 %v1568
        %v1857 = vunpack.c.l.b16 %v1569
        %v1858 = vunpack.c.l.b16 %v1570
        %v1859 = vunpack.c.l.b16 %v1571
        %v1860 = vunpack.c.l.b16 %v1572
        %v1861 = vunpack.c.l.b16 %v1573
        %v1862 = vunpack.c.l.b16 %v1574
        %v1863 = vunpack.c.l.b16 %v1575
        %v1864 = vpack.c.b16 %v1721, %v1720
        %v1865 = vpack.c.b16 %v1723, %v1722
        %v1866 = vpack.c.b16 %v1725, %v1724
        %v1867 = vpack.c.b16 %v1727, %v1726
        %v1868 = vpack.c.b16 %v1729, %v1728
        %v1869 = vpack.c.b16 %v1731, %v1730
        %v1870 = vpack.c.b16 %v1733, %v1732
        %v1871 = vpack.c.b16 %v1735, %v1734
        %v1872 = vpack.c.b16 %v1737, %v1736
        %v1873 = vpack.c.b16 %v1739, %v1738
        %v1874 = vpack.c.b16 %v1741, %v1740
        %v1875 = vpack.c.b16 %v1743, %v1742
        %v1876 = vpack.c.b16 %v1745, %v1744
        %v1877 = vpack.c.b16 %v1747, %v1746
        %v1878 = vpack.c.b16 %v1749, %v1748
        %v1879 = vpack.c.b16 %v1751, %v1750
        %v1880 = vpack.c.b16 %v1753, %v1752
        %v1881 = vpack.c.b16 %v1755, %v1754
        %v1882 = vpack.c.b16 %v1757, %v1756
        %v1883 = vpack.c.b16 %v1759, %v1758
        %v1884 = vpack.c.b16 %v1761, %v1760
        %v1885 = vpack.c.b16 %v1763, %v1762
        %v1886 = vpack.c.b16 %v1765, %v1764
        %v1887 = vpack.c.b16 %v1767, %v1766
        %v1888 = vpack.c.b16 %v1769, %v1768
        %v1889 = vpack.c.b16 %v1771, %v1770
        %v1890 = vpack.c.b16 %v1773, %v1772
        %v1891 = vpack.c.b16 %v1775, %v1774
        %v1892 = vpack.c.b16 %v1777, %v1776
        %v1893 = vpack.c.b16 %v1779, %v1778
        %v1894 = vpack.c.b16 %v1781, %v1780
        %v1895 = vpack.c.b16 %v1783, %v1782
        %v1896 = vpack.c.b16 %v1785, %v1784
        %v1897 = vpack.c.b16 %v1787, %v1786
        %v1898 = vpack.c.b16 %v1789, %v1788
        %v1899 = vpack.c.b16 %v1791, %v1790
        %v1900 = vpack.c.b16 %v1793, %v1792
        %v1901 = vpack.c.b16 %v1795, %v1794
        %v1902 = vpack.c.b16 %v1797, %v1796
        %v1903 = vpack.c.b16 %v1799, %v1798
        %v1904 = vpack.c.b16 %v1801, %v1800
        %v1905 = vpack.c.b16 %v1803, %v1802
        %v1906 = vpack.c.b16 %v1805, %v1804
        %v1907 = vpack.c.b16 %v1807, %v1806
        %v1908 = vpack.c.b16 %v1809, %v1808
        %v1909 = vpack.c.b16 %v1811, %v1810
        %v1910 = vpack.c.b16 %v1813, %v1812
        %v1911 = vpack.c.b16 %v1815, %v1814
        %v1912 = vpack.c.b16 %v1817, %v1816
        %v1913 = vpack.c.b16 %v1819, %v1818
        %v1914 = vpack.c.b16 %v1821, %v1820
        %v1915 = vpack.c.b16 %v1823, %v1822
        %v1916 = vpack.c.b16 %v1825, %v1824
        %v1917 = vpack.c.b16 %v1827, %v1826
        %v1918 = vpack.c.b16 %v1829, %v1828
        %v1919 = vpack.c.b16 %v1831, %v1830
        %v1920 = vpack.c.b16 %v1833, %v1832
        %v1921 = vpack.c.b16 %v1835, %v1834
        %v1922 = vpack.c.b16 %v1837, %v1836
        %v1923 = vpack.c.b16 %v1839, %v1838
        %v1924 = vpack.c.b16 %v1841, %v1840
        %v1925 = vpack.c.b16 %v1843, %v1842
        %v1926 = vpack.c.b16 %v1845, %v1844
        %v1927 = vpack.c.b16 %v1847, %v1846
        %v1928 = vpack.c.b16 %v1849, %v1848
        %v1929 = vpack.c.b16 %v1851, %v1850
        %v1930 = vpack.c.b16 %v1853, %v1852
        %v1931 = vpack.c.b16 %v1855, %v1854
        %v1932 = vpack.c.b16 %v1857, %v1856
        %v1933 = vpack.c.b16 %v1859, %v1858
        %v1934 = vpack.c.b16 %v1861, %v1860
        %v1935 = vpack.c.b16 %v1863, %v1862
        %2008 = vmatprep.subr.bf16.mxu0 0
        %2009 = vmatpush1.bf16.msra.mxu0 %v1864
        %2010 = vmatprep.subr.bf16.mxu0 0
        %2011 = vmatpush1.bf16.msra.mxu0 %v1865
        %2012 = vmatprep.subr.bf16.mxu0 0
        %2013 = vmatpush1.bf16.msra.mxu0 %v1866
        %2014 = vmatprep.subr.bf16.mxu0 0
        %2015 = vmatpush1.bf16.msra.mxu0 %v1867
        %2016 = vmatprep.subr.bf16.mxu0 0
        %2017 = vmatpush1.bf16.msra.mxu0 %v1868
        %2018 = vmatprep.subr.bf16.mxu0 0
        %2019 = vmatpush1.bf16.msra.mxu0 %v1869
        %2020 = vmatprep.subr.bf16.mxu0 0
        %2021 = vmatpush1.bf16.msra.mxu0 %v1870
        %2022 = vmatprep.subr.bf16.mxu0 0
        %2023 = vmatpush1.bf16.msra.mxu0 %v1871
        %2024 = vmatprep.subr.bf16.mxu0 0
        %2025 = vmatpush1.bf16.msra.mxu0 %v1872
        %2026 = vmatprep.subr.bf16.mxu0 0
        %2027 = vmatpush1.bf16.msra.mxu0 %v1873
        %2028 = vmatprep.subr.bf16.mxu0 0
        %2029 = vmatpush1.bf16.msra.mxu0 %v1874
        %2030 = vmatprep.subr.bf16.mxu0 0
        %2031 = vmatpush1.bf16.msra.mxu0 %v1875
        %2032 = vmatprep.subr.bf16.mxu0 0
        %2033 = vmatpush1.bf16.msra.mxu0 %v1876
        %2034 = vmatprep.subr.bf16.mxu0 0
        %2035 = vmatpush1.bf16.msra.mxu0 %v1877
        %2036 = vmatprep.subr.bf16.mxu0 0
        %2037 = vmatpush1.bf16.msra.mxu0 %v1878
        %2038 = vmatprep.subr.bf16.mxu0 0
        %2039 = vmatpush1.bf16.msra.mxu0 %v1879
        %2040 = vmatprep.mubr.bf16.mxu0 %v1289
        %2041 = vmatmul.mubr.bf16.gmra.mrb[0].mxu0 %v1288
        %v2042 = vpop.f32.mrb[0].mxu0
        %v2043 = vadd.f32 0.0, %v2042
        %v2044 = vpop.f32.mrb[0].mxu0
        %v2045 = vpop.f32.mrb[0].mxu0
        %v2046 = vadd.f32 0.0, %v2045
        %v2047 = vpop.f32.mrb[0].mxu0
        %2048 = vmatprep.mubr.bf16.mxu0 %v1298
        %2049 = vmatmul.mubr.bf16.gmra.mrb[0].mxu0 %v1297
        %v2050 = vpop.f32.mrb[0].mxu0
        %v2051 = vadd.f32 0.0, %v2050
        %v2052 = vpop.f32.mrb[0].mxu0
        %v2053 = vpop.f32.mrb[0].mxu0
        %v2054 = vadd.f32 0.0, %v2053
        %v2055 = vpop.f32.mrb[0].mxu0
        %2056 = vmatprep.mubr.bf16.mxu0 %v1307
        %2057 = vmatmul.mubr.bf16.gmra.mrb[0].mxu0 %v1306
        %v2058 = vpop.f32.mrb[0].mxu0
        %v2059 = vadd.f32 0.0, %v2058
        %v2060 = vpop.f32.mrb[0].mxu0
        %v2061 = vpop.f32.mrb[0].mxu0
        %v2062 = vadd.f32 0.0, %v2061
        %v2063 = vpop.f32.mrb[0].mxu0
        %2064 = vmatprep.mubr.bf16.mxu0 %v1316
        %2065 = vmatmul.mubr.bf16.gmra.mrb[0].mxu0 %v1315
        %v2066 = vpop.f32.mrb[0].mxu0
        %v2067 = vadd.f32 0.0, %v2066
        %v2068 = vpop.f32.mrb[0].mxu0
        %v2069 = vpop.f32.mrb[0].mxu0
        %v2070 = vadd.f32 0.0, %v2069
        %v2071 = vpop.f32.mrb[0].mxu0
        %2072 = vmatprep.mubr.bf16.mxu0 %v1325
        %2073 = vmatmul.mubr.bf16.gmra.mrb[0].mxu0 %v1324
        %v2074 = vpop.f32.mrb[0].mxu0
        %v2075 = vadd.f32 0.0, %v2074
        %v2076 = vpop.f32.mrb[0].mxu0
        %v2077 = vpop.f32.mrb[0].mxu0
        %v2078 = vadd.f32 0.0, %v2077
        %v2079 = vpop.f32.mrb[0].mxu0
        %2080 = vmatprep.mubr.bf16.mxu0 %v1334
        %2081 = vmatmul.mubr.bf16.gmra.mrb[0].mxu0 %v1333
        %v2082 = vpop.f32.mrb[0].mxu0
        %v2083 = vadd.f32 0.0, %v2082
        %v2084 = vpop.f32.mrb[0].mxu0
        %v2085 = vpop.f32.mrb[0].mxu0
        %v2086 = vadd.f32 0.0, %v2085
        %v2087 = vpop.f32.mrb[0].mxu0
        %2088 = vmatprep.mubr.bf16.mxu0 %v1343
        %2089 = vmatmul.mubr.bf16.gmra.mrb[0].mxu0 %v1342
        %v2090 = vpop.f32.mrb[0].mxu0
        %v2091 = vadd.f32 0.0, %v2090
        %v2092 = vpop.f32.mrb[0].mxu0
        %v2093 = vpop.f32.mrb[0].mxu0
        %v2094 = vadd.f32 0.0, %v2093
        %v2095 = vpop.f32.mrb[0].mxu0
        %2096 = vmatprep.mubr.bf16.mxu0 %v1352
        %2097 = vmatmul.mubr.bf16.gmra.mrb[0].mxu0 %v1351
        %v2098 = vpop.f32.mrb[0].mxu0
        %v2099 = vadd.f32 0.0, %v2098
        %v2100 = vpop.f32.mrb[0].mxu0
        %v2101 = vpop.f32.mrb[0].mxu0
        %v2102 = vadd.f32 0.0, %v2101
        %v2103 = vpop.f32.mrb[0].mxu0
        %2104 = vmatprep.mubr.bf16.mxu0 %v1361
        %2105 = vmatmul.mubr.bf16.gmra.mrb[0].mxu0 %v1360
        %v2106 = vpop.f32.mrb[0].mxu0
        %v2107 = vadd.f32 0.0, %v2106
        %v2108 = vpop.f32.mrb[0].mxu0
        %v2109 = vpop.f32.mrb[0].mxu0
        %v2110 = vadd.f32 0.0, %v2109
        %v2111 = vpop.f32.mrb[0].mxu0
        %2112 = vmatprep.mubr.bf16.mxu0 %v1370
        %2113 = vmatmul.mubr.bf16.gmra.mrb[0].mxu0 %v1369
        %v2114 = vpop.f32.mrb[0].mxu0
        %v2115 = vadd.f32 0.0, %v2114
        %v2116 = vpop.f32.mrb[0].mxu0
        %v2117 = vpop.f32.mrb[0].mxu0
        %v2118 = vadd.f32 0.0, %v2117
        %v2119 = vpop.f32.mrb[0].mxu0
        %2120 = vmatprep.mubr.bf16.mxu0 %v1379
        %2121 = vmatmul.mubr.bf16.gmra.mrb[0].mxu0 %v1378
        %v2122 = vpop.f32.mrb[0].mxu0
        %v2123 = vadd.f32 0.0, %v2122
        %v2124 = vpop.f32.mrb[0].mxu0
        %v2125 = vpop.f32.mrb[0].mxu0
        %v2126 = vadd.f32 0.0, %v2125
        %v2127 = vpop.f32.mrb[0].mxu0
        %2128 = vmatprep.mubr.bf16.mxu0 %v1388
        %2129 = vmatmul.mubr.bf16.gmra.mrb[0].mxu0 %v1387
        %v2130 = vpop.f32.mrb[0].mxu0
        %v2131 = vadd.f32 0.0, %v2130
        %v2132 = vpop.f32.mrb[0].mxu0
        %v2133 = vpop.f32.mrb[0].mxu0
        %v2134 = vadd.f32 0.0, %v2133
        %v2135 = vpop.f32.mrb[0].mxu0
        %2136 = vmatprep.mubr.bf16.mxu0 %v1397
        %2137 = vmatmul.mubr.bf16.gmra.mrb[0].mxu0 %v1396
        %v2138 = vpop.f32.mrb[0].mxu0
        %v2139 = vadd.f32 0.0, %v2138
        %v2140 = vpop.f32.mrb[0].mxu0
        %v2141 = vpop.f32.mrb[0].mxu0
        %v2142 = vadd.f32 0.0, %v2141
        %v2143 = vpop.f32.mrb[0].mxu0
        %2144 = vmatprep.mubr.bf16.mxu0 %v1406
        %2145 = vmatmul.mubr.bf16.gmra.mrb[0].mxu0 %v1405
        %v2146 = vpop.f32.mrb[0].mxu0
        %v2147 = vadd.f32 0.0, %v2146
        %v2148 = vpop.f32.mrb[0].mxu0
        %v2149 = vpop.f32.mrb[0].mxu0
        %v2150 = vadd.f32 0.0, %v2149
        %v2151 = vpop.f32.mrb[0].mxu0
        %2152 = vmatprep.mubr.bf16.mxu0 %v1415
        %2153 = vmatmul.mubr.bf16.gmra.mrb[0].mxu0 %v1414
        %v2154 = vpop.f32.mrb[0].mxu0
        %v2155 = vadd.f32 0.0, %v2154
        %v2156 = vpop.f32.mrb[0].mxu0
        %v2157 = vpop.f32.mrb[0].mxu0
        %v2158 = vadd.f32 0.0, %v2157
        %v2159 = vpop.f32.mrb[0].mxu0
        %2160 = vmatprep.mubr.bf16.mxu0 %v1424
        %2161 = vmatmul.mubr.bf16.gmra.mrb[0].mxu0 %v1423
        %v2162 = vpop.f32.mrb[0].mxu0
        %v2163 = vadd.f32 0.0, %v2162
        %v2164 = vpop.f32.mrb[0].mxu0
        %v2165 = vpop.f32.mrb[0].mxu0
        %v2166 = vadd.f32 0.0, %v2165
        %v2167 = vpop.f32.mrb[0].mxu0
        %2168 = vdwg.mxu0
        %2169 = vmatprep.subr.bf16.mxu0 0
        %2170 = vmatpush1.bf16.msra.mxu0 %v1880
        %2171 = vmatprep.subr.bf16.mxu0 0
        %2172 = vmatpush1.bf16.msra.mxu0 %v1881
        %2173 = vmatprep.subr.bf16.mxu0 0
        %2174 = vmatpush1.bf16.msra.mxu0 %v1882
        %2175 = vmatprep.subr.bf16.mxu0 0
        %2176 = vmatpush1.bf16.msra.mxu0 %v1883
        %2177 = vmatprep.subr.bf16.mxu0 0
        %2178 = vmatpush1.bf16.msra.mxu0 %v1884
        %2179 = vmatprep.subr.bf16.mxu0 0
        %2180 = vmatpush1.bf16.msra.mxu0 %v1885
        %2181 = vmatprep.subr.bf16.mxu0 0
        %2182 = vmatpush1.bf16.msra.mxu0 %v1886
        %2183 = vmatprep.subr.bf16.mxu0 0
        %2184 = vmatpush1.bf16.msra.mxu0 %v1887
        %2185 = vmatprep.subr.bf16.mxu0 0
        %2186 = vmatpush1.bf16.msra.mxu0 %v1888
        %2187 = vmatprep.subr.bf16.mxu0 0
        %2188 = vmatpush1.bf16.msra.mxu0 %v1889
        %2189 = vmatprep.subr.bf16.mxu0 0
        %2190 = vmatpush1.bf16.msra.mxu0 %v1890
        %2191 = vmatprep.subr.bf16.mxu0 0
        %2192 = vmatpush1.bf16.msra.mxu0 %v1891
        %2193 = vmatprep.subr.bf16.mxu0 0
        %2194 = vmatpush1.bf16.msra.mxu0 %v1892
        %2195 = vmatprep.subr.bf16.mxu0 0
        %2196 = vmatpush1.bf16.msra.mxu0 %v1893
        %2197 = vmatprep.subr.bf16.mxu0 0
        %2198 = vmatpush1.bf16.msra.mxu0 %v1894
        %2199 = vmatprep.subr.bf16.mxu0 0
        %2200 = vmatpush1.bf16.msra.mxu0 %v1895
        %2201 = vmatprep.mubr.bf16.mxu0 %v1291
        %2202 = vmatmul.mubr.bf16.gmra.mrb[0].mxu0 %v1290
        %v2203 = vpop.f32.mrb[0].mxu0
        %v2204 = vadd.f32 %v2043, %v2203
        %v2205 = vpop.f32.mrb[0].mxu0
        %v2206 = vpop.f32.mrb[0].mxu0
        %v2207 = vadd.f32 %v2046, %v2206
        %v2208 = vpop.f32.mrb[0].mxu0
        %2209 = vmatprep.mubr.bf16.mxu0 %v1300
        %2210 = vmatmul.mubr.bf16.gmra.mrb[0].mxu0 %v1299
        %v2211 = vpop.f32.mrb[0].mxu0
        %v2212 = vadd.f32 %v2051, %v2211
        %v2213 = vpop.f32.mrb[0].mxu0
        %v2214 = vpop.f32.mrb[0].mxu0
        %v2215 = vadd.f32 %v2054, %v2214
        %v2216 = vpop.f32.mrb[0].mxu0
        %2217 = vmatprep.mubr.bf16.mxu0 %v1309
        %2218 = vmatmul.mubr.bf16.gmra.mrb[0].mxu0 %v1308
        %v2219 = vpop.f32.mrb[0].mxu0
        %v2220 = vadd.f32 %v2059, %v2219
        %v2221 = vpop.f32.mrb[0].mxu0
        %v2222 = vpop.f32.mrb[0].mxu0
        %v2223 = vadd.f32 %v2062, %v2222
        %v2224 = vpop.f32.mrb[0].mxu0
        %2225 = vmatprep.mubr.bf16.mxu0 %v1318
        %2226 = vmatmul.mubr.bf16.gmra.mrb[0].mxu0 %v1317
        %v2227 = vpop.f32.mrb[0].mxu0
        %v2228 = vadd.f32 %v2067, %v2227
        %v2229 = vpop.f32.mrb[0].mxu0
        %v2230 = vpop.f32.mrb[0].mxu0
        %v2231 = vadd.f32 %v2070, %v2230
        %v2232 = vpop.f32.mrb[0].mxu0
        %2233 = vmatprep.mubr.bf16.mxu0 %v1327
        %2234 = vmatmul.mubr.bf16.gmra.mrb[0].mxu0 %v1326
        %v2235 = vpop.f32.mrb[0].mxu0
        %v2236 = vadd.f32 %v2075, %v2235
        %v2237 = vpop.f32.mrb[0].mxu0
        %v2238 = vpop.f32.mrb[0].mxu0
        %v2239 = vadd.f32 %v2078, %v2238
        %v2240 = vpop.f32.mrb[0].mxu0
        %2241 = vmatprep.mubr.bf16.mxu0 %v1336
        %2242 = vmatmul.mubr.bf16.gmra.mrb[0].mxu0 %v1335
        %v2243 = vpop.f32.mrb[0].mxu0
        %v2244 = vadd.f32 %v2083, %v2243
        %v2245 = vpop.f32.mrb[0].mxu0
        %v2246 = vpop.f32.mrb[0].mxu0
        %v2247 = vadd.f32 %v2086, %v2246
        %v2248 = vpop.f32.mrb[0].mxu0
        %2249 = vmatprep.mubr.bf16.mxu0 %v1345
        %2250 = vmatmul.mubr.bf16.gmra.mrb[0].mxu0 %v1344
        %v2251 = vpop.f32.mrb[0].mxu0
        %v2252 = vadd.f32 %v2091, %v2251
        %v2253 = vpop.f32.mrb[0].mxu0
        %v2254 = vpop.f32.mrb[0].mxu0
        %v2255 = vadd.f32 %v2094, %v2254
        %v2256 = vpop.f32.mrb[0].mxu0
        %2257 = vmatprep.mubr.bf16.mxu0 %v1354
        %2258 = vmatmul.mubr.bf16.gmra.mrb[0].mxu0 %v1353
        %v2259 = vpop.f32.mrb[0].mxu0
        %v2260 = vadd.f32 %v2099, %v2259
        %v2261 = vpop.f32.mrb[0].mxu0
        %v2262 = vpop.f32.mrb[0].mxu0
        %v2263 = vadd.f32 %v2102, %v2262
        %v2264 = vpop.f32.mrb[0].mxu0
        %2265 = vmatprep.mubr.bf16.mxu0 %v1363
        %2266 = vmatmul.mubr.bf16.gmra.mrb[0].mxu0 %v1362
        %v2267 = vpop.f32.mrb[0].mxu0
        %v2268 = vadd.f32 %v2107, %v2267
        %v2269 = vpop.f32.mrb[0].mxu0
        %v2270 = vpop.f32.mrb[0].mxu0
        %v2271 = vadd.f32 %v2110, %v2270
        %v2272 = vpop.f32.mrb[0].mxu0
        %2273 = vmatprep.mubr.bf16.mxu0 %v1372
        %2274 = vmatmul.mubr.bf16.gmra.mrb[0].mxu0 %v1371
        %v2275 = vpop.f32.mrb[0].mxu0
        %v2276 = vadd.f32 %v2115, %v2275
        %v2277 = vpop.f32.mrb[0].mxu0
        %v2278 = vpop.f32.mrb[0].mxu0
        %v2279 = vadd.f32 %v2118, %v2278
        %v2280 = vpop.f32.mrb[0].mxu0
        %2281 = vmatprep.mubr.bf16.mxu0 %v1381
        %2282 = vmatmul.mubr.bf16.gmra.mrb[0].mxu0 %v1380
        %v2283 = vpop.f32.mrb[0].mxu0
        %v2284 = vadd.f32 %v2123, %v2283
        %v2285 = vpop.f32.mrb[0].mxu0
        %v2286 = vpop.f32.mrb[0].mxu0
        %v2287 = vadd.f32 %v2126, %v2286
        %v2288 = vpop.f32.mrb[0].mxu0
        %2289 = vmatprep.mubr.bf16.mxu0 %v1390
        %2290 = vmatmul.mubr.bf16.gmra.mrb[0].mxu0 %v1389
        %v2291 = vpop.f32.mrb[0].mxu0
        %v2292 = vadd.f32 %v2131, %v2291
        %v2293 = vpop.f32.mrb[0].mxu0
        %v2294 = vpop.f32.mrb[0].mxu0
        %v2295 = vadd.f32 %v2134, %v2294
        %v2296 = vpop.f32.mrb[0].mxu0
        %2297 = vmatprep.mubr.bf16.mxu0 %v1399
        %2298 = vmatmul.mubr.bf16.gmra.mrb[0].mxu0 %v1398
        %v2299 = vpop.f32.mrb[0].mxu0
        %v2300 = vadd.f32 %v2139, %v2299
        %v2301 = vpop.f32.mrb[0].mxu0
        %v2302 = vpop.f32.mrb[0].mxu0
        %v2303 = vadd.f32 %v2142, %v2302
        %v2304 = vpop.f32.mrb[0].mxu0
        %2305 = vmatprep.mubr.bf16.mxu0 %v1408
        %2306 = vmatmul.mubr.bf16.gmra.mrb[0].mxu0 %v1407
        %v2307 = vpop.f32.mrb[0].mxu0
        %v2308 = vadd.f32 %v2147, %v2307
        %v2309 = vpop.f32.mrb[0].mxu0
        %v2310 = vpop.f32.mrb[0].mxu0
        %v2311 = vadd.f32 %v2150, %v2310
        %v2312 = vpop.f32.mrb[0].mxu0
        %2313 = vmatprep.mubr.bf16.mxu0 %v1417
        %2314 = vmatmul.mubr.bf16.gmra.mrb[0].mxu0 %v1416
        %v2315 = vpop.f32.mrb[0].mxu0
        %v2316 = vadd.f32 %v2155, %v2315
        %v2317 = vpop.f32.mrb[0].mxu0
        %v2318 = vpop.f32.mrb[0].mxu0
        %v2319 = vadd.f32 %v2158, %v2318
        %v2320 = vpop.f32.mrb[0].mxu0
        %2321 = vmatprep.mubr.bf16.mxu0 %v1426
        %2322 = vmatmul.mubr.bf16.gmra.mrb[0].mxu0 %v1425
        %v2323 = vpop.f32.mrb[0].mxu0
        %v2324 = vadd.f32 %v2163, %v2323
        %v2325 = vpop.f32.mrb[0].mxu0
        %v2326 = vpop.f32.mrb[0].mxu0
        %v2327 = vadd.f32 %v2166, %v2326
        %v2328 = vpop.f32.mrb[0].mxu0
        %2329 = vdwg.mxu0
        %2330 = vmatprep.subr.bf16.mxu0 0
        %2331 = vmatpush1.bf16.msra.mxu0 %v1896
        %2332 = vmatprep.subr.bf16.mxu0 0
        %2333 = vmatpush1.bf16.msra.mxu0 %v1897
        %2334 = vmatprep.subr.bf16.mxu0 0
        %2335 = vmatpush1.bf16.msra.mxu0 %v1898
        %2336 = vmatprep.subr.bf16.mxu0 0
        %2337 = vmatpush1.bf16.msra.mxu0 %v1899
        %2338 = vmatprep.subr.bf16.mxu0 0
        %2339 = vmatpush1.bf16.msra.mxu0 %v1900
        %2340 = vmatprep.subr.bf16.mxu0 0
        %2341 = vmatpush1.bf16.msra.mxu0 %v1901
        %2342 = vmatprep.subr.bf16.mxu0 0
        %2343 = vmatpush1.bf16.msra.mxu0 %v1902
        %2344 = vmatprep.subr.bf16.mxu0 0
        %2345 = vmatpush1.bf16.msra.mxu0 %v1903
        %2346 = vmatprep.subr.bf16.mxu0 0
        %2347 = vmatpush1.bf16.msra.mxu0 %v1904
        %2348 = vmatprep.subr.bf16.mxu0 0
        %2349 = vmatpush1.bf16.msra.mxu0 %v1905
        %2350 = vmatprep.subr.bf16.mxu0 0
        %2351 = vmatpush1.bf16.msra.mxu0 %v1906
        %2352 = vmatprep.subr.bf16.mxu0 0
        %2353 = vmatpush1.bf16.msra.mxu0 %v1907
        %2354 = vmatprep.subr.bf16.mxu0 0
        %2355 = vmatpush1.bf16.msra.mxu0 %v1908
        %2356 = vmatprep.subr.bf16.mxu0 0
        %2357 = vmatpush1.bf16.msra.mxu0 %v1909
        %2358 = vmatprep.subr.bf16.mxu0 0
        %2359 = vmatpush1.bf16.msra.mxu0 %v1910
        %2360 = vmatprep.subr.bf16.mxu0 0
        %2361 = vmatpush1.bf16.msra.mxu0 %v1911
        %2362 = vmatprep.mubr.bf16.mxu0 %v1293
        %2363 = vmatmul.mubr.bf16.gmra.mrb[0].mxu0 %v1292
        %v2364 = vpop.f32.mrb[0].mxu0
        %v2365 = vadd.f32 %v2204, %v2364
        %v2366 = vpop.f32.mrb[0].mxu0
        %v2367 = vpop.f32.mrb[0].mxu0
        %v2368 = vadd.f32 %v2207, %v2367
        %v2369 = vpop.f32.mrb[0].mxu0
        %2370 = vmatprep.mubr.bf16.mxu0 %v1302
        %2371 = vmatmul.mubr.bf16.gmra.mrb[0].mxu0 %v1301
        %v2372 = vpop.f32.mrb[0].mxu0
        %v2373 = vadd.f32 %v2212, %v2372
        %v2374 = vpop.f32.mrb[0].mxu0
        %v2375 = vpop.f32.mrb[0].mxu0
        %v2376 = vadd.f32 %v2215, %v2375
        %v2377 = vpop.f32.mrb[0].mxu0
        %2378 = vmatprep.mubr.bf16.mxu0 %v1311
        %2379 = vmatmul.mubr.bf16.gmra.mrb[0].mxu0 %v1310
        %v2380 = vpop.f32.mrb[0].mxu0
        %v2381 = vadd.f32 %v2220, %v2380
        %v2382 = vpop.f32.mrb[0].mxu0
        %v2383 = vpop.f32.mrb[0].mxu0
        %v2384 = vadd.f32 %v2223, %v2383
        %v2385 = vpop.f32.mrb[0].mxu0
        %2386 = vmatprep.mubr.bf16.mxu0 %v1320
        %2387 = vmatmul.mubr.bf16.gmra.mrb[0].mxu0 %v1319
        %v2388 = vpop.f32.mrb[0].mxu0
        %v2389 = vadd.f32 %v2228, %v2388
        %v2390 = vpop.f32.mrb[0].mxu0
        %v2391 = vpop.f32.mrb[0].mxu0
        %v2392 = vadd.f32 %v2231, %v2391
        %v2393 = vpop.f32.mrb[0].mxu0
        %2394 = vmatprep.mubr.bf16.mxu0 %v1329
        %2395 = vmatmul.mubr.bf16.gmra.mrb[0].mxu0 %v1328
        %v2396 = vpop.f32.mrb[0].mxu0
        %v2397 = vadd.f32 %v2236, %v2396
        %v2398 = vpop.f32.mrb[0].mxu0
        %v2399 = vpop.f32.mrb[0].mxu0
        %v2400 = vadd.f32 %v2239, %v2399
        %v2401 = vpop.f32.mrb[0].mxu0
        %2402 = vmatprep.mubr.bf16.mxu0 %v1338
        %2403 = vmatmul.mubr.bf16.gmra.mrb[0].mxu0 %v1337
        %v2404 = vpop.f32.mrb[0].mxu0
        %v2405 = vadd.f32 %v2244, %v2404
        %v2406 = vpop.f32.mrb[0].mxu0
        %v2407 = vpop.f32.mrb[0].mxu0
        %v2408 = vadd.f32 %v2247, %v2407
        %v2409 = vpop.f32.mrb[0].mxu0
        %2410 = vmatprep.mubr.bf16.mxu0 %v1347
        %2411 = vmatmul.mubr.bf16.gmra.mrb[0].mxu0 %v1346
        %v2412 = vpop.f32.mrb[0].mxu0
        %v2413 = vadd.f32 %v2252, %v2412
        %v2414 = vpop.f32.mrb[0].mxu0
        %v2415 = vpop.f32.mrb[0].mxu0
        %v2416 = vadd.f32 %v2255, %v2415
        %v2417 = vpop.f32.mrb[0].mxu0
        %2418 = vmatprep.mubr.bf16.mxu0 %v1356
        %2419 = vmatmul.mubr.bf16.gmra.mrb[0].mxu0 %v1355
        %v2420 = vpop.f32.mrb[0].mxu0
        %v2421 = vadd.f32 %v2260, %v2420
        %v2422 = vpop.f32.mrb[0].mxu0
        %v2423 = vpop.f32.mrb[0].mxu0
        %v2424 = vadd.f32 %v2263, %v2423
        %v2425 = vpop.f32.mrb[0].mxu0
        %2426 = vmatprep.mubr.bf16.mxu0 %v1365
        %2427 = vmatmul.mubr.bf16.gmra.mrb[0].mxu0 %v1364
        %v2428 = vpop.f32.mrb[0].mxu0
        %v2429 = vadd.f32 %v2268, %v2428
        %v2430 = vpop.f32.mrb[0].mxu0
        %v2431 = vpop.f32.mrb[0].mxu0
        %v2432 = vadd.f32 %v2271, %v2431
        %v2433 = vpop.f32.mrb[0].mxu0
        %2434 = vmatprep.mubr.bf16.mxu0 %v1374
        %2435 = vmatmul.mubr.bf16.gmra.mrb[0].mxu0 %v1373
        %v2436 = vpop.f32.mrb[0].mxu0
        %v2437 = vadd.f32 %v2276, %v2436
        %v2438 = vpop.f32.mrb[0].mxu0
        %v2439 = vpop.f32.mrb[0].mxu0
        %v2440 = vadd.f32 %v2279, %v2439
        %v2441 = vpop.f32.mrb[0].mxu0
        %2442 = vmatprep.mubr.bf16.mxu0 %v1383
        %2443 = vmatmul.mubr.bf16.gmra.mrb[0].mxu0 %v1382
        %v2444 = vpop.f32.mrb[0].mxu0
        %v2445 = vadd.f32 %v2284, %v2444
        %v2446 = vpop.f32.mrb[0].mxu0
        %v2447 = vpop.f32.mrb[0].mxu0
        %v2448 = vadd.f32 %v2287, %v2447
        %v2449 = vpop.f32.mrb[0].mxu0
        %2450 = vmatprep.mubr.bf16.mxu0 %v1392
        %2451 = vmatmul.mubr.bf16.gmra.mrb[0].mxu0 %v1391
        %v2452 = vpop.f32.mrb[0].mxu0
        %v2453 = vadd.f32 %v2292, %v2452
        %v2454 = vpop.f32.mrb[0].mxu0
        %v2455 = vpop.f32.mrb[0].mxu0
        %v2456 = vadd.f32 %v2295, %v2455
        %v2457 = vpop.f32.mrb[0].mxu0
        %2458 = vmatprep.mubr.bf16.mxu0 %v1401
        %2459 = vmatmul.mubr.bf16.gmra.mrb[0].mxu0 %v1400
        %v2460 = vpop.f32.mrb[0].mxu0
        %v2461 = vadd.f32 %v2300, %v2460
        %v2462 = vpop.f32.mrb[0].mxu0
        %v2463 = vpop.f32.mrb[0].mxu0
        %v2464 = vadd.f32 %v2303, %v2463
        %v2465 = vpop.f32.mrb[0].mxu0
        %2466 = vmatprep.mubr.bf16.mxu0 %v1410
        %2467 = vmatmul.mubr.bf16.gmra.mrb[0].mxu0 %v1409
        %v2468 = vpop.f32.mrb[0].mxu0
        %v2469 = vadd.f32 %v2308, %v2468
        %v2470 = vpop.f32.mrb[0].mxu0
        %v2471 = vpop.f32.mrb[0].mxu0
        %v2472 = vadd.f32 %v2311, %v2471
        %v2473 = vpop.f32.mrb[0].mxu0
        %2474 = vmatprep.mubr.bf16.mxu0 %v1419
        %2475 = vmatmul.mubr.bf16.gmra.mrb[0].mxu0 %v1418
        %v2476 = vpop.f32.mrb[0].mxu0
        %v2477 = vadd.f32 %v2316, %v2476
        %v2478 = vpop.f32.mrb[0].mxu0
        %v2479 = vpop.f32.mrb[0].mxu0
        %v2480 = vadd.f32 %v2319, %v2479
        %v2481 = vpop.f32.mrb[0].mxu0
        %2482 = vmatprep.mubr.bf16.mxu0 %v1428
        %2483 = vmatmul.mubr.bf16.gmra.mrb[0].mxu0 %v1427
        %v2484 = vpop.f32.mrb[0].mxu0
        %v2485 = vadd.f32 %v2324, %v2484
        %v2486 = vpop.f32.mrb[0].mxu0
        %v2487 = vpop.f32.mrb[0].mxu0
        %v2488 = vadd.f32 %v2327, %v2487
        %v2489 = vpop.f32.mrb[0].mxu0
        %2490 = vdwg.mxu0
        %2491 = vmatprep.subr.bf16.mxu0 0
        %2492 = vmatpush1.bf16.msra.mxu0 %v1912
        %2493 = vmatprep.subr.bf16.mxu0 0
        %2494 = vmatpush1.bf16.msra.mxu0 %v1913
        %2495 = vmatprep.subr.bf16.mxu0 0
        %2496 = vmatpush1.bf16.msra.mxu0 %v1914
        %2497 = vmatprep.subr.bf16.mxu0 0
        %2498 = vmatpush1.bf16.msra.mxu0 %v1915
        %2499 = vmatprep.subr.bf16.mxu0 0
        %2500 = vmatpush1.bf16.msra.mxu0 %v1916
        %2501 = vmatprep.subr.bf16.mxu0 0
        %2502 = vmatpush1.bf16.msra.mxu0 %v1917
        %2503 = vmatprep.subr.bf16.mxu0 0
        %2504 = vmatpush1.bf16.msra.mxu0 %v1918
        %2505 = vmatprep.subr.bf16.mxu0 0
        %2506 = vmatpush1.bf16.msra.mxu0 %v1919
        %2507 = vmatprep.subr.bf16.mxu0 0
        %2508 = vmatpush1.bf16.msra.mxu0 %v1920
        %2509 = vmatprep.subr.bf16.mxu0 0
        %2510 = vmatpush1.bf16.msra.mxu0 %v1921
        %2511 = vmatprep.subr.bf16.mxu0 0
        %2512 = vmatpush1.bf16.msra.mxu0 %v1922
        %2513 = vmatprep.subr.bf16.mxu0 0
        %2514 = vmatpush1.bf16.msra.mxu0 %v1923
        %2515 = vmatprep.subr.bf16.mxu0 0
        %2516 = vmatpush1.bf16.msra.mxu0 %v1924
        %2517 = vmatprep.subr.bf16.mxu0 0
        %2518 = vmatpush1.bf16.msra.mxu0 %v1925
        %2519 = vmatprep.subr.bf16.mxu0 0
        %2520 = vmatpush1.bf16.msra.mxu0 %v1926
        %2521 = vmatprep.subr.bf16.mxu0 0
        %2522 = vmatpush1.bf16.msra.mxu0 %v1927
        %2523 = vmatprep.mubr.bf16.mxu0 %v1295
        %2524 = vmatmul.mubr.bf16.gmra.mrb[0].mxu0 %v1294
        %v2525 = vpop.f32.mrb[0].mxu0
        %v2526 = vadd.f32 %v2365, %v2525
        %v2527 = vpop.f32.mrb[0].mxu0
        %v2528 = vpop.f32.mrb[0].mxu0
        %v2529 = vadd.f32 %v2368, %v2528
        %v2530 = vpop.f32.mrb[0].mxu0
        %2531 = vmatprep.mubr.bf16.mxu0 %v1304
        %2532 = vmatmul.mubr.bf16.gmra.mrb[0].mxu0 %v1303
        %v2533 = vpop.f32.mrb[0].mxu0
        %v2534 = vadd.f32 %v2373, %v2533
        %v2535 = vpop.f32.mrb[0].mxu0
        %v2536 = vpop.f32.mrb[0].mxu0
        %v2537 = vadd.f32 %v2376, %v2536
        %v2538 = vpop.f32.mrb[0].mxu0
        %2539 = vmatprep.mubr.bf16.mxu0 %v1313
        %2540 = vmatmul.mubr.bf16.gmra.mrb[0].mxu0 %v1312
        %v2541 = vpop.f32.mrb[0].mxu0
        %v2542 = vadd.f32 %v2381, %v2541
        %v2543 = vpop.f32.mrb[0].mxu0
        %v2544 = vpop.f32.mrb[0].mxu0
        %v2545 = vadd.f32 %v2384, %v2544
        %v2546 = vpop.f32.mrb[0].mxu0
        %2547 = vmatprep.mubr.bf16.mxu0 %v1322
        %2548 = vmatmul.mubr.bf16.gmra.mrb[0].mxu0 %v1321
        %v2549 = vpop.f32.mrb[0].mxu0
        %v2550 = vadd.f32 %v2389, %v2549
        %v2551 = vpop.f32.mrb[0].mxu0
        %v2552 = vpop.f32.mrb[0].mxu0
        %v2553 = vadd.f32 %v2392, %v2552
        %v2554 = vpop.f32.mrb[0].mxu0
        %2555 = vmatprep.mubr.bf16.mxu0 %v1331
        %2556 = vmatmul.mubr.bf16.gmra.mrb[0].mxu0 %v1330
        %v2557 = vpop.f32.mrb[0].mxu0
        %v2558 = vadd.f32 %v2397, %v2557
        %v2559 = vpop.f32.mrb[0].mxu0
        %v2560 = vpop.f32.mrb[0].mxu0
        %v2561 = vadd.f32 %v2400, %v2560
        %v2562 = vpop.f32.mrb[0].mxu0
        %2563 = vmatprep.mubr.bf16.mxu0 %v1340
        %2564 = vmatmul.mubr.bf16.gmra.mrb[0].mxu0 %v1339
        %v2565 = vpop.f32.mrb[0].mxu0
        %v2566 = vadd.f32 %v2405, %v2565
        %v2567 = vpop.f32.mrb[0].mxu0
        %v2568 = vpop.f32.mrb[0].mxu0
        %v2569 = vadd.f32 %v2408, %v2568
        %v2570 = vpop.f32.mrb[0].mxu0
        %2571 = vmatprep.mubr.bf16.mxu0 %v1349
        %2572 = vmatmul.mubr.bf16.gmra.mrb[0].mxu0 %v1348
        %v2573 = vpop.f32.mrb[0].mxu0
        %v2574 = vadd.f32 %v2413, %v2573
        %v2575 = vpop.f32.mrb[0].mxu0
        %v2576 = vpop.f32.mrb[0].mxu0
        %v2577 = vadd.f32 %v2416, %v2576
        %v2578 = vpop.f32.mrb[0].mxu0
        %2579 = vmatprep.mubr.bf16.mxu0 %v1358
        %2580 = vmatmul.mubr.bf16.gmra.mrb[0].mxu0 %v1357
        %v2581 = vpop.f32.mrb[0].mxu0
        %v2582 = vadd.f32 %v2421, %v2581
        %v2583 = vpop.f32.mrb[0].mxu0
        %v2584 = vpop.f32.mrb[0].mxu0
        %v2585 = vadd.f32 %v2424, %v2584
        %v2586 = vpop.f32.mrb[0].mxu0
        %2587 = vmatprep.mubr.bf16.mxu0 %v1367
        %2588 = vmatmul.mubr.bf16.gmra.mrb[0].mxu0 %v1366
        %v2589 = vpop.f32.mrb[0].mxu0
        %v2590 = vadd.f32 %v2429, %v2589
        %v2591 = vpop.f32.mrb[0].mxu0
        %v2592 = vpop.f32.mrb[0].mxu0
        %v2593 = vadd.f32 %v2432, %v2592
        %v2594 = vpop.f32.mrb[0].mxu0
        %2595 = vmatprep.mubr.bf16.mxu0 %v1376
        %2596 = vmatmul.mubr.bf16.gmra.mrb[0].mxu0 %v1375
        %v2597 = vpop.f32.mrb[0].mxu0
        %v2598 = vadd.f32 %v2437, %v2597
        %v2599 = vpop.f32.mrb[0].mxu0
        %v2600 = vpop.f32.mrb[0].mxu0
        %v2601 = vadd.f32 %v2440, %v2600
        %v2602 = vpop.f32.mrb[0].mxu0
        %2603 = vmatprep.mubr.bf16.mxu0 %v1385
        %2604 = vmatmul.mubr.bf16.gmra.mrb[0].mxu0 %v1384
        %v2605 = vpop.f32.mrb[0].mxu0
        %v2606 = vadd.f32 %v2445, %v2605
        %v2607 = vpop.f32.mrb[0].mxu0
        %v2608 = vpop.f32.mrb[0].mxu0
        %v2609 = vadd.f32 %v2448, %v2608
        %v2610 = vpop.f32.mrb[0].mxu0
        %2611 = vmatprep.mubr.bf16.mxu0 %v1394
        %2612 = vmatmul.mubr.bf16.gmra.mrb[0].mxu0 %v1393
        %v2613 = vpop.f32.mrb[0].mxu0
        %v2614 = vadd.f32 %v2453, %v2613
        %v2615 = vpop.f32.mrb[0].mxu0
        %v2616 = vpop.f32.mrb[0].mxu0
        %v2617 = vadd.f32 %v2456, %v2616
        %v2618 = vpop.f32.mrb[0].mxu0
        %2619 = vmatprep.mubr.bf16.mxu0 %v1403
        %2620 = vmatmul.mubr.bf16.gmra.mrb[0].mxu0 %v1402
        %v2621 = vpop.f32.mrb[0].mxu0
        %v2622 = vadd.f32 %v2461, %v2621
        %v2623 = vpop.f32.mrb[0].mxu0
        %v2624 = vpop.f32.mrb[0].mxu0
        %v2625 = vadd.f32 %v2464, %v2624
        %v2626 = vpop.f32.mrb[0].mxu0
        %2627 = vmatprep.mubr.bf16.mxu0 %v1412
        %2628 = vmatmul.mubr.bf16.gmra.mrb[0].mxu0 %v1411
        %v2629 = vpop.f32.mrb[0].mxu0
        %v2630 = vadd.f32 %v2469, %v2629
        %v2631 = vpop.f32.mrb[0].mxu0
        %v2632 = vpop.f32.mrb[0].mxu0
        %v2633 = vadd.f32 %v2472, %v2632
        %v2634 = vpop.f32.mrb[0].mxu0
        %2635 = vmatprep.mubr.bf16.mxu0 %v1421
        %2636 = vmatmul.mubr.bf16.gmra.mrb[0].mxu0 %v1420
        %v2637 = vpop.f32.mrb[0].mxu0
        %v2638 = vadd.f32 %v2477, %v2637
        %v2639 = vpop.f32.mrb[0].mxu0
        %v2640 = vpop.f32.mrb[0].mxu0
        %v2641 = vadd.f32 %v2480, %v2640
        %v2642 = vpop.f32.mrb[0].mxu0
        %2643 = vmatprep.mubr.bf16.mxu0 %v1430
        %2644 = vmatmul.mubr.bf16.gmra.mrb[0].mxu0 %v1429
        %v2645 = vpop.f32.mrb[0].mxu0
        %v2646 = vadd.f32 %v2485, %v2645
        %v2647 = vpop.f32.mrb[0].mxu0
        %v2648 = vpop.f32.mrb[0].mxu0
        %v2649 = vadd.f32 %v2488, %v2648
        %v2650 = vpop.f32.mrb[0].mxu0
        %2651 = vdwg.mxu0
        %2652 = vmatprep.subr.bf16.mxu0 0
        %2653 = vmatpush1.bf16.msra.mxu0 %v1928
        %2654 = vmatprep.subr.bf16.mxu0 0
        %2655 = vmatpush1.bf16.msra.mxu0 %v1929
        %2656 = vmatprep.subr.bf16.mxu0 0
        %2657 = vmatpush1.bf16.msra.mxu0 %v1930
        %2658 = vmatprep.subr.bf16.mxu0 0
        %2659 = vmatpush1.bf16.msra.mxu0 %v1931
        %2660 = vmatprep.subr.bf16.mxu0 0
        %2661 = vmatpush1.bf16.msra.mxu0 %v1932
        %2662 = vmatprep.subr.bf16.mxu0 0
        %2663 = vmatpush1.bf16.msra.mxu0 %v1933
        %2664 = vmatprep.subr.bf16.mxu0 0
        %2665 = vmatpush1.bf16.msra.mxu0 %v1934
        %2666 = vmatprep.subr.bf16.mxu0 0
        %2667 = vmatpush1.bf16.msra.mxu0 %v1935
        %2668 = vmatprep.subr.bf16.mxu0 0
        %2669 = vmatpush1.bf16.msra.mxu0 0
        %2670 = vmatprep.subr.bf16.mxu0 0
        %2671 = vmatpush1.bf16.msra.mxu0 0
        %2672 = vmatprep.subr.bf16.mxu0 0
        %2673 = vmatpush1.bf16.msra.mxu0 0
        %2674 = vmatprep.subr.bf16.mxu0 0
        %2675 = vmatpush1.bf16.msra.mxu0 0
        %2676 = vmatprep.subr.bf16.mxu0 0
        %2677 = vmatpush1.bf16.msra.mxu0 0
        %2678 = vmatprep.subr.bf16.mxu0 0
        %2679 = vmatpush1.bf16.msra.mxu0 0
        %2680 = vmatprep.subr.bf16.mxu0 0
        %2681 = vmatpush1.bf16.msra.mxu0 0
        %2682 = vmatprep.subr.bf16.mxu0 0
        %2683 = vmatpush1.bf16.msra.mxu0 0
        %2684 = vmatprep.mubr.bf16.mxu0 0
        %2685 = vmatmul.mubr.bf16.gmra.mrb[0].mxu0 %v1296
        %v2686 = vpop.f32.mrb[0].mxu0
        %v2687 = vadd.f32 %v2526, %v2686
        %v2688 = vpop.f32.mrb[0].mxu0
        %v2689 = vpop.f32.mrb[0].mxu0
        %v2690 = vadd.f32 %v2529, %v2689
        %v2691 = vpop.f32.mrb[0].mxu0
        %2692 = vmatprep.mubr.bf16.mxu0 0
        %2693 = vmatmul.mubr.bf16.gmra.mrb[0].mxu0 %v1305
        %v2694 = vpop.f32.mrb[0].mxu0
        %v2695 = vadd.f32 %v2534, %v2694
        %v2696 = vpop.f32.mrb[0].mxu0
        %v2697 = vpop.f32.mrb[0].mxu0
        %v2698 = vadd.f32 %v2537, %v2697
        %v2699 = vpop.f32.mrb[0].mxu0
        %2700 = vmatprep.mubr.bf16.mxu0 0
        %2701 = vmatmul.mubr.bf16.gmra.mrb[0].mxu0 %v1314
        %v2702 = vpop.f32.mrb[0].mxu0
        %v2703 = vadd.f32 %v2542, %v2702
        %v2704 = vpop.f32.mrb[0].mxu0
        %v2705 = vpop.f32.mrb[0].mxu0
        %v2706 = vadd.f32 %v2545, %v2705
        %v2707 = vpop.f32.mrb[0].mxu0
        %2708 = vmatprep.mubr.bf16.mxu0 0
        %2709 = vmatmul.mubr.bf16.gmra.mrb[0].mxu0 %v1323
        %v2710 = vpop.f32.mrb[0].mxu0
        %v2711 = vadd.f32 %v2550, %v2710
        %v2712 = vpop.f32.mrb[0].mxu0
        %v2713 = vpop.f32.mrb[0].mxu0
        %v2714 = vadd.f32 %v2553, %v2713
        %v2715 = vpop.f32.mrb[0].mxu0
        %2716 = vmatprep.mubr.bf16.mxu0 0
        %2717 = vmatmul.mubr.bf16.gmra.mrb[0].mxu0 %v1332
        %v2718 = vpop.f32.mrb[0].mxu0
        %v2719 = vadd.f32 %v2558, %v2718
        %v2720 = vpop.f32.mrb[0].mxu0
        %v2721 = vpop.f32.mrb[0].mxu0
        %v2722 = vadd.f32 %v2561, %v2721
        %v2723 = vpop.f32.mrb[0].mxu0
        %2724 = vmatprep.mubr.bf16.mxu0 0
        %2725 = vmatmul.mubr.bf16.gmra.mrb[0].mxu0 %v1341
        %v2726 = vpop.f32.mrb[0].mxu0
        %v2727 = vadd.f32 %v2566, %v2726
        %v2728 = vpop.f32.mrb[0].mxu0
        %v2729 = vpop.f32.mrb[0].mxu0
        %v2730 = vadd.f32 %v2569, %v2729
        %v2731 = vpop.f32.mrb[0].mxu0
        %2732 = vmatprep.mubr.bf16.mxu0 0
        %2733 = vmatmul.mubr.bf16.gmra.mrb[0].mxu0 %v1350
        %v2734 = vpop.f32.mrb[0].mxu0
        %v2735 = vadd.f32 %v2574, %v2734
        %v2736 = vpop.f32.mrb[0].mxu0
        %v2737 = vpop.f32.mrb[0].mxu0
        %v2738 = vadd.f32 %v2577, %v2737
        %v2739 = vpop.f32.mrb[0].mxu0
        %2740 = vmatprep.mubr.bf16.mxu0 0
        %2741 = vmatmul.mubr.bf16.gmra.mrb[0].mxu0 %v1359
        %v2742 = vpop.f32.mrb[0].mxu0
        %v2743 = vadd.f32 %v2582, %v2742
        %v2744 = vpop.f32.mrb[0].mxu0
        %v2745 = vpop.f32.mrb[0].mxu0
        %v2746 = vadd.f32 %v2585, %v2745
        %v2747 = vpop.f32.mrb[0].mxu0
        %2748 = vmatprep.mubr.bf16.mxu0 0
        %2749 = vmatmul.mubr.bf16.gmra.mrb[0].mxu0 %v1368
        %v2750 = vpop.f32.mrb[0].mxu0
        %v2751 = vadd.f32 %v2590, %v2750
        %v2752 = vpop.f32.mrb[0].mxu0
        %v2753 = vpop.f32.mrb[0].mxu0
        %v2754 = vadd.f32 %v2593, %v2753
        %v2755 = vpop.f32.mrb[0].mxu0
        %2756 = vmatprep.mubr.bf16.mxu0 0
        %2757 = vmatmul.mubr.bf16.gmra.mrb[0].mxu0 %v1377
        %v2758 = vpop.f32.mrb[0].mxu0
        %v2759 = vadd.f32 %v2598, %v2758
        %v2760 = vpop.f32.mrb[0].mxu0
        %v2761 = vpop.f32.mrb[0].mxu0
        %v2762 = vadd.f32 %v2601, %v2761
        %v2763 = vpop.f32.mrb[0].mxu0
        %2764 = vmatprep.mubr.bf16.mxu0 0
        %2765 = vmatmul.mubr.bf16.gmra.mrb[0].mxu0 %v1386
        %v2766 = vpop.f32.mrb[0].mxu0
        %v2767 = vadd.f32 %v2606, %v2766
        %v2768 = vpop.f32.mrb[0].mxu0
        %v2769 = vpop.f32.mrb[0].mxu0
        %v2770 = vadd.f32 %v2609, %v2769
        %v2771 = vpop.f32.mrb[0].mxu0
        %2772 = vmatprep.mubr.bf16.mxu0 0
        %2773 = vmatmul.mubr.bf16.gmra.mrb[0].mxu0 %v1395
        %v2774 = vpop.f32.mrb[0].mxu0
        %v2775 = vadd.f32 %v2614, %v2774
        %v2776 = vpop.f32.mrb[0].mxu0
        %v2777 = vpop.f32.mrb[0].mxu0
        %v2778 = vadd.f32 %v2617, %v2777
        %v2779 = vpop.f32.mrb[0].mxu0
        %2780 = vmatprep.mubr.bf16.mxu0 0
        %2781 = vmatmul.mubr.bf16.gmra.mrb[0].mxu0 %v1404
        %v2782 = vpop.f32.mrb[0].mxu0
        %v2783 = vadd.f32 %v2622, %v2782
        %v2784 = vpop.f32.mrb[0].mxu0
        %v2785 = vpop.f32.mrb[0].mxu0
        %v2786 = vadd.f32 %v2625, %v2785
        %v2787 = vpop.f32.mrb[0].mxu0
        %2788 = vmatprep.mubr.bf16.mxu0 0
        %2789 = vmatmul.mubr.bf16.gmra.mrb[0].mxu0 %v1413
        %v2790 = vpop.f32.mrb[0].mxu0
        %v2791 = vadd.f32 %v2630, %v2790
        %v2792 = vpop.f32.mrb[0].mxu0
        %v2793 = vpop.f32.mrb[0].mxu0
        %v2794 = vadd.f32 %v2633, %v2793
        %v2795 = vpop.f32.mrb[0].mxu0
        %2796 = vmatprep.mubr.bf16.mxu0 0
        %2797 = vmatmul.mubr.bf16.gmra.mrb[0].mxu0 %v1422
        %v2798 = vpop.f32.mrb[0].mxu0
        %v2799 = vadd.f32 %v2638, %v2798
        %v2800 = vpop.f32.mrb[0].mxu0
        %v2801 = vpop.f32.mrb[0].mxu0
        %v2802 = vadd.f32 %v2641, %v2801
        %v2803 = vpop.f32.mrb[0].mxu0
        %2804 = vmatprep.mubr.bf16.mxu0 0
        %2805 = vmatmul.mubr.bf16.gmra.mrb[0].mxu0 %v1431
        %v2806 = vpop.f32.mrb[0].mxu0
        %v2807 = vadd.f32 %v2646, %v2806
        %v2808 = vpop.f32.mrb[0].mxu0
        %v2809 = vpop.f32.mrb[0].mxu0
        %v2810 = vadd.f32 %v2649, %v2809
        %v2811 = vpop.f32.mrb[0].mxu0
        %2812 = vdwg.mxu0
        %v2813 = vld [vmem:[%s2] sm:$0x1]
        %v2815 = vlaneseq
        %v2816 = vshrl.u32 %v2815, 7
        %v2817 = vsub.s32 0, %v2816
        %v2818 = vrot.slane %v2813, %v2817
        %v2820 = vmul.f32 %v2687, %v2818
        %v2821 = vmul.f32 %v2690, %v2818
        %v2822 = vmul.f32 %v2695, %v2818
        %v2823 = vmul.f32 %v2698, %v2818
        %v2824 = vmul.f32 %v2703, %v2818
        %v2825 = vmul.f32 %v2706, %v2818
        %v2826 = vmul.f32 %v2711, %v2818
        %v2827 = vmul.f32 %v2714, %v2818
        %v2828 = vmul.f32 %v2719, %v2818
        %v2829 = vmul.f32 %v2722, %v2818
        %v2830 = vmul.f32 %v2727, %v2818
        %v2831 = vmul.f32 %v2730, %v2818
        %v2832 = vmul.f32 %v2735, %v2818
        %v2833 = vmul.f32 %v2738, %v2818
        %v2834 = vmul.f32 %v2743, %v2818
        %v2835 = vmul.f32 %v2746, %v2818
        %v2836 = vmul.f32 %v2751, %v2818
        %v2837 = vmul.f32 %v2754, %v2818
        %v2838 = vmul.f32 %v2759, %v2818
        %v2839 = vmul.f32 %v2762, %v2818
        %v2840 = vmul.f32 %v2767, %v2818
        %v2841 = vmul.f32 %v2770, %v2818
        %v2842 = vmul.f32 %v2775, %v2818
        %v2843 = vmul.f32 %v2778, %v2818
        %v2844 = vmul.f32 %v2783, %v2818
        %v2845 = vmul.f32 %v2786, %v2818
        %v2846 = vmul.f32 %v2791, %v2818
        %v2847 = vmul.f32 %v2794, %v2818
        %v2848 = vmul.f32 %v2799, %v2818
        %v2849 = vmul.f32 %v2802, %v2818
        %v2850 = vmul.f32 %v2807, %v2818
        %v2851 = vmul.f32 %v2810, %v2818
        %v2852 = vld [vmem:[%s3] sm:$0x1]
        %v2854 = vlaneseq
        %v2855 = vshrl.u32 %v2854, 7
        %v2856 = vsub.s32 0, %v2855
        %v2857 = vrot.slane %v2852, %v2856
        %v2859 = vadd.f32 %v2820, %v2857
        %v2860 = vadd.f32 %v2821, %v2857
        %v2861 = vadd.f32 %v2822, %v2857
        %v2862 = vadd.f32 %v2823, %v2857
        %v2863 = vadd.f32 %v2824, %v2857
        %v2864 = vadd.f32 %v2825, %v2857
        %v2865 = vadd.f32 %v2826, %v2857
        %v2866 = vadd.f32 %v2827, %v2857
        %v2867 = vadd.f32 %v2828, %v2857
        %v2868 = vadd.f32 %v2829, %v2857
        %v2869 = vadd.f32 %v2830, %v2857
        %v2870 = vadd.f32 %v2831, %v2857
        %v2871 = vadd.f32 %v2832, %v2857
        %v2872 = vadd.f32 %v2833, %v2857
        %v2873 = vadd.f32 %v2834, %v2857
        %v2874 = vadd.f32 %v2835, %v2857
        %v2875 = vadd.f32 %v2836, %v2857
        %v2876 = vadd.f32 %v2837, %v2857
        %v2877 = vadd.f32 %v2838, %v2857
        %v2878 = vadd.f32 %v2839, %v2857
        %v2879 = vadd.f32 %v2840, %v2857
        %v2880 = vadd.f32 %v2841, %v2857
        %v2881 = vadd.f32 %v2842, %v2857
        %v2882 = vadd.f32 %v2843, %v2857
        %v2883 = vadd.f32 %v2844, %v2857
        %v2884 = vadd.f32 %v2845, %v2857
        %v2885 = vadd.f32 %v2846, %v2857
        %v2886 = vadd.f32 %v2847, %v2857
        %v2887 = vadd.f32 %v2848, %v2857
        %v2888 = vadd.f32 %v2849, %v2857
        %v2889 = vadd.f32 %v2850, %v2857
        %v2890 = vadd.f32 %v2851, %v2857
        %v2891 = vmax.f32 %v2859, 0.0
        %v2892 = vmax.f32 %v2860, 0.0
        %v2893 = vmax.f32 %v2861, 0.0
        %v2894 = vmax.f32 %v2862, 0.0
        %v2895 = vmax.f32 %v2863, 0.0
        %v2896 = vmax.f32 %v2864, 0.0
        %v2897 = vmax.f32 %v2865, 0.0
        %v2898 = vmax.f32 %v2866, 0.0
        %v2899 = vmax.f32 %v2867, 0.0
        %v2900 = vmax.f32 %v2868, 0.0
        %v2901 = vmax.f32 %v2869, 0.0
        %v2902 = vmax.f32 %v2870, 0.0
        %v2903 = vmax.f32 %v2871, 0.0
        %v2904 = vmax.f32 %v2872, 0.0
        %v2905 = vmax.f32 %v2873, 0.0
        %v2906 = vmax.f32 %v2874, 0.0
        %v2907 = vmax.f32 %v2875, 0.0
        %v2908 = vmax.f32 %v2876, 0.0
        %v2909 = vmax.f32 %v2877, 0.0
        %v2910 = vmax.f32 %v2878, 0.0
        %v2911 = vmax.f32 %v2879, 0.0
        %v2912 = vmax.f32 %v2880, 0.0
        %v2913 = vmax.f32 %v2881, 0.0
        %v2914 = vmax.f32 %v2882, 0.0
        %v2915 = vmax.f32 %v2883, 0.0
        %v2916 = vmax.f32 %v2884, 0.0
        %v2917 = vmax.f32 %v2885, 0.0
        %v2918 = vmax.f32 %v2886, 0.0
        %v2919 = vmax.f32 %v2887, 0.0
        %v2920 = vmax.f32 %v2888, 0.0
        %v2921 = vmax.f32 %v2889, 0.0
        %v2922 = vmax.f32 %v2890, 0.0
        %v2923 = vmin.f32 %v2891, 6.0
        %v2924 = vmin.f32 %v2892, 6.0
        %v2925 = vmin.f32 %v2893, 6.0
        %v2926 = vmin.f32 %v2894, 6.0
        %v2927 = vmin.f32 %v2895, 6.0
        %v2928 = vmin.f32 %v2896, 6.0
        %v2929 = vmin.f32 %v2897, 6.0
        %v2930 = vmin.f32 %v2898, 6.0
        %v2931 = vmin.f32 %v2899, 6.0
        %v2932 = vmin.f32 %v2900, 6.0
        %v2933 = vmin.f32 %v2901, 6.0
        %v2934 = vmin.f32 %v2902, 6.0
        %v2935 = vmin.f32 %v2903, 6.0
        %v2936 = vmin.f32 %v2904, 6.0
        %v2937 = vmin.f32 %v2905, 6.0
        %v2938 = vmin.f32 %v2906, 6.0
        %v2939 = vmin.f32 %v2907, 6.0
        %v2940 = vmin.f32 %v2908, 6.0
        %v2941 = vmin.f32 %v2909, 6.0
        %v2942 = vmin.f32 %v2910, 6.0
        %v2943 = vmin.f32 %v2911, 6.0
        %v2944 = vmin.f32 %v2912, 6.0
        %v2945 = vmin.f32 %v2913, 6.0
        %v2946 = vmin.f32 %v2914, 6.0
        %v2947 = vmin.f32 %v2915, 6.0
        %v2948 = vmin.f32 %v2916, 6.0
        %v2949 = vmin.f32 %v2917, 6.0
        %v2950 = vmin.f32 %v2918, 6.0
        %v2951 = vmin.f32 %v2919, 6.0
        %v2952 = vmin.f32 %v2920, 6.0
        %v2953 = vmin.f32 %v2921, 6.0
        %v2954 = vmin.f32 %v2922, 6.0
        %2955 = vst [vmem:[#allocation3] sm:$0xff] 0.0
        %2956 = vst [vmem:[#allocation3 + $0x8] sm:$0xff] 0.0
        %2957 = vst [vmem:[#allocation3 + $0x10] sm:$0x3] 0.0
        %s2958 = scalar_lea.vmem [#allocation3], 408
        %2959 = vst [vmem:[%s2958] sm:$0xff] 0.0
        %2960 = vst [vmem:[%s2958 + $0x8] sm:$0xff] 0.0
        %2961 = vst [vmem:[%s2958 + $0x10] sm:$0x3] 0.0
        %2962 = vst [vmem:[#allocation3] sm:$0x1] 0.0
        %2963 = vst [vmem:[#allocation3 + $0x18] sm:$0x1] 0.0
        %2964 = vst [vmem:[#allocation3 + $0x30] sm:$0x1] 0.0
        %2965 = vst [vmem:[#allocation3 + $0x48] sm:$0x1] 0.0
        %2966 = vst [vmem:[#allocation3 + $0x60] sm:$0x1] 0.0
        %2967 = vst [vmem:[#allocation3 + $0x78] sm:$0x1] 0.0
        %2968 = vst [vmem:[#allocation3 + $0x90] sm:$0x1] 0.0
        %2969 = vst [vmem:[#allocation3 + $0xa8] sm:$0x1] 0.0
        %2970 = vst [vmem:[#allocation3 + $0xc0] sm:$0x1] 0.0
        %2971 = vst [vmem:[#allocation3 + $0xd8] sm:$0x1] 0.0
        %2972 = vst [vmem:[#allocation3 + $0xf0] sm:$0x1] 0.0
        %2973 = vst [vmem:[#allocation3 + $0x108] sm:$0x1] 0.0
        %2974 = vst [vmem:[#allocation3 + $0x120] sm:$0x1] 0.0
        %2975 = vst [vmem:[#allocation3 + $0x138] sm:$0x1] 0.0
        %2976 = vst [vmem:[#allocation3 + $0x150] sm:$0x1] 0.0
        %2977 = vst [vmem:[#allocation3 + $0x168] sm:$0x1] 0.0
        %2978 = vst [vmem:[#allocation3 + $0x180] sm:$0x1] 0.0
        %2979 = vst [vmem:[#allocation3 + $0x198] sm:$0x1] 0.0
        %2980 = vst [vmem:[#allocation3 + $0x11] sm:$0x1] 0.0
        %2981 = vst [vmem:[#allocation3 + $0x29] sm:$0x1] 0.0
        %2982 = vst [vmem:[#allocation3 + $0x41] sm:$0x1] 0.0
        %2983 = vst [vmem:[#allocation3 + $0x59] sm:$0x1] 0.0
        %2984 = vst [vmem:[#allocation3 + $0x71] sm:$0x1] 0.0
        %2985 = vst [vmem:[#allocation3 + $0x89] sm:$0x1] 0.0
        %2986 = vst [vmem:[#allocation3 + $0xa1] sm:$0x1] 0.0
        %2987 = vst [vmem:[#allocation3 + $0xb9] sm:$0x1] 0.0
        %2988 = vst [vmem:[#allocation3 + $0xd1] sm:$0x1] 0.0
        %2989 = vst [vmem:[#allocation3 + $0xe9] sm:$0x1] 0.0
        %2990 = vst [vmem:[#allocation3 + $0x101] sm:$0x1] 0.0
        %2991 = vst [vmem:[#allocation3 + $0x119] sm:$0x1] 0.0
        %2992 = vst [vmem:[#allocation3 + $0x131] sm:$0x1] 0.0
        %2993 = vst [vmem:[#allocation3 + $0x149] sm:$0x1] 0.0
        %2994 = vst [vmem:[#allocation3 + $0x161] sm:$0x1] 0.0
        %2995 = vst [vmem:[#allocation3 + $0x179] sm:$0x1] 0.0
        %2996 = vst [vmem:[#allocation3 + $0x191] sm:$0x1] 0.0
        %2997 = vst [vmem:[#allocation3 + $0x1a9] sm:$0x1] 0.0
        %s2998 = scalar_lea.vmem [#allocation3], 24
        %2999 = vst [vmem:[%s2998 + $0x1] sm:$0xff] %v2923
        %3000 = vst [vmem:[%s2998 + $0x9] sm:$0xff] %v2924
        %3001 = vst [vmem:[%s2998 + $0x19] sm:$0xff] %v2925
        %3002 = vst [vmem:[%s2998 + $0x21] sm:$0xff] %v2926
        %3003 = vst [vmem:[%s2998 + $0x31] sm:$0xff] %v2927
        %3004 = vst [vmem:[%s2998 + $0x39] sm:$0xff] %v2928
        %3005 = vst [vmem:[%s2998 + $0x49] sm:$0xff] %v2929
        %3006 = vst [vmem:[%s2998 + $0x51] sm:$0xff] %v2930
        %3007 = vst [vmem:[%s2998 + $0x61] sm:$0xff] %v2931
        %3008 = vst [vmem:[%s2998 + $0x69] sm:$0xff] %v2932
        %3009 = vst [vmem:[%s2998 + $0x79] sm:$0xff] %v2933
        %3010 = vst [vmem:[%s2998 + $0x81] sm:$0xff] %v2934
        %3011 = vst [vmem:[%s2998 + $0x91] sm:$0xff] %v2935
        %3012 = vst [vmem:[%s2998 + $0x99] sm:$0xff] %v2936
        %3013 = vst [vmem:[%s2998 + $0xa9] sm:$0xff] %v2937
        %3014 = vst [vmem:[%s2998 + $0xb1] sm:$0xff] %v2938
        %3015 = vst [vmem:[%s2998 + $0xc1] sm:$0xff] %v2939
        %3016 = vst [vmem:[%s2998 + $0xc9] sm:$0xff] %v2940
        %3017 = vst [vmem:[%s2998 + $0xd9] sm:$0xff] %v2941
        %3018 = vst [vmem:[%s2998 + $0xe1] sm:$0xff] %v2942
        %3019 = vst [vmem:[%s2998 + $0xf1] sm:$0xff] %v2943
        %3020 = vst [vmem:[%s2998 + $0xf9] sm:$0xff] %v2944
        %3021 = vst [vmem:[%s2998 + $0x109] sm:$0xff] %v2945
        %3022 = vst [vmem:[%s2998 + $0x111] sm:$0xff] %v2946
        %3023 = vst [vmem:[%s2998 + $0x121] sm:$0xff] %v2947
        %3024 = vst [vmem:[%s2998 + $0x129] sm:$0xff] %v2948
        %3025 = vst [vmem:[%s2998 + $0x139] sm:$0xff] %v2949
        %3026 = vst [vmem:[%s2998 + $0x141] sm:$0xff] %v2950
        %3027 = vst [vmem:[%s2998 + $0x151] sm:$0xff] %v2951
        %3028 = vst [vmem:[%s2998 + $0x159] sm:$0xff] %v2952
        %3029 = vst [vmem:[%s2998 + $0x169] sm:$0xff] %v2953
        %3030 = vst [vmem:[%s2998 + $0x171] sm:$0xff] %v2954
        %v3031 = vld [vmem:[#allocation3] sm:$0xff]
        %v3032 = vld [vmem:[#allocation3 + $0x8] sm:$0xff]
        %v3033 = vld [vmem:[#allocation3 + $0x18] sm:$0xff]
        %v3034 = vld [vmem:[#allocation3 + $0x20] sm:$0xff]
        %v3035 = vld [vmem:[#allocation3 + $0x30] sm:$0xff]
        %v3036 = vld [vmem:[#allocation3 + $0x38] sm:$0xff]
        %v3037 = vld [vmem:[#allocation3 + $0x48] sm:$0xff]
        %v3038 = vld [vmem:[#allocation3 + $0x50] sm:$0xff]
        %v3039 = vld [vmem:[#allocation3 + $0x60] sm:$0xff]
        %v3040 = vld [vmem:[#allocation3 + $0x68] sm:$0xff]
        %v3041 = vld [vmem:[#allocation3 + $0x78] sm:$0xff]
        %v3042 = vld [vmem:[#allocation3 + $0x80] sm:$0xff]
        %v3043 = vld [vmem:[#allocation3 + $0x90] sm:$0xff]
        %v3044 = vld [vmem:[#allocation3 + $0x98] sm:$0xff]
        %v3045 = vld [vmem:[#allocation3 + $0xa8] sm:$0xff]
        %v3046 = vld [vmem:[#allocation3 + $0xb0] sm:$0xff]
        %v3047 = vld [vmem:[#allocation3 + $0xc0] sm:$0xff]
        %v3048 = vld [vmem:[#allocation3 + $0xc8] sm:$0xff]
        %v3049 = vld [vmem:[#allocation3 + $0xd8] sm:$0xff]
        %v3050 = vld [vmem:[#allocation3 + $0xe0] sm:$0xff]
        %v3051 = vld [vmem:[#allocation3 + $0xf0] sm:$0xff]
        %v3052 = vld [vmem:[#allocation3 + $0xf8] sm:$0xff]
        %v3053 = vld [vmem:[#allocation3 + $0x108] sm:$0xff]
        %v3054 = vld [vmem:[#allocation3 + $0x110] sm:$0xff]
        %v3055 = vld [vmem:[#allocation3 + $0x120] sm:$0xff]
        %v3056 = vld [vmem:[#allocation3 + $0x128] sm:$0xff]
        %v3057 = vld [vmem:[#allocation3 + $0x138] sm:$0xff]
        %v3058 = vld [vmem:[#allocation3 + $0x140] sm:$0xff]
        %v3059 = vld [vmem:[#allocation3 + $0x150] sm:$0xff]
        %v3060 = vld [vmem:[#allocation3 + $0x158] sm:$0xff]
        %v3061 = vld [vmem:[#allocation3 + $0x168] sm:$0xff]
        %v3062 = vld [vmem:[#allocation3 + $0x170] sm:$0xff]
        %v3063 = vpack.c.bf16 %v3032, %v3031
        %v3064 = vpack.c.bf16 %v3034, %v3033
        %v3065 = vpack.c.bf16 %v3036, %v3035
        %v3066 = vpack.c.bf16 %v3038, %v3037
        %v3067 = vpack.c.bf16 %v3040, %v3039
        %v3068 = vpack.c.bf16 %v3042, %v3041
        %v3069 = vpack.c.bf16 %v3044, %v3043
        %v3070 = vpack.c.bf16 %v3046, %v3045
        %v3071 = vpack.c.bf16 %v3048, %v3047
        %v3072 = vpack.c.bf16 %v3050, %v3049
        %v3073 = vpack.c.bf16 %v3052, %v3051
        %v3074 = vpack.c.bf16 %v3054, %v3053
        %v3075 = vpack.c.bf16 %v3056, %v3055
        %v3076 = vpack.c.bf16 %v3058, %v3057
        %v3077 = vpack.c.bf16 %v3060, %v3059
        %v3078 = vpack.c.bf16 %v3062, %v3061
        %3079 = vst [vmem:[#allocation2] sm:$0xff] %v3063
        %3080 = vst [vmem:[#allocation2 + $0x48] sm:$0xff] %v3064
        %3081 = vst [vmem:[#allocation2 + $0x90] sm:$0xff] %v3065
        %3082 = vst [vmem:[#allocation2 + $0xd8] sm:$0xff] %v3066
        %3083 = vst [vmem:[#allocation2 + $0x120] sm:$0xff] %v3067
        %3084 = vst [vmem:[#allocation2 + $0x168] sm:$0xff] %v3068
        %3085 = vst [vmem:[#allocation2 + $0x1b0] sm:$0xff] %v3069
        %3086 = vst [vmem:[#allocation2 + $0x1f8] sm:$0xff] %v3070
        %3087 = vst [vmem:[#allocation2 + $0x240] sm:$0xff] %v3071
        %3088 = vst [vmem:[#allocation2 + $0x288] sm:$0xff] %v3072
        %3089 = vst [vmem:[#allocation2 + $0x2d0] sm:$0xff] %v3073
        %3090 = vst [vmem:[#allocation2 + $0x318] sm:$0xff] %v3074
        %3091 = vst [vmem:[#allocation2 + $0x360] sm:$0xff] %v3075
        %3092 = vst [vmem:[#allocation2 + $0x3a8] sm:$0xff] %v3076
        %3093 = vst [vmem:[#allocation2 + $0x3f0] sm:$0xff] %v3077
        %3094 = vst [vmem:[#allocation2 + $0x438] sm:$0xff] %v3078
        %v3095 = vld [vmem:[#allocation3 + $0x1] sm:$0xff]
        %v3096 = vld [vmem:[#allocation3 + $0x9] sm:$0xff]
        %v3097 = vld [vmem:[#allocation3 + $0x19] sm:$0xff]
        %v3098 = vld [vmem:[#allocation3 + $0x21] sm:$0xff]
        %v3099 = vld [vmem:[#allocation3 + $0x31] sm:$0xff]
        %v3100 = vld [vmem:[#allocation3 + $0x39] sm:$0xff]
        %v3101 = vld [vmem:[#allocation3 + $0x49] sm:$0xff]
        %v3102 = vld [vmem:[#allocation3 + $0x51] sm:$0xff]
        %v3103 = vld [vmem:[#allocation3 + $0x61] sm:$0xff]
        %v3104 = vld [vmem:[#allocation3 + $0x69] sm:$0xff]
        %v3105 = vld [vmem:[#allocation3 + $0x79] sm:$0xff]
        %v3106 = vld [vmem:[#allocation3 + $0x81] sm:$0xff]
        %v3107 = vld [vmem:[#allocation3 + $0x91] sm:$0xff]
        %v3108 = vld [vmem:[#allocation3 + $0x99] sm:$0xff]
        %v3109 = vld [vmem:[#allocation3 + $0xa9] sm:$0xff]
        %v3110 = vld [vmem:[#allocation3 + $0xb1] sm:$0xff]
        %v3111 = vld [vmem:[#allocation3 + $0xc1] sm:$0xff]
        %v3112 = vld [vmem:[#allocation3 + $0xc9] sm:$0xff]
        %v3113 = vld [vmem:[#allocation3 + $0xd9] sm:$0xff]
        %v3114 = vld [vmem:[#allocation3 + $0xe1] sm:$0xff]
        %v3115 = vld [vmem:[#allocation3 + $0xf1] sm:$0xff]
        %v3116 = vld [vmem:[#allocation3 + $0xf9] sm:$0xff]
        %v3117 = vld [vmem:[#allocation3 + $0x109] sm:$0xff]
        %v3118 = vld [vmem:[#allocation3 + $0x111] sm:$0xff]
        %v3119 = vld [vmem:[#allocation3 + $0x121] sm:$0xff]
        %v3120 = vld [vmem:[#allocation3 + $0x129] sm:$0xff]
        %v3121 = vld [vmem:[#allocation3 + $0x139] sm:$0xff]
        %v3122 = vld [vmem:[#allocation3 + $0x141] sm:$0xff]
        %v3123 = vld [vmem:[#allocation3 + $0x151] sm:$0xff]
        %v3124 = vld [vmem:[#allocation3 + $0x159] sm:$0xff]
        %v3125 = vld [vmem:[#allocation3 + $0x169] sm:$0xff]
        %v3126 = vld [vmem:[#allocation3 + $0x171] sm:$0xff]
        %v3127 = vpack.c.bf16 %v3096, %v3095
        %v3128 = vpack.c.bf16 %v3098, %v3097
        %v3129 = vpack.c.bf16 %v3100, %v3099
        %v3130 = vpack.c.bf16 %v3102, %v3101
        %v3131 = vpack.c.bf16 %v3104, %v3103
        %v3132 = vpack.c.bf16 %v3106, %v3105
        %v3133 = vpack.c.bf16 %v3108, %v3107
        %v3134 = vpack.c.bf16 %v3110, %v3109
        %v3135 = vpack.c.bf16 %v3112, %v3111
        %v3136 = vpack.c.bf16 %v3114, %v3113
        %v3137 = vpack.c.bf16 %v3116, %v3115
        %v3138 = vpack.c.bf16 %v3118, %v3117
        %v3139 = vpack.c.bf16 %v3120, %v3119
        %v3140 = vpack.c.bf16 %v3122, %v3121
        %v3141 = vpack.c.bf16 %v3124, %v3123
        %v3142 = vpack.c.bf16 %v3126, %v3125
        %3143 = vst [vmem:[#allocation2 + $0x8] sm:$0xff] %v3127
        %3144 = vst [vmem:[#allocation2 + $0x50] sm:$0xff] %v3128
        %3145 = vst [vmem:[#allocation2 + $0x98] sm:$0xff] %v3129
        %3146 = vst [vmem:[#allocation2 + $0xe0] sm:$0xff] %v3130
        %3147 = vst [vmem:[#allocation2 + $0x128] sm:$0xff] %v3131
        %3148 = vst [vmem:[#allocation2 + $0x170] sm:$0xff] %v3132
        %3149 = vst [vmem:[#allocation2 + $0x1b8] sm:$0xff] %v3133
        %3150 = vst [vmem:[#allocation2 + $0x200] sm:$0xff] %v3134
        %3151 = vst [vmem:[#allocation2 + $0x248] sm:$0xff] %v3135
        %3152 = vst [vmem:[#allocation2 + $0x290] sm:$0xff] %v3136
        %3153 = vst [vmem:[#allocation2 + $0x2d8] sm:$0xff] %v3137
        %3154 = vst [vmem:[#allocation2 + $0x320] sm:$0xff] %v3138
        %3155 = vst [vmem:[#allocation2 + $0x368] sm:$0xff] %v3139
        %3156 = vst [vmem:[#allocation2 + $0x3b0] sm:$0xff] %v3140
        %3157 = vst [vmem:[#allocation2 + $0x3f8] sm:$0xff] %v3141
        %3158 = vst [vmem:[#allocation2 + $0x440] sm:$0xff] %v3142
        %v3159 = vld [vmem:[#allocation3 + $0x2] sm:$0xff]
        %v3160 = vld [vmem:[#allocation3 + $0xa] sm:$0xff]
        %v3161 = vld [vmem:[#allocation3 + $0x1a] sm:$0xff]
        %v3162 = vld [vmem:[#allocation3 + $0x22] sm:$0xff]
        %v3163 = vld [vmem:[#allocation3 + $0x32] sm:$0xff]
        %v3164 = vld [vmem:[#allocation3 + $0x3a] sm:$0xff]
        %v3165 = vld [vmem:[#allocation3 + $0x4a] sm:$0xff]
        %v3166 = vld [vmem:[#allocation3 + $0x52] sm:$0xff]
        %v3167 = vld [vmem:[#allocation3 + $0x62] sm:$0xff]
        %v3168 = vld [vmem:[#allocation3 + $0x6a] sm:$0xff]
        %v3169 = vld [vmem:[#allocation3 + $0x7a] sm:$0xff]
        %v3170 = vld [vmem:[#allocation3 + $0x82] sm:$0xff]
        %v3171 = vld [vmem:[#allocation3 + $0x92] sm:$0xff]
        %v3172 = vld [vmem:[#allocation3 + $0x9a] sm:$0xff]
        %v3173 = vld [vmem:[#allocation3 + $0xaa] sm:$0xff]
        %v3174 = vld [vmem:[#allocation3 + $0xb2] sm:$0xff]
        %v3175 = vld [vmem:[#allocation3 + $0xc2] sm:$0xff]
        %v3176 = vld [vmem:[#allocation3 + $0xca] sm:$0xff]
        %v3177 = vld [vmem:[#allocation3 + $0xda] sm:$0xff]
        %v3178 = vld [vmem:[#allocation3 + $0xe2] sm:$0xff]
        %v3179 = vld [vmem:[#allocation3 + $0xf2] sm:$0xff]
        %v3180 = vld [vmem:[#allocation3 + $0xfa] sm:$0xff]
        %v3181 = vld [vmem:[#allocation3 + $0x10a] sm:$0xff]
        %v3182 = vld [vmem:[#allocation3 + $0x112] sm:$0xff]
        %v3183 = vld [vmem:[#allocation3 + $0x122] sm:$0xff]
        %v3184 = vld [vmem:[#allocation3 + $0x12a] sm:$0xff]
        %v3185 = vld [vmem:[#allocation3 + $0x13a] sm:$0xff]
        %v3186 = vld [vmem:[#allocation3 + $0x142] sm:$0xff]
        %v3187 = vld [vmem:[#allocation3 + $0x152] sm:$0xff]
        %v3188 = vld [vmem:[#allocation3 + $0x15a] sm:$0xff]
        %v3189 = vld [vmem:[#allocation3 + $0x16a] sm:$0xff]
        %v3190 = vld [vmem:[#allocation3 + $0x172] sm:$0xff]
        %v3191 = vpack.c.bf16 %v3160, %v3159
        %v3192 = vpack.c.bf16 %v3162, %v3161
        %v3193 = vpack.c.bf16 %v3164, %v3163
        %v3194 = vpack.c.bf16 %v3166, %v3165
        %v3195 = vpack.c.bf16 %v3168, %v3167
        %v3196 = vpack.c.bf16 %v3170, %v3169
        %v3197 = vpack.c.bf16 %v3172, %v3171
        %v3198 = vpack.c.bf16 %v3174, %v3173
        %v3199 = vpack.c.bf16 %v3176, %v3175
        %v3200 = vpack.c.bf16 %v3178, %v3177
        %v3201 = vpack.c.bf16 %v3180, %v3179
        %v3202 = vpack.c.bf16 %v3182, %v3181
        %v3203 = vpack.c.bf16 %v3184, %v3183
        %v3204 = vpack.c.bf16 %v3186, %v3185
        %v3205 = vpack.c.bf16 %v3188, %v3187
        %v3206 = vpack.c.bf16 %v3190, %v3189
        %3207 = vst [vmem:[#allocation2 + $0x10] sm:$0xff] %v3191
        %3208 = vst [vmem:[#allocation2 + $0x58] sm:$0xff] %v3192
        %3209 = vst [vmem:[#allocation2 + $0xa0] sm:$0xff] %v3193
        %3210 = vst [vmem:[#allocation2 + $0xe8] sm:$0xff] %v3194
        %3211 = vst [vmem:[#allocation2 + $0x130] sm:$0xff] %v3195
        %3212 = vst [vmem:[#allocation2 + $0x178] sm:$0xff] %v3196
        %3213 = vst [vmem:[#allocation2 + $0x1c0] sm:$0xff] %v3197
        %3214 = vst [vmem:[#allocation2 + $0x208] sm:$0xff] %v3198
        %3215 = vst [vmem:[#allocation2 + $0x250] sm:$0xff] %v3199
        %3216 = vst [vmem:[#allocation2 + $0x298] sm:$0xff] %v3200
        %3217 = vst [vmem:[#allocation2 + $0x2e0] sm:$0xff] %v3201
        %3218 = vst [vmem:[#allocation2 + $0x328] sm:$0xff] %v3202
        %3219 = vst [vmem:[#allocation2 + $0x370] sm:$0xff] %v3203
        %3220 = vst [vmem:[#allocation2 + $0x3b8] sm:$0xff] %v3204
        %3221 = vst [vmem:[#allocation2 + $0x400] sm:$0xff] %v3205
        %3222 = vst [vmem:[#allocation2 + $0x448] sm:$0xff] %v3206
        %v3223 = vld [vmem:[%s2998] sm:$0xff]
        %v3224 = vld [vmem:[%s2998 + $0x8] sm:$0xff]
        %v3225 = vld [vmem:[%s2998 + $0x18] sm:$0xff]
        %v3226 = vld [vmem:[%s2998 + $0x20] sm:$0xff]
        %v3227 = vld [vmem:[%s2998 + $0x30] sm:$0xff]
        %v3228 = vld [vmem:[%s2998 + $0x38] sm:$0xff]
        %v3229 = vld [vmem:[%s2998 + $0x48] sm:$0xff]
        %v3230 = vld [vmem:[%s2998 + $0x50] sm:$0xff]
        %v3231 = vld [vmem:[%s2998 + $0x60] sm:$0xff]
        %v3232 = vld [vmem:[%s2998 + $0x68] sm:$0xff]
        %v3233 = vld [vmem:[%s2998 + $0x78] sm:$0xff]
        %v3234 = vld [vmem:[%s2998 + $0x80] sm:$0xff]
        %v3235 = vld [vmem:[%s2998 + $0x90] sm:$0xff]
        %v3236 = vld [vmem:[%s2998 + $0x98] sm:$0xff]
        %v3237 = vld [vmem:[%s2998 + $0xa8] sm:$0xff]
        %v3238 = vld [vmem:[%s2998 + $0xb0] sm:$0xff]
        %v3239 = vld [vmem:[%s2998 + $0xc0] sm:$0xff]
        %v3240 = vld [vmem:[%s2998 + $0xc8] sm:$0xff]
        %v3241 = vld [vmem:[%s2998 + $0xd8] sm:$0xff]
        %v3242 = vld [vmem:[%s2998 + $0xe0] sm:$0xff]
        %v3243 = vld [vmem:[%s2998 + $0xf0] sm:$0xff]
        %v3244 = vld [vmem:[%s2998 + $0xf8] sm:$0xff]
        %v3245 = vld [vmem:[%s2998 + $0x108] sm:$0xff]
        %v3246 = vld [vmem:[%s2998 + $0x110] sm:$0xff]
        %v3247 = vld [vmem:[%s2998 + $0x120] sm:$0xff]
        %v3248 = vld [vmem:[%s2998 + $0x128] sm:$0xff]
        %v3249 = vld [vmem:[%s2998 + $0x138] sm:$0xff]
        %v3250 = vld [vmem:[%s2998 + $0x140] sm:$0xff]
        %v3251 = vld [vmem:[%s2998 + $0x150] sm:$0xff]
        %v3252 = vld [vmem:[%s2998 + $0x158] sm:$0xff]
        %v3253 = vld [vmem:[%s2998 + $0x168] sm:$0xff]
        %v3254 = vld [vmem:[%s2998 + $0x170] sm:$0xff]
        %v3255 = vpack.c.bf16 %v3224, %v3223
        %v3256 = vpack.c.bf16 %v3226, %v3225
        %v3257 = vpack.c.bf16 %v3228, %v3227
        %v3258 = vpack.c.bf16 %v3230, %v3229
        %v3259 = vpack.c.bf16 %v3232, %v3231
        %v3260 = vpack.c.bf16 %v3234, %v3233
        %v3261 = vpack.c.bf16 %v3236, %v3235
        %v3262 = vpack.c.bf16 %v3238, %v3237
        %v3263 = vpack.c.bf16 %v3240, %v3239
        %v3264 = vpack.c.bf16 %v3242, %v3241
        %v3265 = vpack.c.bf16 %v3244, %v3243
        %v3266 = vpack.c.bf16 %v3246, %v3245
        %v3267 = vpack.c.bf16 %v3248, %v3247
        %v3268 = vpack.c.bf16 %v3250, %v3249
        %v3269 = vpack.c.bf16 %v3252, %v3251
        %v3270 = vpack.c.bf16 %v3254, %v3253
        %3271 = vst [vmem:[#allocation2 + $0x18] sm:$0xff] %v3255
        %3272 = vst [vmem:[#allocation2 + $0x60] sm:$0xff] %v3256
        %3273 = vst [vmem:[#allocation2 + $0xa8] sm:$0xff] %v3257
        %3274 = vst [vmem:[#allocation2 + $0xf0] sm:$0xff] %v3258
        %3275 = vst [vmem:[#allocation2 + $0x138] sm:$0xff] %v3259
        %3276 = vst [vmem:[#allocation2 + $0x180] sm:$0xff] %v3260
        %3277 = vst [vmem:[#allocation2 + $0x1c8] sm:$0xff] %v3261
        %3278 = vst [vmem:[#allocation2 + $0x210] sm:$0xff] %v3262
        %3279 = vst [vmem:[#allocation2 + $0x258] sm:$0xff] %v3263
        %3280 = vst [vmem:[#allocation2 + $0x2a0] sm:$0xff] %v3264
        %3281 = vst [vmem:[#allocation2 + $0x2e8] sm:$0xff] %v3265
        %3282 = vst [vmem:[#allocation2 + $0x330] sm:$0xff] %v3266
        %3283 = vst [vmem:[#allocation2 + $0x378] sm:$0xff] %v3267
        %3284 = vst [vmem:[#allocation2 + $0x3c0] sm:$0xff] %v3268
        %3285 = vst [vmem:[#allocation2 + $0x408] sm:$0xff] %v3269
        %3286 = vst [vmem:[#allocation2 + $0x450] sm:$0xff] %v3270
        %v3287 = vld [vmem:[%s2998 + $0x1] sm:$0xff]
        %v3288 = vld [vmem:[%s2998 + $0x9] sm:$0xff]
        %v3289 = vld [vmem:[%s2998 + $0x19] sm:$0xff]
        %v3290 = vld [vmem:[%s2998 + $0x21] sm:$0xff]
        %v3291 = vld [vmem:[%s2998 + $0x31] sm:$0xff]
        %v3292 = vld [vmem:[%s2998 + $0x39] sm:$0xff]
        %v3293 = vld [vmem:[%s2998 + $0x49] sm:$0xff]
        %v3294 = vld [vmem:[%s2998 + $0x51] sm:$0xff]
        %v3295 = vld [vmem:[%s2998 + $0x61] sm:$0xff]
        %v3296 = vld [vmem:[%s2998 + $0x69] sm:$0xff]
        %v3297 = vld [vmem:[%s2998 + $0x79] sm:$0xff]
        %v3298 = vld [vmem:[%s2998 + $0x81] sm:$0xff]
        %v3299 = vld [vmem:[%s2998 + $0x91] sm:$0xff]
        %v3300 = vld [vmem:[%s2998 + $0x99] sm:$0xff]
        %v3301 = vld [vmem:[%s2998 + $0xa9] sm:$0xff]
        %v3302 = vld [vmem:[%s2998 + $0xb1] sm:$0xff]
        %v3303 = vld [vmem:[%s2998 + $0xc1] sm:$0xff]
        %v3304 = vld [vmem:[%s2998 + $0xc9] sm:$0xff]
        %v3305 = vld [vmem:[%s2998 + $0xd9] sm:$0xff]
        %v3306 = vld [vmem:[%s2998 + $0xe1] sm:$0xff]
        %v3307 = vld [vmem:[%s2998 + $0xf1] sm:$0xff]
        %v3308 = vld [vmem:[%s2998 + $0xf9] sm:$0xff]
        %v3309 = vld [vmem:[%s2998 + $0x109] sm:$0xff]
        %v3310 = vld [vmem:[%s2998 + $0x111] sm:$0xff]
        %v3311 = vld [vmem:[%s2998 + $0x121] sm:$0xff]
        %v3312 = vld [vmem:[%s2998 + $0x129] sm:$0xff]
        %v3313 = vld [vmem:[%s2998 + $0x139] sm:$0xff]
        %v3314 = vld [vmem:[%s2998 + $0x141] sm:$0xff]
        %v3315 = vld [vmem:[%s2998 + $0x151] sm:$0xff]
        %v3316 = vld [vmem:[%s2998 + $0x159] sm:$0xff]
        %v3317 = vld [vmem:[%s2998 + $0x169] sm:$0xff]
        %v3318 = vld [vmem:[%s2998 + $0x171] sm:$0xff]
        %v3319 = vpack.c.bf16 %v3288, %v3287
        %v3320 = vpack.c.bf16 %v3290, %v3289
        %v3321 = vpack.c.bf16 %v3292, %v3291
        %v3322 = vpack.c.bf16 %v3294, %v3293
        %v3323 = vpack.c.bf16 %v3296, %v3295
        %v3324 = vpack.c.bf16 %v3298, %v3297
        %v3325 = vpack.c.bf16 %v3300, %v3299
        %v3326 = vpack.c.bf16 %v3302, %v3301
        %v3327 = vpack.c.bf16 %v3304, %v3303
        %v3328 = vpack.c.bf16 %v3306, %v3305
        %v3329 = vpack.c.bf16 %v3308, %v3307
        %v3330 = vpack.c.bf16 %v3310, %v3309
        %v3331 = vpack.c.bf16 %v3312, %v3311
        %v3332 = vpack.c.bf16 %v3314, %v3313
        %v3333 = vpack.c.bf16 %v3316, %v3315
        %v3334 = vpack.c.bf16 %v3318, %v3317
        %3335 = vst [vmem:[#allocation2 + $0x20] sm:$0xff] %v3319
        %3336 = vst [vmem:[#allocation2 + $0x68] sm:$0xff] %v3320
        %3337 = vst [vmem:[#allocation2 + $0xb0] sm:$0xff] %v3321
        %3338 = vst [vmem:[#allocation2 + $0xf8] sm:$0xff] %v3322
        %3339 = vst [vmem:[#allocation2 + $0x140] sm:$0xff] %v3323
        %3340 = vst [vmem:[#allocation2 + $0x188] sm:$0xff] %v3324
        %3341 = vst [vmem:[#allocation2 + $0x1d0] sm:$0xff] %v3325
        %3342 = vst [vmem:[#allocation2 + $0x218] sm:$0xff] %v3326
        %3343 = vst [vmem:[#allocation2 + $0x260] sm:$0xff] %v3327
        %3344 = vst [vmem:[#allocation2 + $0x2a8] sm:$0xff] %v3328
        %3345 = vst [vmem:[#allocation2 + $0x2f0] sm:$0xff] %v3329
        %3346 = vst [vmem:[#allocation2 + $0x338] sm:$0xff] %v3330
        %3347 = vst [vmem:[#allocation2 + $0x380] sm:$0xff] %v3331
        %3348 = vst [vmem:[#allocation2 + $0x3c8] sm:$0xff] %v3332
        %3349 = vst [vmem:[#allocation2 + $0x410] sm:$0xff] %v3333
        %3350 = vst [vmem:[#allocation2 + $0x458] sm:$0xff] %v3334
        %v3351 = vld [vmem:[%s2998 + $0x2] sm:$0xff]
        %v3352 = vld [vmem:[%s2998 + $0xa] sm:$0xff]
        %v3353 = vld [vmem:[%s2998 + $0x1a] sm:$0xff]
        %v3354 = vld [vmem:[%s2998 + $0x22] sm:$0xff]
        %v3355 = vld [vmem:[%s2998 + $0x32] sm:$0xff]
        %v3356 = vld [vmem:[%s2998 + $0x3a] sm:$0xff]
        %v3357 = vld [vmem:[%s2998 + $0x4a] sm:$0xff]
        %v3358 = vld [vmem:[%s2998 + $0x52] sm:$0xff]
        %v3359 = vld [vmem:[%s2998 + $0x62] sm:$0xff]
        %v3360 = vld [vmem:[%s2998 + $0x6a] sm:$0xff]
        %v3361 = vld [vmem:[%s2998 + $0x7a] sm:$0xff]
        %v3362 = vld [vmem:[%s2998 + $0x82] sm:$0xff]
        %v3363 = vld [vmem:[%s2998 + $0x92] sm:$0xff]
        %v3364 = vld [vmem:[%s2998 + $0x9a] sm:$0xff]
        %v3365 = vld [vmem:[%s2998 + $0xaa] sm:$0xff]
        %v3366 = vld [vmem:[%s2998 + $0xb2] sm:$0xff]
        %v3367 = vld [vmem:[%s2998 + $0xc2] sm:$0xff]
        %v3368 = vld [vmem:[%s2998 + $0xca] sm:$0xff]
        %v3369 = vld [vmem:[%s2998 + $0xda] sm:$0xff]
        %v3370 = vld [vmem:[%s2998 + $0xe2] sm:$0xff]
        %v3371 = vld [vmem:[%s2998 + $0xf2] sm:$0xff]
        %v3372 = vld [vmem:[%s2998 + $0xfa] sm:$0xff]
        %v3373 = vld [vmem:[%s2998 + $0x10a] sm:$0xff]
        %v3374 = vld [vmem:[%s2998 + $0x112] sm:$0xff]
        %v3375 = vld [vmem:[%s2998 + $0x122] sm:$0xff]
        %v3376 = vld [vmem:[%s2998 + $0x12a] sm:$0xff]
        %v3377 = vld [vmem:[%s2998 + $0x13a] sm:$0xff]
        %v3378 = vld [vmem:[%s2998 + $0x142] sm:$0xff]
        %v3379 = vld [vmem:[%s2998 + $0x152] sm:$0xff]
        %v3380 = vld [vmem:[%s2998 + $0x15a] sm:$0xff]
        %v3381 = vld [vmem:[%s2998 + $0x16a] sm:$0xff]
        %v3382 = vld [vmem:[%s2998 + $0x172] sm:$0xff]
        %v3383 = vpack.c.bf16 %v3352, %v3351
        %v3384 = vpack.c.bf16 %v3354, %v3353
        %v3385 = vpack.c.bf16 %v3356, %v3355
        %v3386 = vpack.c.bf16 %v3358, %v3357
        %v3387 = vpack.c.bf16 %v3360, %v3359
        %v3388 = vpack.c.bf16 %v3362, %v3361
        %v3389 = vpack.c.bf16 %v3364, %v3363
        %v3390 = vpack.c.bf16 %v3366, %v3365
        %v3391 = vpack.c.bf16 %v3368, %v3367
        %v3392 = vpack.c.bf16 %v3370, %v3369
        %v3393 = vpack.c.bf16 %v3372, %v3371
        %v3394 = vpack.c.bf16 %v3374, %v3373
        %v3395 = vpack.c.bf16 %v3376, %v3375
        %v3396 = vpack.c.bf16 %v3378, %v3377
        %v3397 = vpack.c.bf16 %v3380, %v3379
        %v3398 = vpack.c.bf16 %v3382, %v3381
        %3399 = vst [vmem:[#allocation2 + $0x28] sm:$0xff] %v3383
        %3400 = vst [vmem:[#allocation2 + $0x70] sm:$0xff] %v3384
        %3401 = vst [vmem:[#allocation2 + $0xb8] sm:$0xff] %v3385
        %3402 = vst [vmem:[#allocation2 + $0x100] sm:$0xff] %v3386
        %3403 = vst [vmem:[#allocation2 + $0x148] sm:$0xff] %v3387
        %3404 = vst [vmem:[#allocation2 + $0x190] sm:$0xff] %v3388
        %3405 = vst [vmem:[#allocation2 + $0x1d8] sm:$0xff] %v3389
        %3406 = vst [vmem:[#allocation2 + $0x220] sm:$0xff] %v3390
        %3407 = vst [vmem:[#allocation2 + $0x268] sm:$0xff] %v3391
        %3408 = vst [vmem:[#allocation2 + $0x2b0] sm:$0xff] %v3392
        %3409 = vst [vmem:[#allocation2 + $0x2f8] sm:$0xff] %v3393
        %3410 = vst [vmem:[#allocation2 + $0x340] sm:$0xff] %v3394
        %3411 = vst [vmem:[#allocation2 + $0x388] sm:$0xff] %v3395
        %3412 = vst [vmem:[#allocation2 + $0x3d0] sm:$0xff] %v3396
        %3413 = vst [vmem:[#allocation2 + $0x418] sm:$0xff] %v3397
        %3414 = vst [vmem:[#allocation2 + $0x460] sm:$0xff] %v3398
        %s3415 = scalar_lea.vmem [#allocation3], 48
        %v3416 = vld [vmem:[%s3415] sm:$0xff]
        %v3417 = vld [vmem:[%s3415 + $0x8] sm:$0xff]
        %v3418 = vld [vmem:[%s3415 + $0x18] sm:$0xff]
        %v3419 = vld [vmem:[%s3415 + $0x20] sm:$0xff]
        %v3420 = vld [vmem:[%s3415 + $0x30] sm:$0xff]
        %v3421 = vld [vmem:[%s3415 + $0x38] sm:$0xff]
        %v3422 = vld [vmem:[%s3415 + $0x48] sm:$0xff]
        %v3423 = vld [vmem:[%s3415 + $0x50] sm:$0xff]
        %v3424 = vld [vmem:[%s3415 + $0x60] sm:$0xff]
        %v3425 = vld [vmem:[%s3415 + $0x68] sm:$0xff]
        %v3426 = vld [vmem:[%s3415 + $0x78] sm:$0xff]
        %v3427 = vld [vmem:[%s3415 + $0x80] sm:$0xff]
        %v3428 = vld [vmem:[%s3415 + $0x90] sm:$0xff]
        %v3429 = vld [vmem:[%s3415 + $0x98] sm:$0xff]
        %v3430 = vld [vmem:[%s3415 + $0xa8] sm:$0xff]
        %v3431 = vld [vmem:[%s3415 + $0xb0] sm:$0xff]
        %v3432 = vld [vmem:[%s3415 + $0xc0] sm:$0xff]
        %v3433 = vld [vmem:[%s3415 + $0xc8] sm:$0xff]
        %v3434 = vld [vmem:[%s3415 + $0xd8] sm:$0xff]
        %v3435 = vld [vmem:[%s3415 + $0xe0] sm:$0xff]
        %v3436 = vld [vmem:[%s3415 + $0xf0] sm:$0xff]
        %v3437 = vld [vmem:[%s3415 + $0xf8] sm:$0xff]
        %v3438 = vld [vmem:[%s3415 + $0x108] sm:$0xff]
        %v3439 = vld [vmem:[%s3415 + $0x110] sm:$0xff]
        %v3440 = vld [vmem:[%s3415 + $0x120] sm:$0xff]
        %v3441 = vld [vmem:[%s3415 + $0x128] sm:$0xff]
        %v3442 = vld [vmem:[%s3415 + $0x138] sm:$0xff]
        %v3443 = vld [vmem:[%s3415 + $0x140] sm:$0xff]
        %v3444 = vld [vmem:[%s3415 + $0x150] sm:$0xff]
        %v3445 = vld [vmem:[%s3415 + $0x158] sm:$0xff]
        %v3446 = vld [vmem:[%s3415 + $0x168] sm:$0xff]
        %v3447 = vld [vmem:[%s3415 + $0x170] sm:$0xff]
        %v3448 = vpack.c.bf16 %v3417, %v3416
        %v3449 = vpack.c.bf16 %v3419, %v3418
        %v3450 = vpack.c.bf16 %v3421, %v3420
        %v3451 = vpack.c.bf16 %v3423, %v3422
        %v3452 = vpack.c.bf16 %v3425, %v3424
        %v3453 = vpack.c.bf16 %v3427, %v3426
        %v3454 = vpack.c.bf16 %v3429, %v3428
        %v3455 = vpack.c.bf16 %v3431, %v3430
        %v3456 = vpack.c.bf16 %v3433, %v3432
        %v3457 = vpack.c.bf16 %v3435, %v3434
        %v3458 = vpack.c.bf16 %v3437, %v3436
        %v3459 = vpack.c.bf16 %v3439, %v3438
        %v3460 = vpack.c.bf16 %v3441, %v3440
        %v3461 = vpack.c.bf16 %v3443, %v3442
        %v3462 = vpack.c.bf16 %v3445, %v3444
        %v3463 = vpack.c.bf16 %v3447, %v3446
        %3464 = vst [vmem:[#allocation2 + $0x30] sm:$0xff] %v3448
        %3465 = vst [vmem:[#allocation2 + $0x78] sm:$0xff] %v3449
        %3466 = vst [vmem:[#allocation2 + $0xc0] sm:$0xff] %v3450
        %3467 = vst [vmem:[#allocation2 + $0x108] sm:$0xff] %v3451
        %3468 = vst [vmem:[#allocation2 + $0x150] sm:$0xff] %v3452
        %3469 = vst [vmem:[#allocation2 + $0x198] sm:$0xff] %v3453
        %3470 = vst [vmem:[#allocation2 + $0x1e0] sm:$0xff] %v3454
        %3471 = vst [vmem:[#allocation2 + $0x228] sm:$0xff] %v3455
        %3472 = vst [vmem:[#allocation2 + $0x270] sm:$0xff] %v3456
        %3473 = vst [vmem:[#allocation2 + $0x2b8] sm:$0xff] %v3457
        %3474 = vst [vmem:[#allocation2 + $0x300] sm:$0xff] %v3458
        %3475 = vst [vmem:[#allocation2 + $0x348] sm:$0xff] %v3459
        %3476 = vst [vmem:[#allocation2 + $0x390] sm:$0xff] %v3460
        %3477 = vst [vmem:[#allocation2 + $0x3d8] sm:$0xff] %v3461
        %3478 = vst [vmem:[#allocation2 + $0x420] sm:$0xff] %v3462
        %3479 = vst [vmem:[#allocation2 + $0x468] sm:$0xff] %v3463
        %v3480 = vld [vmem:[%s3415 + $0x1] sm:$0xff]
        %v3481 = vld [vmem:[%s3415 + $0x9] sm:$0xff]
        %v3482 = vld [vmem:[%s3415 + $0x19] sm:$0xff]
        %v3483 = vld [vmem:[%s3415 + $0x21] sm:$0xff]
        %v3484 = vld [vmem:[%s3415 + $0x31] sm:$0xff]
        %v3485 = vld [vmem:[%s3415 + $0x39] sm:$0xff]
        %v3486 = vld [vmem:[%s3415 + $0x49] sm:$0xff]
        %v3487 = vld [vmem:[%s3415 + $0x51] sm:$0xff]
        %v3488 = vld [vmem:[%s3415 + $0x61] sm:$0xff]
        %v3489 = vld [vmem:[%s3415 + $0x69] sm:$0xff]
        %v3490 = vld [vmem:[%s3415 + $0x79] sm:$0xff]
        %v3491 = vld [vmem:[%s3415 + $0x81] sm:$0xff]
        %v3492 = vld [vmem:[%s3415 + $0x91] sm:$0xff]
        %v3493 = vld [vmem:[%s3415 + $0x99] sm:$0xff]
        %v3494 = vld [vmem:[%s3415 + $0xa9] sm:$0xff]
        %v3495 = vld [vmem:[%s3415 + $0xb1] sm:$0xff]
        %v3496 = vld [vmem:[%s3415 + $0xc1] sm:$0xff]
        %v3497 = vld [vmem:[%s3415 + $0xc9] sm:$0xff]
        %v3498 = vld [vmem:[%s3415 + $0xd9] sm:$0xff]
        %v3499 = vld [vmem:[%s3415 + $0xe1] sm:$0xff]
        %v3500 = vld [vmem:[%s3415 + $0xf1] sm:$0xff]
        %v3501 = vld [vmem:[%s3415 + $0xf9] sm:$0xff]
        %v3502 = vld [vmem:[%s3415 + $0x109] sm:$0xff]
        %v3503 = vld [vmem:[%s3415 + $0x111] sm:$0xff]
        %v3504 = vld [vmem:[%s3415 + $0x121] sm:$0xff]
        %v3505 = vld [vmem:[%s3415 + $0x129] sm:$0xff]
        %v3506 = vld [vmem:[%s3415 + $0x139] sm:$0xff]
        %v3507 = vld [vmem:[%s3415 + $0x141] sm:$0xff]
        %v3508 = vld [vmem:[%s3415 + $0x151] sm:$0xff]
        %v3509 = vld [vmem:[%s3415 + $0x159] sm:$0xff]
        %v3510 = vld [vmem:[%s3415 + $0x169] sm:$0xff]
        %v3511 = vld [vmem:[%s3415 + $0x171] sm:$0xff]
        %v3512 = vpack.c.bf16 %v3481, %v3480
        %v3513 = vpack.c.bf16 %v3483, %v3482
        %v3514 = vpack.c.bf16 %v3485, %v3484
        %v3515 = vpack.c.bf16 %v3487, %v3486
        %v3516 = vpack.c.bf16 %v3489, %v3488
        %v3517 = vpack.c.bf16 %v3491, %v3490
        %v3518 = vpack.c.bf16 %v3493, %v3492
        %v3519 = vpack.c.bf16 %v3495, %v3494
        %v3520 = vpack.c.bf16 %v3497, %v3496
        %v3521 = vpack.c.bf16 %v3499, %v3498
        %v3522 = vpack.c.bf16 %v3501, %v3500
        %v3523 = vpack.c.bf16 %v3503, %v3502
        %v3524 = vpack.c.bf16 %v3505, %v3504
        %v3525 = vpack.c.bf16 %v3507, %v3506
        %v3526 = vpack.c.bf16 %v3509, %v3508
        %v3527 = vpack.c.bf16 %v3511, %v3510
        %3528 = vst [vmem:[#allocation2 + $0x38] sm:$0xff] %v3512
        %3529 = vst [vmem:[#allocation2 + $0x80] sm:$0xff] %v3513
        %3530 = vst [vmem:[#allocation2 + $0xc8] sm:$0xff] %v3514
        %3531 = vst [vmem:[#allocation2 + $0x110] sm:$0xff] %v3515
        %3532 = vst [vmem:[#allocation2 + $0x158] sm:$0xff] %v3516
        %3533 = vst [vmem:[#allocation2 + $0x1a0] sm:$0xff] %v3517
        %3534 = vst [vmem:[#allocation2 + $0x1e8] sm:$0xff] %v3518
        %3535 = vst [vmem:[#allocation2 + $0x230] sm:$0xff] %v3519
        %3536 = vst [vmem:[#allocation2 + $0x278] sm:$0xff] %v3520
        %3537 = vst [vmem:[#allocation2 + $0x2c0] sm:$0xff] %v3521
        %3538 = vst [vmem:[#allocation2 + $0x308] sm:$0xff] %v3522
        %3539 = vst [vmem:[#allocation2 + $0x350] sm:$0xff] %v3523
        %3540 = vst [vmem:[#allocation2 + $0x398] sm:$0xff] %v3524
        %3541 = vst [vmem:[#allocation2 + $0x3e0] sm:$0xff] %v3525
        %3542 = vst [vmem:[#allocation2 + $0x428] sm:$0xff] %v3526
        %3543 = vst [vmem:[#allocation2 + $0x470] sm:$0xff] %v3527
        %v3544 = vld [vmem:[%s3415 + $0x2] sm:$0xff]
        %v3545 = vld [vmem:[%s3415 + $0xa] sm:$0xff]
        %v3546 = vld [vmem:[%s3415 + $0x1a] sm:$0xff]
        %v3547 = vld [vmem:[%s3415 + $0x22] sm:$0xff]
        %v3548 = vld [vmem:[%s3415 + $0x32] sm:$0xff]
        %v3549 = vld [vmem:[%s3415 + $0x3a] sm:$0xff]
        %v3550 = vld [vmem:[%s3415 + $0x4a] sm:$0xff]
        %v3551 = vld [vmem:[%s3415 + $0x52] sm:$0xff]
        %v3552 = vld [vmem:[%s3415 + $0x62] sm:$0xff]
        %v3553 = vld [vmem:[%s3415 + $0x6a] sm:$0xff]
        %v3554 = vld [vmem:[%s3415 + $0x7a] sm:$0xff]
        %v3555 = vld [vmem:[%s3415 + $0x82] sm:$0xff]
        %v3556 = vld [vmem:[%s3415 + $0x92] sm:$0xff]
        %v3557 = vld [vmem:[%s3415 + $0x9a] sm:$0xff]
        %v3558 = vld [vmem:[%s3415 + $0xaa] sm:$0xff]
        %v3559 = vld [vmem:[%s3415 + $0xb2] sm:$0xff]
        %v3560 = vld [vmem:[%s3415 + $0xc2] sm:$0xff]
        %v3561 = vld [vmem:[%s3415 + $0xca] sm:$0xff]
        %v3562 = vld [vmem:[%s3415 + $0xda] sm:$0xff]
        %v3563 = vld [vmem:[%s3415 + $0xe2] sm:$0xff]
        %v3564 = vld [vmem:[%s3415 + $0xf2] sm:$0xff]
        %v3565 = vld [vmem:[%s3415 + $0xfa] sm:$0xff]
        %v3566 = vld [vmem:[%s3415 + $0x10a] sm:$0xff]
        %v3567 = vld [vmem:[%s3415 + $0x112] sm:$0xff]
        %v3568 = vld [vmem:[%s3415 + $0x122] sm:$0xff]
        %v3569 = vld [vmem:[%s3415 + $0x12a] sm:$0xff]
        %v3570 = vld [vmem:[%s3415 + $0x13a] sm:$0xff]
        %v3571 = vld [vmem:[%s3415 + $0x142] sm:$0xff]
        %v3572 = vld [vmem:[%s3415 + $0x152] sm:$0xff]
        %v3573 = vld [vmem:[%s3415 + $0x15a] sm:$0xff]
        %v3574 = vld [vmem:[%s3415 + $0x16a] sm:$0xff]
        %v3575 = vld [vmem:[%s3415 + $0x172] sm:$0xff]
        %v3576 = vpack.c.bf16 %v3545, %v3544
        %v3577 = vpack.c.bf16 %v3547, %v3546
        %v3578 = vpack.c.bf16 %v3549, %v3548
        %v3579 = vpack.c.bf16 %v3551, %v3550
        %v3580 = vpack.c.bf16 %v3553, %v3552
        %v3581 = vpack.c.bf16 %v3555, %v3554
        %v3582 = vpack.c.bf16 %v3557, %v3556
        %v3583 = vpack.c.bf16 %v3559, %v3558
        %v3584 = vpack.c.bf16 %v3561, %v3560
        %v3585 = vpack.c.bf16 %v3563, %v3562
        %v3586 = vpack.c.bf16 %v3565, %v3564
        %v3587 = vpack.c.bf16 %v3567, %v3566
        %v3588 = vpack.c.bf16 %v3569, %v3568
        %v3589 = vpack.c.bf16 %v3571, %v3570
        %v3590 = vpack.c.bf16 %v3573, %v3572
        %v3591 = vpack.c.bf16 %v3575, %v3574
        %3592 = vst [vmem:[#allocation2 + $0x40] sm:$0xff] %v3576
        %3593 = vst [vmem:[#allocation2 + $0x88] sm:$0xff] %v3577
        %3594 = vst [vmem:[#allocation2 + $0xd0] sm:$0xff] %v3578
        %3595 = vst [vmem:[#allocation2 + $0x118] sm:$0xff] %v3579
        %3596 = vst [vmem:[#allocation2 + $0x160] sm:$0xff] %v3580
        %3597 = vst [vmem:[#allocation2 + $0x1a8] sm:$0xff] %v3581
        %3598 = vst [vmem:[#allocation2 + $0x1f0] sm:$0xff] %v3582
        %3599 = vst [vmem:[#allocation2 + $0x238] sm:$0xff] %v3583
        %3600 = vst [vmem:[#allocation2 + $0x280] sm:$0xff] %v3584
        %3601 = vst [vmem:[#allocation2 + $0x2c8] sm:$0xff] %v3585
        %3602 = vst [vmem:[#allocation2 + $0x310] sm:$0xff] %v3586
        %3603 = vst [vmem:[#allocation2 + $0x358] sm:$0xff] %v3587
        %3604 = vst [vmem:[#allocation2 + $0x3a0] sm:$0xff] %v3588
        %3605 = vst [vmem:[#allocation2 + $0x3e8] sm:$0xff] %v3589
        %3606 = vst [vmem:[#allocation2 + $0x430] sm:$0xff] %v3590
        %3607 = vst [vmem:[#allocation2 + $0x478] sm:$0xff] %v3591
        %v3608 = vld [vmem:[#allocation2] sm:$0xff]
        %v3609 = vld [vmem:[#allocation2 + $0x8] sm:$0xff]
        %v3610 = vld [vmem:[#allocation2 + $0x10] sm:$0xff]
        %v3611 = vld [vmem:[#allocation2 + $0x18] sm:$0xff]
        %v3612 = vld [vmem:[#allocation2 + $0x20] sm:$0xff]
        %v3613 = vld [vmem:[#allocation2 + $0x28] sm:$0xff]
        %v3614 = vld [vmem:[#allocation2 + $0x30] sm:$0xff]
        %v3615 = vld [vmem:[#allocation2 + $0x38] sm:$0xff]
        %v3616 = vld [vmem:[#allocation2 + $0x40] sm:$0xff]
        %v3617 = vld [vmem:[#allocation2 + $0x48] sm:$0xff]
        %v3618 = vld [vmem:[#allocation2 + $0x50] sm:$0xff]
        %v3619 = vld [vmem:[#allocation2 + $0x58] sm:$0xff]
        %v3620 = vld [vmem:[#allocation2 + $0x60] sm:$0xff]
        %v3621 = vld [vmem:[#allocation2 + $0x68] sm:$0xff]
        %v3622 = vld [vmem:[#allocation2 + $0x70] sm:$0xff]
        %v3623 = vld [vmem:[#allocation2 + $0x78] sm:$0xff]
        %v3624 = vld [vmem:[#allocation2 + $0x80] sm:$0xff]
        %v3625 = vld [vmem:[#allocation2 + $0x88] sm:$0xff]
        %v3626 = vld [vmem:[#allocation2 + $0x90] sm:$0xff]
        %v3627 = vld [vmem:[#allocation2 + $0x98] sm:$0xff]
        %v3628 = vld [vmem:[#allocation2 + $0xa0] sm:$0xff]
        %v3629 = vld [vmem:[#allocation2 + $0xa8] sm:$0xff]
        %v3630 = vld [vmem:[#allocation2 + $0xb0] sm:$0xff]
        %v3631 = vld [vmem:[#allocation2 + $0xb8] sm:$0xff]
        %v3632 = vld [vmem:[#allocation2 + $0xc0] sm:$0xff]
        %v3633 = vld [vmem:[#allocation2 + $0xc8] sm:$0xff]
        %v3634 = vld [vmem:[#allocation2 + $0xd0] sm:$0xff]
        %v3635 = vld [vmem:[#allocation2 + $0xd8] sm:$0xff]
        %v3636 = vld [vmem:[#allocation2 + $0xe0] sm:$0xff]
        %v3637 = vld [vmem:[#allocation2 + $0xe8] sm:$0xff]
        %v3638 = vld [vmem:[#allocation2 + $0xf0] sm:$0xff]
        %v3639 = vld [vmem:[#allocation2 + $0xf8] sm:$0xff]
        %v3640 = vld [vmem:[#allocation2 + $0x100] sm:$0xff]
        %v3641 = vld [vmem:[#allocation2 + $0x108] sm:$0xff]
        %v3642 = vld [vmem:[#allocation2 + $0x110] sm:$0xff]
        %v3643 = vld [vmem:[#allocation2 + $0x118] sm:$0xff]
        %v3644 = vld [vmem:[#allocation2 + $0x120] sm:$0xff]
        %v3645 = vld [vmem:[#allocation2 + $0x128] sm:$0xff]
        %v3646 = vld [vmem:[#allocation2 + $0x130] sm:$0xff]
        %v3647 = vld [vmem:[#allocation2 + $0x138] sm:$0xff]
        %v3648 = vld [vmem:[#allocation2 + $0x140] sm:$0xff]
        %v3649 = vld [vmem:[#allocation2 + $0x148] sm:$0xff]
        %v3650 = vld [vmem:[#allocation2 + $0x150] sm:$0xff]
        %v3651 = vld [vmem:[#allocation2 + $0x158] sm:$0xff]
        %v3652 = vld [vmem:[#allocation2 + $0x160] sm:$0xff]
        %v3653 = vld [vmem:[#allocation2 + $0x168] sm:$0xff]
        %v3654 = vld [vmem:[#allocation2 + $0x170] sm:$0xff]
        %v3655 = vld [vmem:[#allocation2 + $0x178] sm:$0xff]
        %v3656 = vld [vmem:[#allocation2 + $0x180] sm:$0xff]
        %v3657 = vld [vmem:[#allocation2 + $0x188] sm:$0xff]
        %v3658 = vld [vmem:[#allocation2 + $0x190] sm:$0xff]
        %v3659 = vld [vmem:[#allocation2 + $0x198] sm:$0xff]
        %v3660 = vld [vmem:[#allocation2 + $0x1a0] sm:$0xff]
        %v3661 = vld [vmem:[#allocation2 + $0x1a8] sm:$0xff]
        %v3662 = vld [vmem:[#allocation2 + $0x1b0] sm:$0xff]
        %v3663 = vld [vmem:[#allocation2 + $0x1b8] sm:$0xff]
        %v3664 = vld [vmem:[#allocation2 + $0x1c0] sm:$0xff]
        %v3665 = vld [vmem:[#allocation2 + $0x1c8] sm:$0xff]
        %v3666 = vld [vmem:[#allocation2 + $0x1d0] sm:$0xff]
        %v3667 = vld [vmem:[#allocation2 + $0x1d8] sm:$0xff]
        %v3668 = vld [vmem:[#allocation2 + $0x1e0] sm:$0xff]
        %v3669 = vld [vmem:[#allocation2 + $0x1e8] sm:$0xff]
        %v3670 = vld [vmem:[#allocation2 + $0x1f0] sm:$0xff]
        %v3671 = vld [vmem:[#allocation2 + $0x1f8] sm:$0xff]
        %v3672 = vld [vmem:[#allocation2 + $0x200] sm:$0xff]
        %v3673 = vld [vmem:[#allocation2 + $0x208] sm:$0xff]
        %v3674 = vld [vmem:[#allocation2 + $0x210] sm:$0xff]
        %v3675 = vld [vmem:[#allocation2 + $0x218] sm:$0xff]
        %v3676 = vld [vmem:[#allocation2 + $0x220] sm:$0xff]
        %v3677 = vld [vmem:[#allocation2 + $0x228] sm:$0xff]
        %v3678 = vld [vmem:[#allocation2 + $0x230] sm:$0xff]
        %v3679 = vld [vmem:[#allocation2 + $0x238] sm:$0xff]
        %v3680 = vld [vmem:[#allocation2 + $0x240] sm:$0xff]
        %v3681 = vld [vmem:[#allocation2 + $0x248] sm:$0xff]
        %v3682 = vld [vmem:[#allocation2 + $0x250] sm:$0xff]
        %v3683 = vld [vmem:[#allocation2 + $0x258] sm:$0xff]
        %v3684 = vld [vmem:[#allocation2 + $0x260] sm:$0xff]
        %v3685 = vld [vmem:[#allocation2 + $0x268] sm:$0xff]
        %v3686 = vld [vmem:[#allocation2 + $0x270] sm:$0xff]
        %v3687 = vld [vmem:[#allocation2 + $0x278] sm:$0xff]
        %v3688 = vld [vmem:[#allocation2 + $0x280] sm:$0xff]
        %v3689 = vld [vmem:[#allocation2 + $0x288] sm:$0xff]
        %v3690 = vld [vmem:[#allocation2 + $0x290] sm:$0xff]
        %v3691 = vld [vmem:[#allocation2 + $0x298] sm:$0xff]
        %v3692 = vld [vmem:[#allocation2 + $0x2a0] sm:$0xff]
        %v3693 = vld [vmem:[#allocation2 + $0x2a8] sm:$0xff]
        %v3694 = vld [vmem:[#allocation2 + $0x2b0] sm:$0xff]
        %v3695 = vld [vmem:[#allocation2 + $0x2b8] sm:$0xff]
        %v3696 = vld [vmem:[#allocation2 + $0x2c0] sm:$0xff]
        %v3697 = vld [vmem:[#allocation2 + $0x2c8] sm:$0xff]
        %v3698 = vld [vmem:[#allocation2 + $0x2d0] sm:$0xff]
        %v3699 = vld [vmem:[#allocation2 + $0x2d8] sm:$0xff]
        %v3700 = vld [vmem:[#allocation2 + $0x2e0] sm:$0xff]
        %v3701 = vld [vmem:[#allocation2 + $0x2e8] sm:$0xff]
        %v3702 = vld [vmem:[#allocation2 + $0x2f0] sm:$0xff]
        %v3703 = vld [vmem:[#allocation2 + $0x2f8] sm:$0xff]
        %v3704 = vld [vmem:[#allocation2 + $0x300] sm:$0xff]
        %v3705 = vld [vmem:[#allocation2 + $0x308] sm:$0xff]
        %v3706 = vld [vmem:[#allocation2 + $0x310] sm:$0xff]
        %v3707 = vld [vmem:[#allocation2 + $0x318] sm:$0xff]
        %v3708 = vld [vmem:[#allocation2 + $0x320] sm:$0xff]
        %v3709 = vld [vmem:[#allocation2 + $0x328] sm:$0xff]
        %v3710 = vld [vmem:[#allocation2 + $0x330] sm:$0xff]
        %v3711 = vld [vmem:[#allocation2 + $0x338] sm:$0xff]
        %v3712 = vld [vmem:[#allocation2 + $0x340] sm:$0xff]
        %v3713 = vld [vmem:[#allocation2 + $0x348] sm:$0xff]
        %v3714 = vld [vmem:[#allocation2 + $0x350] sm:$0xff]
        %v3715 = vld [vmem:[#allocation2 + $0x358] sm:$0xff]
        %v3716 = vld [vmem:[#allocation2 + $0x360] sm:$0xff]
        %v3717 = vld [vmem:[#allocation2 + $0x368] sm:$0xff]
        %v3718 = vld [vmem:[#allocation2 + $0x370] sm:$0xff]
        %v3719 = vld [vmem:[#allocation2 + $0x378] sm:$0xff]
        %v3720 = vld [vmem:[#allocation2 + $0x380] sm:$0xff]
        %v3721 = vld [vmem:[#allocation2 + $0x388] sm:$0xff]
        %v3722 = vld [vmem:[#allocation2 + $0x390] sm:$0xff]
        %v3723 = vld [vmem:[#allocation2 + $0x398] sm:$0xff]
        %v3724 = vld [vmem:[#allocation2 + $0x3a0] sm:$0xff]
        %v3725 = vld [vmem:[#allocation2 + $0x3a8] sm:$0xff]
        %v3726 = vld [vmem:[#allocation2 + $0x3b0] sm:$0xff]
        %v3727 = vld [vmem:[#allocation2 + $0x3b8] sm:$0xff]
        %v3728 = vld [vmem:[#allocation2 + $0x3c0] sm:$0xff]
        %v3729 = vld [vmem:[#allocation2 + $0x3c8] sm:$0xff]
        %v3730 = vld [vmem:[#allocation2 + $0x3d0] sm:$0xff]
        %v3731 = vld [vmem:[#allocation2 + $0x3d8] sm:$0xff]
        %v3732 = vld [vmem:[#allocation2 + $0x3e0] sm:$0xff]
        %v3733 = vld [vmem:[#allocation2 + $0x3e8] sm:$0xff]
        %v3734 = vld [vmem:[#allocation2 + $0x3f0] sm:$0xff]
        %v3735 = vld [vmem:[#allocation2 + $0x3f8] sm:$0xff]
        %v3736 = vld [vmem:[#allocation2 + $0x400] sm:$0xff]
        %v3737 = vld [vmem:[#allocation2 + $0x408] sm:$0xff]
        %v3738 = vld [vmem:[#allocation2 + $0x410] sm:$0xff]
        %v3739 = vld [vmem:[#allocation2 + $0x418] sm:$0xff]
        %v3740 = vld [vmem:[#allocation2 + $0x420] sm:$0xff]
        %v3741 = vld [vmem:[#allocation2 + $0x428] sm:$0xff]
        %v3742 = vld [vmem:[#allocation2 + $0x430] sm:$0xff]
        %v3743 = vld [vmem:[#allocation2 + $0x438] sm:$0xff]
        %v3744 = vld [vmem:[#allocation2 + $0x440] sm:$0xff]
        %v3745 = vld [vmem:[#allocation2 + $0x448] sm:$0xff]
        %v3746 = vld [vmem:[#allocation2 + $0x450] sm:$0xff]
        %v3747 = vld [vmem:[#allocation2 + $0x458] sm:$0xff]
        %v3748 = vld [vmem:[#allocation2 + $0x460] sm:$0xff]
        %v3749 = vld [vmem:[#allocation2 + $0x468] sm:$0xff]
        %v3750 = vld [vmem:[#allocation2 + $0x470] sm:$0xff]
        %v3751 = vld [vmem:[#allocation2 + $0x478] sm:$0xff]
        %v3752 = vld [vmem:[%s4] sm:$0xf]
        %v3753 = vld [vmem:[%s4 + $0x4] sm:$0xf]
        %v3754 = vld [vmem:[%s4 + $0x8] sm:$0xf]
        %v3755 = vld [vmem:[%s4 + $0xc] sm:$0xf]
        %v3756 = vld [vmem:[%s4 + $0x10] sm:$0xf]
        %v3757 = vld [vmem:[%s4 + $0x14] sm:$0xf]
        %v3758 = vld [vmem:[%s4 + $0x18] sm:$0xf]
        %v3759 = vld [vmem:[%s4 + $0x1c] sm:$0xf]
        %v3760 = vld [vmem:[%s4 + $0x20] sm:$0xf]
        %v3761 = vld [vmem:[%s4 + $0x24] sm:$0xf]
        %v3762 = vld [vmem:[%s4 + $0x28] sm:$0xf]
        %v3763 = vld [vmem:[%s4 + $0x2c] sm:$0xf]
        %v3764 = vld [vmem:[%s4 + $0x30] sm:$0xf]
        %v3765 = vld [vmem:[%s4 + $0x34] sm:$0xf]
        %v3766 = vld [vmem:[%s4 + $0x38] sm:$0xf]
        %v3767 = vld [vmem:[%s4 + $0x3c] sm:$0xf]
        %v3768 = vld [vmem:[%s4 + $0x40] sm:$0xf]
        %v3769 = vld [vmem:[%s4 + $0x44] sm:$0xf]
        %v3770 = vld [vmem:[%s4 + $0x48] sm:$0xf]
        %v3771 = vld [vmem:[%s4 + $0x4c] sm:$0xf]
        %v3772 = vld [vmem:[%s4 + $0x50] sm:$0xf]
        %v3773 = vld [vmem:[%s4 + $0x54] sm:$0xf]
        %v3774 = vld [vmem:[%s4 + $0x58] sm:$0xf]
        %v3775 = vld [vmem:[%s4 + $0x5c] sm:$0xf]
        %v3776 = vld [vmem:[%s4 + $0x60] sm:$0xf]
        %v3777 = vld [vmem:[%s4 + $0x64] sm:$0xf]
        %v3778 = vld [vmem:[%s4 + $0x68] sm:$0xf]
        %v3779 = vld [vmem:[%s4 + $0x6c] sm:$0xf]
        %v3780 = vld [vmem:[%s4 + $0x70] sm:$0xf]
        %v3781 = vld [vmem:[%s4 + $0x74] sm:$0xf]
        %v3782 = vld [vmem:[%s4 + $0x78] sm:$0xf]
        %v3783 = vld [vmem:[%s4 + $0x7c] sm:$0xf]
        %v3784 = vld [vmem:[%s4 + $0x80] sm:$0xf]
        %v3785 = vld [vmem:[%s4 + $0x84] sm:$0xf]
        %v3786 = vld [vmem:[%s4 + $0x88] sm:$0xf]
        %v3787 = vld [vmem:[%s4 + $0x8c] sm:$0xf]
        %v3788 = vld [vmem:[%s4 + $0x90] sm:$0xf]
        %v3789 = vld [vmem:[%s4 + $0x94] sm:$0xf]
        %v3790 = vld [vmem:[%s4 + $0x98] sm:$0xf]
        %v3791 = vld [vmem:[%s4 + $0x9c] sm:$0xf]
        %v3792 = vld [vmem:[%s4 + $0xa0] sm:$0xf]
        %v3793 = vld [vmem:[%s4 + $0xa4] sm:$0xf]
        %v3794 = vld [vmem:[%s4 + $0xa8] sm:$0xf]
        %v3795 = vld [vmem:[%s4 + $0xac] sm:$0xf]
        %v3796 = vld [vmem:[%s4 + $0xb0] sm:$0xf]
        %v3797 = vld [vmem:[%s4 + $0xb4] sm:$0xf]
        %v3798 = vld [vmem:[%s4 + $0xb8] sm:$0xf]
        %v3799 = vld [vmem:[%s4 + $0xbc] sm:$0xf]
        %v3800 = vld [vmem:[%s4 + $0xc0] sm:$0xf]
        %v3801 = vld [vmem:[%s4 + $0xc4] sm:$0xf]
        %v3802 = vld [vmem:[%s4 + $0xc8] sm:$0xf]
        %v3803 = vld [vmem:[%s4 + $0xcc] sm:$0xf]
        %v3804 = vld [vmem:[%s4 + $0xd0] sm:$0xf]
        %v3805 = vld [vmem:[%s4 + $0xd4] sm:$0xf]
        %v3806 = vld [vmem:[%s4 + $0xd8] sm:$0xf]
        %v3807 = vld [vmem:[%s4 + $0xdc] sm:$0xf]
        %v3808 = vld [vmem:[%s4 + $0xe0] sm:$0xf]
        %v3809 = vld [vmem:[%s4 + $0xe4] sm:$0xf]
        %v3810 = vld [vmem:[%s4 + $0xe8] sm:$0xf]
        %v3811 = vld [vmem:[%s4 + $0xec] sm:$0xf]
        %v3812 = vld [vmem:[%s4 + $0xf0] sm:$0xf]
        %v3813 = vld [vmem:[%s4 + $0xf4] sm:$0xf]
        %v3814 = vld [vmem:[%s4 + $0xf8] sm:$0xf]
        %v3815 = vld [vmem:[%s4 + $0xfc] sm:$0xf]
        %v3816 = vld [vmem:[%s4 + $0x100] sm:$0xf]
        %v3817 = vld [vmem:[%s4 + $0x104] sm:$0xf]
        %v3818 = vld [vmem:[%s4 + $0x108] sm:$0xf]
        %v3819 = vld [vmem:[%s4 + $0x10c] sm:$0xf]
        %v3820 = vld [vmem:[%s4 + $0x110] sm:$0xf]
        %v3821 = vld [vmem:[%s4 + $0x114] sm:$0xf]
        %v3822 = vld [vmem:[%s4 + $0x118] sm:$0xf]
        %v3823 = vld [vmem:[%s4 + $0x11c] sm:$0xf]
        %v3824 = vld [vmem:[%s4 + $0x120] sm:$0xf]
        %v3825 = vld [vmem:[%s4 + $0x124] sm:$0xf]
        %v3826 = vld [vmem:[%s4 + $0x128] sm:$0xf]
        %v3827 = vld [vmem:[%s4 + $0x12c] sm:$0xf]
        %v3828 = vld [vmem:[%s4 + $0x130] sm:$0xf]
        %v3829 = vld [vmem:[%s4 + $0x134] sm:$0xf]
        %v3830 = vld [vmem:[%s4 + $0x138] sm:$0xf]
        %v3831 = vld [vmem:[%s4 + $0x13c] sm:$0xf]
        %v3832 = vld [vmem:[%s4 + $0x140] sm:$0xf]
        %v3833 = vld [vmem:[%s4 + $0x144] sm:$0xf]
        %v3834 = vld [vmem:[%s4 + $0x148] sm:$0xf]
        %v3835 = vld [vmem:[%s4 + $0x14c] sm:$0xf]
        %v3836 = vld [vmem:[%s4 + $0x150] sm:$0xf]
        %v3837 = vld [vmem:[%s4 + $0x154] sm:$0xf]
        %v3838 = vld [vmem:[%s4 + $0x158] sm:$0xf]
        %v3839 = vld [vmem:[%s4 + $0x15c] sm:$0xf]
        %v3840 = vld [vmem:[%s4 + $0x160] sm:$0xf]
        %v3841 = vld [vmem:[%s4 + $0x164] sm:$0xf]
        %v3842 = vld [vmem:[%s4 + $0x168] sm:$0xf]
        %v3843 = vld [vmem:[%s4 + $0x16c] sm:$0xf]
        %v3844 = vld [vmem:[%s4 + $0x170] sm:$0xf]
        %v3845 = vld [vmem:[%s4 + $0x174] sm:$0xf]
        %v3846 = vld [vmem:[%s4 + $0x178] sm:$0xf]
        %v3847 = vld [vmem:[%s4 + $0x17c] sm:$0xf]
        %v3848 = vld [vmem:[%s4 + $0x180] sm:$0xf]
        %v3849 = vld [vmem:[%s4 + $0x184] sm:$0xf]
        %v3850 = vld [vmem:[%s4 + $0x188] sm:$0xf]
        %v3851 = vld [vmem:[%s4 + $0x18c] sm:$0xf]
        %v3852 = vld [vmem:[%s4 + $0x190] sm:$0xf]
        %v3853 = vld [vmem:[%s4 + $0x194] sm:$0xf]
        %v3854 = vld [vmem:[%s4 + $0x198] sm:$0xf]
        %v3855 = vld [vmem:[%s4 + $0x19c] sm:$0xf]
        %v3856 = vld [vmem:[%s4 + $0x1a0] sm:$0xf]
        %v3857 = vld [vmem:[%s4 + $0x1a4] sm:$0xf]
        %v3858 = vld [vmem:[%s4 + $0x1a8] sm:$0xf]
        %v3859 = vld [vmem:[%s4 + $0x1ac] sm:$0xf]
        %v3860 = vld [vmem:[%s4 + $0x1b0] sm:$0xf]
        %v3861 = vld [vmem:[%s4 + $0x1b4] sm:$0xf]
        %v3862 = vld [vmem:[%s4 + $0x1b8] sm:$0xf]
        %v3863 = vld [vmem:[%s4 + $0x1bc] sm:$0xf]
        %v3864 = vld [vmem:[%s4 + $0x1c0] sm:$0xf]
        %v3865 = vld [vmem:[%s4 + $0x1c4] sm:$0xf]
        %v3866 = vld [vmem:[%s4 + $0x1c8] sm:$0xf]
        %v3867 = vld [vmem:[%s4 + $0x1cc] sm:$0xf]
        %v3868 = vld [vmem:[%s4 + $0x1d0] sm:$0xf]
        %v3869 = vld [vmem:[%s4 + $0x1d4] sm:$0xf]
        %v3870 = vld [vmem:[%s4 + $0x1d8] sm:$0xf]
        %v3871 = vld [vmem:[%s4 + $0x1dc] sm:$0xf]
        %v3872 = vld [vmem:[%s4 + $0x1e0] sm:$0xf]
        %v3873 = vld [vmem:[%s4 + $0x1e4] sm:$0xf]
        %v3874 = vld [vmem:[%s4 + $0x1e8] sm:$0xf]
        %v3875 = vld [vmem:[%s4 + $0x1ec] sm:$0xf]
        %v3876 = vld [vmem:[%s4 + $0x1f0] sm:$0xf]
        %v3877 = vld [vmem:[%s4 + $0x1f4] sm:$0xf]
        %v3878 = vld [vmem:[%s4 + $0x1f8] sm:$0xf]
        %v3879 = vld [vmem:[%s4 + $0x1fc] sm:$0xf]
        %v3880 = vld [vmem:[%s4 + $0x200] sm:$0xf]
        %v3881 = vld [vmem:[%s4 + $0x204] sm:$0xf]
        %v3882 = vld [vmem:[%s4 + $0x208] sm:$0xf]
        %v3883 = vld [vmem:[%s4 + $0x20c] sm:$0xf]
        %v3884 = vld [vmem:[%s4 + $0x210] sm:$0xf]
        %v3885 = vld [vmem:[%s4 + $0x214] sm:$0xf]
        %v3886 = vld [vmem:[%s4 + $0x218] sm:$0xf]
        %v3887 = vld [vmem:[%s4 + $0x21c] sm:$0xf]
        %v3888 = vld [vmem:[%s4 + $0x220] sm:$0xf]
        %v3889 = vld [vmem:[%s4 + $0x224] sm:$0xf]
        %v3890 = vld [vmem:[%s4 + $0x228] sm:$0xf]
        %v3891 = vld [vmem:[%s4 + $0x22c] sm:$0xf]
        %v3892 = vld [vmem:[%s4 + $0x230] sm:$0xf]
        %v3893 = vld [vmem:[%s4 + $0x234] sm:$0xf]
        %v3894 = vld [vmem:[%s4 + $0x238] sm:$0xf]
        %v3895 = vld [vmem:[%s4 + $0x23c] sm:$0xf]
        %v4040 = vunpack.c.l.b16 %v3752
        %v4041 = vunpack.c.l.b16 %v3753
        %v4042 = vunpack.c.l.b16 %v3754
        %v4043 = vunpack.c.l.b16 %v3755
        %v4044 = vunpack.c.l.b16 %v3756
        %v4045 = vunpack.c.l.b16 %v3757
        %v4046 = vunpack.c.l.b16 %v3758
        %v4047 = vunpack.c.l.b16 %v3759
        %v4048 = vunpack.c.l.b16 %v3760
        %v4049 = vunpack.c.l.b16 %v3761
        %v4050 = vunpack.c.l.b16 %v3762
        %v4051 = vunpack.c.l.b16 %v3763
        %v4052 = vunpack.c.l.b16 %v3764
        %v4053 = vunpack.c.l.b16 %v3765
        %v4054 = vunpack.c.l.b16 %v3766
        %v4055 = vunpack.c.l.b16 %v3767
        %v4056 = vunpack.c.l.b16 %v3768
        %v4057 = vunpack.c.l.b16 %v3769
        %v4058 = vunpack.c.l.b16 %v3770
        %v4059 = vunpack.c.l.b16 %v3771
        %v4060 = vunpack.c.l.b16 %v3772
        %v4061 = vunpack.c.l.b16 %v3773
        %v4062 = vunpack.c.l.b16 %v3774
        %v4063 = vunpack.c.l.b16 %v3775
        %v4064 = vunpack.c.l.b16 %v3776
        %v4065 = vunpack.c.l.b16 %v3777
        %v4066 = vunpack.c.l.b16 %v3778
        %v4067 = vunpack.c.l.b16 %v3779
        %v4068 = vunpack.c.l.b16 %v3780
        %v4069 = vunpack.c.l.b16 %v3781
        %v4070 = vunpack.c.l.b16 %v3782
        %v4071 = vunpack.c.l.b16 %v3783
        %v4072 = vunpack.c.l.b16 %v3784
        %v4073 = vunpack.c.l.b16 %v3785
        %v4074 = vunpack.c.l.b16 %v3786
        %v4075 = vunpack.c.l.b16 %v3787
        %v4076 = vunpack.c.l.b16 %v3788
        %v4077 = vunpack.c.l.b16 %v3789
        %v4078 = vunpack.c.l.b16 %v3790
        %v4079 = vunpack.c.l.b16 %v3791
        %v4080 = vunpack.c.l.b16 %v3792
        %v4081 = vunpack.c.l.b16 %v3793
        %v4082 = vunpack.c.l.b16 %v3794
        %v4083 = vunpack.c.l.b16 %v3795
        %v4084 = vunpack.c.l.b16 %v3796
        %v4085 = vunpack.c.l.b16 %v3797
        %v4086 = vunpack.c.l.b16 %v3798
        %v4087 = vunpack.c.l.b16 %v3799
        %v4088 = vunpack.c.l.b16 %v3800
        %v4089 = vunpack.c.l.b16 %v3801
        %v4090 = vunpack.c.l.b16 %v3802
        %v4091 = vunpack.c.l.b16 %v3803
        %v4092 = vunpack.c.l.b16 %v3804
        %v4093 = vunpack.c.l.b16 %v3805
        %v4094 = vunpack.c.l.b16 %v3806
        %v4095 = vunpack.c.l.b16 %v3807
        %v4096 = vunpack.c.l.b16 %v3808
        %v4097 = vunpack.c.l.b16 %v3809
        %v4098 = vunpack.c.l.b16 %v3810
        %v4099 = vunpack.c.l.b16 %v3811
        %v4100 = vunpack.c.l.b16 %v3812
        %v4101 = vunpack.c.l.b16 %v3813
        %v4102 = vunpack.c.l.b16 %v3814
        %v4103 = vunpack.c.l.b16 %v3815
        %v4104 = vunpack.c.l.b16 %v3816
        %v4105 = vunpack.c.l.b16 %v3817
        %v4106 = vunpack.c.l.b16 %v3818
        %v4107 = vunpack.c.l.b16 %v3819
        %v4108 = vunpack.c.l.b16 %v3820
        %v4109 = vunpack.c.l.b16 %v3821
        %v4110 = vunpack.c.l.b16 %v3822
        %v4111 = vunpack.c.l.b16 %v3823
        %v4112 = vunpack.c.l.b16 %v3824
        %v4113 = vunpack.c.l.b16 %v3825
        %v4114 = vunpack.c.l.b16 %v3826
        %v4115 = vunpack.c.l.b16 %v3827
        %v4116 = vunpack.c.l.b16 %v3828
        %v4117 = vunpack.c.l.b16 %v3829
        %v4118 = vunpack.c.l.b16 %v3830
        %v4119 = vunpack.c.l.b16 %v3831
        %v4120 = vunpack.c.l.b16 %v3832
        %v4121 = vunpack.c.l.b16 %v3833
        %v4122 = vunpack.c.l.b16 %v3834
        %v4123 = vunpack.c.l.b16 %v3835
        %v4124 = vunpack.c.l.b16 %v3836
        %v4125 = vunpack.c.l.b16 %v3837
        %v4126 = vunpack.c.l.b16 %v3838
        %v4127 = vunpack.c.l.b16 %v3839
        %v4128 = vunpack.c.l.b16 %v3840
        %v4129 = vunpack.c.l.b16 %v3841
        %v4130 = vunpack.c.l.b16 %v3842
        %v4131 = vunpack.c.l.b16 %v3843
        %v4132 = vunpack.c.l.b16 %v3844
        %v4133 = vunpack.c.l.b16 %v3845
        %v4134 = vunpack.c.l.b16 %v3846
        %v4135 = vunpack.c.l.b16 %v3847
        %v4136 = vunpack.c.l.b16 %v3848
        %v4137 = vunpack.c.l.b16 %v3849
        %v4138 = vunpack.c.l.b16 %v3850
        %v4139 = vunpack.c.l.b16 %v3851
        %v4140 = vunpack.c.l.b16 %v3852
        %v4141 = vunpack.c.l.b16 %v3853
        %v4142 = vunpack.c.l.b16 %v3854
        %v4143 = vunpack.c.l.b16 %v3855
        %v4144 = vunpack.c.l.b16 %v3856
        %v4145 = vunpack.c.l.b16 %v3857
        %v4146 = vunpack.c.l.b16 %v3858
        %v4147 = vunpack.c.l.b16 %v3859
        %v4148 = vunpack.c.l.b16 %v3860
        %v4149 = vunpack.c.l.b16 %v3861
        %v4150 = vunpack.c.l.b16 %v3862
        %v4151 = vunpack.c.l.b16 %v3863
        %v4152 = vunpack.c.l.b16 %v3864
        %v4153 = vunpack.c.l.b16 %v3865
        %v4154 = vunpack.c.l.b16 %v3866
        %v4155 = vunpack.c.l.b16 %v3867
        %v4156 = vunpack.c.l.b16 %v3868
        %v4157 = vunpack.c.l.b16 %v3869
        %v4158 = vunpack.c.l.b16 %v3870
        %v4159 = vunpack.c.l.b16 %v3871
        %v4160 = vunpack.c.l.b16 %v3872
        %v4161 = vunpack.c.l.b16 %v3873
        %v4162 = vunpack.c.l.b16 %v3874
        %v4163 = vunpack.c.l.b16 %v3875
        %v4164 = vunpack.c.l.b16 %v3876
        %v4165 = vunpack.c.l.b16 %v3877
        %v4166 = vunpack.c.l.b16 %v3878
        %v4167 = vunpack.c.l.b16 %v3879
        %v4168 = vunpack.c.l.b16 %v3880
        %v4169 = vunpack.c.l.b16 %v3881
        %v4170 = vunpack.c.l.b16 %v3882
        %v4171 = vunpack.c.l.b16 %v3883
        %v4172 = vunpack.c.l.b16 %v3884
        %v4173 = vunpack.c.l.b16 %v3885
        %v4174 = vunpack.c.l.b16 %v3886
        %v4175 = vunpack.c.l.b16 %v3887
        %v4176 = vunpack.c.l.b16 %v3888
        %v4177 = vunpack.c.l.b16 %v3889
        %v4178 = vunpack.c.l.b16 %v3890
        %v4179 = vunpack.c.l.b16 %v3891
        %v4180 = vunpack.c.l.b16 %v3892
        %v4181 = vunpack.c.l.b16 %v3893
        %v4182 = vunpack.c.l.b16 %v3894
        %v4183 = vunpack.c.l.b16 %v3895
        %v4184 = vpack.c.b16 %v4041, %v4040
        %v4185 = vpack.c.b16 %v4043, %v4042
        %v4186 = vpack.c.b16 %v4045, %v4044
        %v4187 = vpack.c.b16 %v4047, %v4046
        %v4188 = vpack.c.b16 %v4049, %v4048
        %v4189 = vpack.c.b16 %v4051, %v4050
        %v4190 = vpack.c.b16 %v4053, %v4052
        %v4191 = vpack.c.b16 %v4055, %v4054
        %v4192 = vpack.c.b16 %v4057, %v4056
        %v4193 = vpack.c.b16 %v4059, %v4058
        %v4194 = vpack.c.b16 %v4061, %v4060
        %v4195 = vpack.c.b16 %v4063, %v4062
        %v4196 = vpack.c.b16 %v4065, %v4064
        %v4197 = vpack.c.b16 %v4067, %v4066
        %v4198 = vpack.c.b16 %v4069, %v4068
        %v4199 = vpack.c.b16 %v4071, %v4070
        %v4200 = vpack.c.b16 %v4073, %v4072
        %v4201 = vpack.c.b16 %v4075, %v4074
        %v4202 = vpack.c.b16 %v4077, %v4076
        %v4203 = vpack.c.b16 %v4079, %v4078
        %v4204 = vpack.c.b16 %v4081, %v4080
        %v4205 = vpack.c.b16 %v4083, %v4082
        %v4206 = vpack.c.b16 %v4085, %v4084
        %v4207 = vpack.c.b16 %v4087, %v4086
        %v4208 = vpack.c.b16 %v4089, %v4088
        %v4209 = vpack.c.b16 %v4091, %v4090
        %v4210 = vpack.c.b16 %v4093, %v4092
        %v4211 = vpack.c.b16 %v4095, %v4094
        %v4212 = vpack.c.b16 %v4097, %v4096
        %v4213 = vpack.c.b16 %v4099, %v4098
        %v4214 = vpack.c.b16 %v4101, %v4100
        %v4215 = vpack.c.b16 %v4103, %v4102
        %v4216 = vpack.c.b16 %v4105, %v4104
        %v4217 = vpack.c.b16 %v4107, %v4106
        %v4218 = vpack.c.b16 %v4109, %v4108
        %v4219 = vpack.c.b16 %v4111, %v4110
        %v4220 = vpack.c.b16 %v4113, %v4112
        %v4221 = vpack.c.b16 %v4115, %v4114
        %v4222 = vpack.c.b16 %v4117, %v4116
        %v4223 = vpack.c.b16 %v4119, %v4118
        %v4224 = vpack.c.b16 %v4121, %v4120
        %v4225 = vpack.c.b16 %v4123, %v4122
        %v4226 = vpack.c.b16 %v4125, %v4124
        %v4227 = vpack.c.b16 %v4127, %v4126
        %v4228 = vpack.c.b16 %v4129, %v4128
        %v4229 = vpack.c.b16 %v4131, %v4130
        %v4230 = vpack.c.b16 %v4133, %v4132
        %v4231 = vpack.c.b16 %v4135, %v4134
        %v4232 = vpack.c.b16 %v4137, %v4136
        %v4233 = vpack.c.b16 %v4139, %v4138
        %v4234 = vpack.c.b16 %v4141, %v4140
        %v4235 = vpack.c.b16 %v4143, %v4142
        %v4236 = vpack.c.b16 %v4145, %v4144
        %v4237 = vpack.c.b16 %v4147, %v4146
        %v4238 = vpack.c.b16 %v4149, %v4148
        %v4239 = vpack.c.b16 %v4151, %v4150
        %v4240 = vpack.c.b16 %v4153, %v4152
        %v4241 = vpack.c.b16 %v4155, %v4154
        %v4242 = vpack.c.b16 %v4157, %v4156
        %v4243 = vpack.c.b16 %v4159, %v4158
        %v4244 = vpack.c.b16 %v4161, %v4160
        %v4245 = vpack.c.b16 %v4163, %v4162
        %v4246 = vpack.c.b16 %v4165, %v4164
        %v4247 = vpack.c.b16 %v4167, %v4166
        %v4248 = vpack.c.b16 %v4169, %v4168
        %v4249 = vpack.c.b16 %v4171, %v4170
        %v4250 = vpack.c.b16 %v4173, %v4172
        %v4251 = vpack.c.b16 %v4175, %v4174
        %v4252 = vpack.c.b16 %v4177, %v4176
        %v4253 = vpack.c.b16 %v4179, %v4178
        %v4254 = vpack.c.b16 %v4181, %v4180
        %v4255 = vpack.c.b16 %v4183, %v4182
        %4328 = vmatprep.subr.bf16.mxu0 0
        %4329 = vmatpush1.bf16.msra.mxu0 %v4184
        %4330 = vmatprep.subr.bf16.mxu0 0
        %4331 = vmatpush1.bf16.msra.mxu0 %v4185
        %4332 = vmatprep.subr.bf16.mxu0 0
        %4333 = vmatpush1.bf16.msra.mxu0 %v4186
        %4334 = vmatprep.subr.bf16.mxu0 0
        %4335 = vmatpush1.bf16.msra.mxu0 %v4187
        %4336 = vmatprep.subr.bf16.mxu0 0
        %4337 = vmatpush1.bf16.msra.mxu0 %v4188
        %4338 = vmatprep.subr.bf16.mxu0 0
        %4339 = vmatpush1.bf16.msra.mxu0 %v4189
        %4340 = vmatprep.subr.bf16.mxu0 0
        %4341 = vmatpush1.bf16.msra.mxu0 %v4190
        %4342 = vmatprep.subr.bf16.mxu0 0
        %4343 = vmatpush1.bf16.msra.mxu0 %v4191
        %4344 = vmatprep.subr.bf16.mxu0 0
        %4345 = vmatpush1.bf16.msra.mxu0 %v4192
        %4346 = vmatprep.subr.bf16.mxu0 0
        %4347 = vmatpush1.bf16.msra.mxu0 %v4193
        %4348 = vmatprep.subr.bf16.mxu0 0
        %4349 = vmatpush1.bf16.msra.mxu0 %v4194
        %4350 = vmatprep.subr.bf16.mxu0 0
        %4351 = vmatpush1.bf16.msra.mxu0 %v4195
        %4352 = vmatprep.subr.bf16.mxu0 0
        %4353 = vmatpush1.bf16.msra.mxu0 %v4196
        %4354 = vmatprep.subr.bf16.mxu0 0
        %4355 = vmatpush1.bf16.msra.mxu0 %v4197
        %4356 = vmatprep.subr.bf16.mxu0 0
        %4357 = vmatpush1.bf16.msra.mxu0 %v4198
        %4358 = vmatprep.subr.bf16.mxu0 0
        %4359 = vmatpush1.bf16.msra.mxu0 %v4199
        %4360 = vmatprep.mubr.bf16.mxu0 %v3609
        %4361 = vmatmul.mubr.bf16.gmra.mrb[0].mxu0 %v3608
        %v4362 = vpop.f32.mrb[0].mxu0
        %v4363 = vadd.f32 0.0, %v4362
        %v4364 = vpop.f32.mrb[0].mxu0
        %v4365 = vpop.f32.mrb[0].mxu0
        %v4366 = vadd.f32 0.0, %v4365
        %v4367 = vpop.f32.mrb[0].mxu0
        %4368 = vmatprep.mubr.bf16.mxu0 %v3618
        %4369 = vmatmul.mubr.bf16.gmra.mrb[0].mxu0 %v3617
        %v4370 = vpop.f32.mrb[0].mxu0
        %v4371 = vadd.f32 0.0, %v4370
        %v4372 = vpop.f32.mrb[0].mxu0
        %v4373 = vpop.f32.mrb[0].mxu0
        %v4374 = vadd.f32 0.0, %v4373
        %v4375 = vpop.f32.mrb[0].mxu0
        %4376 = vmatprep.mubr.bf16.mxu0 %v3627
        %4377 = vmatmul.mubr.bf16.gmra.mrb[0].mxu0 %v3626
        %v4378 = vpop.f32.mrb[0].mxu0
        %v4379 = vadd.f32 0.0, %v4378
        %v4380 = vpop.f32.mrb[0].mxu0
        %v4381 = vpop.f32.mrb[0].mxu0
        %v4382 = vadd.f32 0.0, %v4381
        %v4383 = vpop.f32.mrb[0].mxu0
        %4384 = vmatprep.mubr.bf16.mxu0 %v3636
        %4385 = vmatmul.mubr.bf16.gmra.mrb[0].mxu0 %v3635
        %v4386 = vpop.f32.mrb[0].mxu0
        %v4387 = vadd.f32 0.0, %v4386
        %v4388 = vpop.f32.mrb[0].mxu0
        %v4389 = vpop.f32.mrb[0].mxu0
        %v4390 = vadd.f32 0.0, %v4389
        %v4391 = vpop.f32.mrb[0].mxu0
        %4392 = vmatprep.mubr.bf16.mxu0 %v3645
        %4393 = vmatmul.mubr.bf16.gmra.mrb[0].mxu0 %v3644
        %v4394 = vpop.f32.mrb[0].mxu0
        %v4395 = vadd.f32 0.0, %v4394
        %v4396 = vpop.f32.mrb[0].mxu0
        %v4397 = vpop.f32.mrb[0].mxu0
        %v4398 = vadd.f32 0.0, %v4397
        %v4399 = vpop.f32.mrb[0].mxu0
        %4400 = vmatprep.mubr.bf16.mxu0 %v3654
        %4401 = vmatmul.mubr.bf16.gmra.mrb[0].mxu0 %v3653
        %v4402 = vpop.f32.mrb[0].mxu0
        %v4403 = vadd.f32 0.0, %v4402
        %v4404 = vpop.f32.mrb[0].mxu0
        %v4405 = vpop.f32.mrb[0].mxu0
        %v4406 = vadd.f32 0.0, %v4405
        %v4407 = vpop.f32.mrb[0].mxu0
        %4408 = vmatprep.mubr.bf16.mxu0 %v3663
        %4409 = vmatmul.mubr.bf16.gmra.mrb[0].mxu0 %v3662
        %v4410 = vpop.f32.mrb[0].mxu0
        %v4411 = vadd.f32 0.0, %v4410
        %v4412 = vpop.f32.mrb[0].mxu0
        %v4413 = vpop.f32.mrb[0].mxu0
        %v4414 = vadd.f32 0.0, %v4413
        %v4415 = vpop.f32.mrb[0].mxu0
        %4416 = vmatprep.mubr.bf16.mxu0 %v3672
        %4417 = vmatmul.mubr.bf16.gmra.mrb[0].mxu0 %v3671
        %v4418 = vpop.f32.mrb[0].mxu0
        %v4419 = vadd.f32 0.0, %v4418
        %v4420 = vpop.f32.mrb[0].mxu0
        %v4421 = vpop.f32.mrb[0].mxu0
        %v4422 = vadd.f32 0.0, %v4421
        %v4423 = vpop.f32.mrb[0].mxu0
        %4424 = vmatprep.mubr.bf16.mxu0 %v3681
        %4425 = vmatmul.mubr.bf16.gmra.mrb[0].mxu0 %v3680
        %v4426 = vpop.f32.mrb[0].mxu0
        %v4427 = vadd.f32 0.0, %v4426
        %v4428 = vpop.f32.mrb[0].mxu0
        %v4429 = vpop.f32.mrb[0].mxu0
        %v4430 = vadd.f32 0.0, %v4429
        %v4431 = vpop.f32.mrb[0].mxu0
        %4432 = vmatprep.mubr.bf16.mxu0 %v3690
        %4433 = vmatmul.mubr.bf16.gmra.mrb[0].mxu0 %v3689
        %v4434 = vpop.f32.mrb[0].mxu0
        %v4435 = vadd.f32 0.0, %v4434
        %v4436 = vpop.f32.mrb[0].mxu0
        %v4437 = vpop.f32.mrb[0].mxu0
        %v4438 = vadd.f32 0.0, %v4437
        %v4439 = vpop.f32.mrb[0].mxu0
        %4440 = vmatprep.mubr.bf16.mxu0 %v3699
        %4441 = vmatmul.mubr.bf16.gmra.mrb[0].mxu0 %v3698
        %v4442 = vpop.f32.mrb[0].mxu0
        %v4443 = vadd.f32 0.0, %v4442
        %v4444 = vpop.f32.mrb[0].mxu0
        %v4445 = vpop.f32.mrb[0].mxu0
        %v4446 = vadd.f32 0.0, %v4445
        %v4447 = vpop.f32.mrb[0].mxu0
        %4448 = vmatprep.mubr.bf16.mxu0 %v3708
        %4449 = vmatmul.mubr.bf16.gmra.mrb[0].mxu0 %v3707
        %v4450 = vpop.f32.mrb[0].mxu0
        %v4451 = vadd.f32 0.0, %v4450
        %v4452 = vpop.f32.mrb[0].mxu0
        %v4453 = vpop.f32.mrb[0].mxu0
        %v4454 = vadd.f32 0.0, %v4453
        %v4455 = vpop.f32.mrb[0].mxu0
        %4456 = vmatprep.mubr.bf16.mxu0 %v3717
        %4457 = vmatmul.mubr.bf16.gmra.mrb[0].mxu0 %v3716
        %v4458 = vpop.f32.mrb[0].mxu0
        %v4459 = vadd.f32 0.0, %v4458
        %v4460 = vpop.f32.mrb[0].mxu0
        %v4461 = vpop.f32.mrb[0].mxu0
        %v4462 = vadd.f32 0.0, %v4461
        %v4463 = vpop.f32.mrb[0].mxu0
        %4464 = vmatprep.mubr.bf16.mxu0 %v3726
        %4465 = vmatmul.mubr.bf16.gmra.mrb[0].mxu0 %v3725
        %v4466 = vpop.f32.mrb[0].mxu0
        %v4467 = vadd.f32 0.0, %v4466
        %v4468 = vpop.f32.mrb[0].mxu0
        %v4469 = vpop.f32.mrb[0].mxu0
        %v4470 = vadd.f32 0.0, %v4469
        %v4471 = vpop.f32.mrb[0].mxu0
        %4472 = vmatprep.mubr.bf16.mxu0 %v3735
        %4473 = vmatmul.mubr.bf16.gmra.mrb[0].mxu0 %v3734
        %v4474 = vpop.f32.mrb[0].mxu0
        %v4475 = vadd.f32 0.0, %v4474
        %v4476 = vpop.f32.mrb[0].mxu0
        %v4477 = vpop.f32.mrb[0].mxu0
        %v4478 = vadd.f32 0.0, %v4477
        %v4479 = vpop.f32.mrb[0].mxu0
        %4480 = vmatprep.mubr.bf16.mxu0 %v3744
        %4481 = vmatmul.mubr.bf16.gmra.mrb[0].mxu0 %v3743
        %v4482 = vpop.f32.mrb[0].mxu0
        %v4483 = vadd.f32 0.0, %v4482
        %v4484 = vpop.f32.mrb[0].mxu0
        %v4485 = vpop.f32.mrb[0].mxu0
        %v4486 = vadd.f32 0.0, %v4485
        %v4487 = vpop.f32.mrb[0].mxu0
        %4488 = vdwg.mxu0
        %4489 = vmatprep.subr.bf16.mxu0 0
        %4490 = vmatpush1.bf16.msra.mxu0 %v4200
        %4491 = vmatprep.subr.bf16.mxu0 0
        %4492 = vmatpush1.bf16.msra.mxu0 %v4201
        %4493 = vmatprep.subr.bf16.mxu0 0
        %4494 = vmatpush1.bf16.msra.mxu0 %v4202
        %4495 = vmatprep.subr.bf16.mxu0 0
        %4496 = vmatpush1.bf16.msra.mxu0 %v4203
        %4497 = vmatprep.subr.bf16.mxu0 0
        %4498 = vmatpush1.bf16.msra.mxu0 %v4204
        %4499 = vmatprep.subr.bf16.mxu0 0
        %4500 = vmatpush1.bf16.msra.mxu0 %v4205
        %4501 = vmatprep.subr.bf16.mxu0 0
        %4502 = vmatpush1.bf16.msra.mxu0 %v4206
        %4503 = vmatprep.subr.bf16.mxu0 0
        %4504 = vmatpush1.bf16.msra.mxu0 %v4207
        %4505 = vmatprep.subr.bf16.mxu0 0
        %4506 = vmatpush1.bf16.msra.mxu0 %v4208
        %4507 = vmatprep.subr.bf16.mxu0 0
        %4508 = vmatpush1.bf16.msra.mxu0 %v4209
        %4509 = vmatprep.subr.bf16.mxu0 0
        %4510 = vmatpush1.bf16.msra.mxu0 %v4210
        %4511 = vmatprep.subr.bf16.mxu0 0
        %4512 = vmatpush1.bf16.msra.mxu0 %v4211
        %4513 = vmatprep.subr.bf16.mxu0 0
        %4514 = vmatpush1.bf16.msra.mxu0 %v4212
        %4515 = vmatprep.subr.bf16.mxu0 0
        %4516 = vmatpush1.bf16.msra.mxu0 %v4213
        %4517 = vmatprep.subr.bf16.mxu0 0
        %4518 = vmatpush1.bf16.msra.mxu0 %v4214
        %4519 = vmatprep.subr.bf16.mxu0 0
        %4520 = vmatpush1.bf16.msra.mxu0 %v4215
        %4521 = vmatprep.mubr.bf16.mxu0 %v3611
        %4522 = vmatmul.mubr.bf16.gmra.mrb[0].mxu0 %v3610
        %v4523 = vpop.f32.mrb[0].mxu0
        %v4524 = vadd.f32 %v4363, %v4523
        %v4525 = vpop.f32.mrb[0].mxu0
        %v4526 = vpop.f32.mrb[0].mxu0
        %v4527 = vadd.f32 %v4366, %v4526
        %v4528 = vpop.f32.mrb[0].mxu0
        %4529 = vmatprep.mubr.bf16.mxu0 %v3620
        %4530 = vmatmul.mubr.bf16.gmra.mrb[0].mxu0 %v3619
        %v4531 = vpop.f32.mrb[0].mxu0
        %v4532 = vadd.f32 %v4371, %v4531
        %v4533 = vpop.f32.mrb[0].mxu0
        %v4534 = vpop.f32.mrb[0].mxu0
        %v4535 = vadd.f32 %v4374, %v4534
        %v4536 = vpop.f32.mrb[0].mxu0
        %4537 = vmatprep.mubr.bf16.mxu0 %v3629
        %4538 = vmatmul.mubr.bf16.gmra.mrb[0].mxu0 %v3628
        %v4539 = vpop.f32.mrb[0].mxu0
        %v4540 = vadd.f32 %v4379, %v4539
        %v4541 = vpop.f32.mrb[0].mxu0
        %v4542 = vpop.f32.mrb[0].mxu0
        %v4543 = vadd.f32 %v4382, %v4542
        %v4544 = vpop.f32.mrb[0].mxu0
        %4545 = vmatprep.mubr.bf16.mxu0 %v3638
        %4546 = vmatmul.mubr.bf16.gmra.mrb[0].mxu0 %v3637
        %v4547 = vpop.f32.mrb[0].mxu0
        %v4548 = vadd.f32 %v4387, %v4547
        %v4549 = vpop.f32.mrb[0].mxu0
        %v4550 = vpop.f32.mrb[0].mxu0
        %v4551 = vadd.f32 %v4390, %v4550
        %v4552 = vpop.f32.mrb[0].mxu0
        %4553 = vmatprep.mubr.bf16.mxu0 %v3647
        %4554 = vmatmul.mubr.bf16.gmra.mrb[0].mxu0 %v3646
        %v4555 = vpop.f32.mrb[0].mxu0
        %v4556 = vadd.f32 %v4395, %v4555
        %v4557 = vpop.f32.mrb[0].mxu0
        %v4558 = vpop.f32.mrb[0].mxu0
        %v4559 = vadd.f32 %v4398, %v4558
        %v4560 = vpop.f32.mrb[0].mxu0
        %4561 = vmatprep.mubr.bf16.mxu0 %v3656
        %4562 = vmatmul.mubr.bf16.gmra.mrb[0].mxu0 %v3655
        %v4563 = vpop.f32.mrb[0].mxu0
        %v4564 = vadd.f32 %v4403, %v4563
        %v4565 = vpop.f32.mrb[0].mxu0
        %v4566 = vpop.f32.mrb[0].mxu0
        %v4567 = vadd.f32 %v4406, %v4566
        %v4568 = vpop.f32.mrb[0].mxu0
        %4569 = vmatprep.mubr.bf16.mxu0 %v3665
        %4570 = vmatmul.mubr.bf16.gmra.mrb[0].mxu0 %v3664
        %v4571 = vpop.f32.mrb[0].mxu0
        %v4572 = vadd.f32 %v4411, %v4571
        %v4573 = vpop.f32.mrb[0].mxu0
        %v4574 = vpop.f32.mrb[0].mxu0
        %v4575 = vadd.f32 %v4414, %v4574
        %v4576 = vpop.f32.mrb[0].mxu0
        %4577 = vmatprep.mubr.bf16.mxu0 %v3674
        %4578 = vmatmul.mubr.bf16.gmra.mrb[0].mxu0 %v3673
        %v4579 = vpop.f32.mrb[0].mxu0
        %v4580 = vadd.f32 %v4419, %v4579
        %v4581 = vpop.f32.mrb[0].mxu0
        %v4582 = vpop.f32.mrb[0].mxu0
        %v4583 = vadd.f32 %v4422, %v4582
        %v4584 = vpop.f32.mrb[0].mxu0
        %4585 = vmatprep.mubr.bf16.mxu0 %v3683
        %4586 = vmatmul.mubr.bf16.gmra.mrb[0].mxu0 %v3682
        %v4587 = vpop.f32.mrb[0].mxu0
        %v4588 = vadd.f32 %v4427, %v4587
        %v4589 = vpop.f32.mrb[0].mxu0
        %v4590 = vpop.f32.mrb[0].mxu0
        %v4591 = vadd.f32 %v4430, %v4590
        %v4592 = vpop.f32.mrb[0].mxu0
        %4593 = vmatprep.mubr.bf16.mxu0 %v3692
        %4594 = vmatmul.mubr.bf16.gmra.mrb[0].mxu0 %v3691
        %v4595 = vpop.f32.mrb[0].mxu0
        %v4596 = vadd.f32 %v4435, %v4595
        %v4597 = vpop.f32.mrb[0].mxu0
        %v4598 = vpop.f32.mrb[0].mxu0
        %v4599 = vadd.f32 %v4438, %v4598
        %v4600 = vpop.f32.mrb[0].mxu0
        %4601 = vmatprep.mubr.bf16.mxu0 %v3701
        %4602 = vmatmul.mubr.bf16.gmra.mrb[0].mxu0 %v3700
        %v4603 = vpop.f32.mrb[0].mxu0
        %v4604 = vadd.f32 %v4443, %v4603
        %v4605 = vpop.f32.mrb[0].mxu0
        %v4606 = vpop.f32.mrb[0].mxu0
        %v4607 = vadd.f32 %v4446, %v4606
        %v4608 = vpop.f32.mrb[0].mxu0
        %4609 = vmatprep.mubr.bf16.mxu0 %v3710
        %4610 = vmatmul.mubr.bf16.gmra.mrb[0].mxu0 %v3709
        %v4611 = vpop.f32.mrb[0].mxu0
        %v4612 = vadd.f32 %v4451, %v4611
        %v4613 = vpop.f32.mrb[0].mxu0
        %v4614 = vpop.f32.mrb[0].mxu0
        %v4615 = vadd.f32 %v4454, %v4614
        %v4616 = vpop.f32.mrb[0].mxu0
        %4617 = vmatprep.mubr.bf16.mxu0 %v3719
        %4618 = vmatmul.mubr.bf16.gmra.mrb[0].mxu0 %v3718
        %v4619 = vpop.f32.mrb[0].mxu0
        %v4620 = vadd.f32 %v4459, %v4619
        %v4621 = vpop.f32.mrb[0].mxu0
        %v4622 = vpop.f32.mrb[0].mxu0
        %v4623 = vadd.f32 %v4462, %v4622
        %v4624 = vpop.f32.mrb[0].mxu0
        %4625 = vmatprep.mubr.bf16.mxu0 %v3728
        %4626 = vmatmul.mubr.bf16.gmra.mrb[0].mxu0 %v3727
        %v4627 = vpop.f32.mrb[0].mxu0
        %v4628 = vadd.f32 %v4467, %v4627
        %v4629 = vpop.f32.mrb[0].mxu0
        %v4630 = vpop.f32.mrb[0].mxu0
        %v4631 = vadd.f32 %v4470, %v4630
        %v4632 = vpop.f32.mrb[0].mxu0
        %4633 = vmatprep.mubr.bf16.mxu0 %v3737
        %4634 = vmatmul.mubr.bf16.gmra.mrb[0].mxu0 %v3736
        %v4635 = vpop.f32.mrb[0].mxu0
        %v4636 = vadd.f32 %v4475, %v4635
        %v4637 = vpop.f32.mrb[0].mxu0
        %v4638 = vpop.f32.mrb[0].mxu0
        %v4639 = vadd.f32 %v4478, %v4638
        %v4640 = vpop.f32.mrb[0].mxu0
        %4641 = vmatprep.mubr.bf16.mxu0 %v3746
        %4642 = vmatmul.mubr.bf16.gmra.mrb[0].mxu0 %v3745
        %v4643 = vpop.f32.mrb[0].mxu0
        %v4644 = vadd.f32 %v4483, %v4643
        %v4645 = vpop.f32.mrb[0].mxu0
        %v4646 = vpop.f32.mrb[0].mxu0
        %v4647 = vadd.f32 %v4486, %v4646
        %v4648 = vpop.f32.mrb[0].mxu0
        %4649 = vdwg.mxu0
        %4650 = vmatprep.subr.bf16.mxu0 0
        %4651 = vmatpush1.bf16.msra.mxu0 %v4216
        %4652 = vmatprep.subr.bf16.mxu0 0
        %4653 = vmatpush1.bf16.msra.mxu0 %v4217
        %4654 = vmatprep.subr.bf16.mxu0 0
        %4655 = vmatpush1.bf16.msra.mxu0 %v4218
        %4656 = vmatprep.subr.bf16.mxu0 0
        %4657 = vmatpush1.bf16.msra.mxu0 %v4219
        %4658 = vmatprep.subr.bf16.mxu0 0
        %4659 = vmatpush1.bf16.msra.mxu0 %v4220
        %4660 = vmatprep.subr.bf16.mxu0 0
        %4661 = vmatpush1.bf16.msra.mxu0 %v4221
        %4662 = vmatprep.subr.bf16.mxu0 0
        %4663 = vmatpush1.bf16.msra.mxu0 %v4222
        %4664 = vmatprep.subr.bf16.mxu0 0
        %4665 = vmatpush1.bf16.msra.mxu0 %v4223
        %4666 = vmatprep.subr.bf16.mxu0 0
        %4667 = vmatpush1.bf16.msra.mxu0 %v4224
        %4668 = vmatprep.subr.bf16.mxu0 0
        %4669 = vmatpush1.bf16.msra.mxu0 %v4225
        %4670 = vmatprep.subr.bf16.mxu0 0
        %4671 = vmatpush1.bf16.msra.mxu0 %v4226
        %4672 = vmatprep.subr.bf16.mxu0 0
        %4673 = vmatpush1.bf16.msra.mxu0 %v4227
        %4674 = vmatprep.subr.bf16.mxu0 0
        %4675 = vmatpush1.bf16.msra.mxu0 %v4228
        %4676 = vmatprep.subr.bf16.mxu0 0
        %4677 = vmatpush1.bf16.msra.mxu0 %v4229
        %4678 = vmatprep.subr.bf16.mxu0 0
        %4679 = vmatpush1.bf16.msra.mxu0 %v4230
        %4680 = vmatprep.subr.bf16.mxu0 0
        %4681 = vmatpush1.bf16.msra.mxu0 %v4231
        %4682 = vmatprep.mubr.bf16.mxu0 %v3613
        %4683 = vmatmul.mubr.bf16.gmra.mrb[0].mxu0 %v3612
        %v4684 = vpop.f32.mrb[0].mxu0
        %v4685 = vadd.f32 %v4524, %v4684
        %v4686 = vpop.f32.mrb[0].mxu0
        %v4687 = vpop.f32.mrb[0].mxu0
        %v4688 = vadd.f32 %v4527, %v4687
        %v4689 = vpop.f32.mrb[0].mxu0
        %4690 = vmatprep.mubr.bf16.mxu0 %v3622
        %4691 = vmatmul.mubr.bf16.gmra.mrb[0].mxu0 %v3621
        %v4692 = vpop.f32.mrb[0].mxu0
        %v4693 = vadd.f32 %v4532, %v4692
        %v4694 = vpop.f32.mrb[0].mxu0
        %v4695 = vpop.f32.mrb[0].mxu0
        %v4696 = vadd.f32 %v4535, %v4695
        %v4697 = vpop.f32.mrb[0].mxu0
        %4698 = vmatprep.mubr.bf16.mxu0 %v3631
        %4699 = vmatmul.mubr.bf16.gmra.mrb[0].mxu0 %v3630
        %v4700 = vpop.f32.mrb[0].mxu0
        %v4701 = vadd.f32 %v4540, %v4700
        %v4702 = vpop.f32.mrb[0].mxu0
        %v4703 = vpop.f32.mrb[0].mxu0
        %v4704 = vadd.f32 %v4543, %v4703
        %v4705 = vpop.f32.mrb[0].mxu0
        %4706 = vmatprep.mubr.bf16.mxu0 %v3640
        %4707 = vmatmul.mubr.bf16.gmra.mrb[0].mxu0 %v3639
        %v4708 = vpop.f32.mrb[0].mxu0
        %v4709 = vadd.f32 %v4548, %v4708
        %v4710 = vpop.f32.mrb[0].mxu0
        %v4711 = vpop.f32.mrb[0].mxu0
        %v4712 = vadd.f32 %v4551, %v4711
        %v4713 = vpop.f32.mrb[0].mxu0
        %4714 = vmatprep.mubr.bf16.mxu0 %v3649
        %4715 = vmatmul.mubr.bf16.gmra.mrb[0].mxu0 %v3648
        %v4716 = vpop.f32.mrb[0].mxu0
        %v4717 = vadd.f32 %v4556, %v4716
        %v4718 = vpop.f32.mrb[0].mxu0
        %v4719 = vpop.f32.mrb[0].mxu0
        %v4720 = vadd.f32 %v4559, %v4719
        %v4721 = vpop.f32.mrb[0].mxu0
        %4722 = vmatprep.mubr.bf16.mxu0 %v3658
        %4723 = vmatmul.mubr.bf16.gmra.mrb[0].mxu0 %v3657
        %v4724 = vpop.f32.mrb[0].mxu0
        %v4725 = vadd.f32 %v4564, %v4724
        %v4726 = vpop.f32.mrb[0].mxu0
        %v4727 = vpop.f32.mrb[0].mxu0
        %v4728 = vadd.f32 %v4567, %v4727
        %v4729 = vpop.f32.mrb[0].mxu0
        %4730 = vmatprep.mubr.bf16.mxu0 %v3667
        %4731 = vmatmul.mubr.bf16.gmra.mrb[0].mxu0 %v3666
        %v4732 = vpop.f32.mrb[0].mxu0
        %v4733 = vadd.f32 %v4572, %v4732
        %v4734 = vpop.f32.mrb[0].mxu0
        %v4735 = vpop.f32.mrb[0].mxu0
        %v4736 = vadd.f32 %v4575, %v4735
        %v4737 = vpop.f32.mrb[0].mxu0
        %4738 = vmatprep.mubr.bf16.mxu0 %v3676
        %4739 = vmatmul.mubr.bf16.gmra.mrb[0].mxu0 %v3675
        %v4740 = vpop.f32.mrb[0].mxu0
        %v4741 = vadd.f32 %v4580, %v4740
        %v4742 = vpop.f32.mrb[0].mxu0
        %v4743 = vpop.f32.mrb[0].mxu0
        %v4744 = vadd.f32 %v4583, %v4743
        %v4745 = vpop.f32.mrb[0].mxu0
        %4746 = vmatprep.mubr.bf16.mxu0 %v3685
        %4747 = vmatmul.mubr.bf16.gmra.mrb[0].mxu0 %v3684
        %v4748 = vpop.f32.mrb[0].mxu0
        %v4749 = vadd.f32 %v4588, %v4748
        %v4750 = vpop.f32.mrb[0].mxu0
        %v4751 = vpop.f32.mrb[0].mxu0
        %v4752 = vadd.f32 %v4591, %v4751
        %v4753 = vpop.f32.mrb[0].mxu0
        %4754 = vmatprep.mubr.bf16.mxu0 %v3694
        %4755 = vmatmul.mubr.bf16.gmra.mrb[0].mxu0 %v3693
        %v4756 = vpop.f32.mrb[0].mxu0
        %v4757 = vadd.f32 %v4596, %v4756
        %v4758 = vpop.f32.mrb[0].mxu0
        %v4759 = vpop.f32.mrb[0].mxu0
        %v4760 = vadd.f32 %v4599, %v4759
        %v4761 = vpop.f32.mrb[0].mxu0
        %4762 = vmatprep.mubr.bf16.mxu0 %v3703
        %4763 = vmatmul.mubr.bf16.gmra.mrb[0].mxu0 %v3702
        %v4764 = vpop.f32.mrb[0].mxu0
        %v4765 = vadd.f32 %v4604, %v4764
        %v4766 = vpop.f32.mrb[0].mxu0
        %v4767 = vpop.f32.mrb[0].mxu0
        %v4768 = vadd.f32 %v4607, %v4767
        %v4769 = vpop.f32.mrb[0].mxu0
        %4770 = vmatprep.mubr.bf16.mxu0 %v3712
        %4771 = vmatmul.mubr.bf16.gmra.mrb[0].mxu0 %v3711
        %v4772 = vpop.f32.mrb[0].mxu0
        %v4773 = vadd.f32 %v4612, %v4772
        %v4774 = vpop.f32.mrb[0].mxu0
        %v4775 = vpop.f32.mrb[0].mxu0
        %v4776 = vadd.f32 %v4615, %v4775
        %v4777 = vpop.f32.mrb[0].mxu0
        %4778 = vmatprep.mubr.bf16.mxu0 %v3721
        %4779 = vmatmul.mubr.bf16.gmra.mrb[0].mxu0 %v3720
        %v4780 = vpop.f32.mrb[0].mxu0
        %v4781 = vadd.f32 %v4620, %v4780
        %v4782 = vpop.f32.mrb[0].mxu0
        %v4783 = vpop.f32.mrb[0].mxu0
        %v4784 = vadd.f32 %v4623, %v4783
        %v4785 = vpop.f32.mrb[0].mxu0
        %4786 = vmatprep.mubr.bf16.mxu0 %v3730
        %4787 = vmatmul.mubr.bf16.gmra.mrb[0].mxu0 %v3729
        %v4788 = vpop.f32.mrb[0].mxu0
        %v4789 = vadd.f32 %v4628, %v4788
        %v4790 = vpop.f32.mrb[0].mxu0
        %v4791 = vpop.f32.mrb[0].mxu0
        %v4792 = vadd.f32 %v4631, %v4791
        %v4793 = vpop.f32.mrb[0].mxu0
        %4794 = vmatprep.mubr.bf16.mxu0 %v3739
        %4795 = vmatmul.mubr.bf16.gmra.mrb[0].mxu0 %v3738
        %v4796 = vpop.f32.mrb[0].mxu0
        %v4797 = vadd.f32 %v4636, %v4796
        %v4798 = vpop.f32.mrb[0].mxu0
        %v4799 = vpop.f32.mrb[0].mxu0
        %v4800 = vadd.f32 %v4639, %v4799
        %v4801 = vpop.f32.mrb[0].mxu0
        %4802 = vmatprep.mubr.bf16.mxu0 %v3748
        %4803 = vmatmul.mubr.bf16.gmra.mrb[0].mxu0 %v3747
        %v4804 = vpop.f32.mrb[0].mxu0
        %v4805 = vadd.f32 %v4644, %v4804
        %v4806 = vpop.f32.mrb[0].mxu0
        %v4807 = vpop.f32.mrb[0].mxu0
        %v4808 = vadd.f32 %v4647, %v4807
        %v4809 = vpop.f32.mrb[0].mxu0
        %4810 = vdwg.mxu0
        %4811 = vmatprep.subr.bf16.mxu0 0
        %4812 = vmatpush1.bf16.msra.mxu0 %v4232
        %4813 = vmatprep.subr.bf16.mxu0 0
        %4814 = vmatpush1.bf16.msra.mxu0 %v4233
        %4815 = vmatprep.subr.bf16.mxu0 0
        %4816 = vmatpush1.bf16.msra.mxu0 %v4234
        %4817 = vmatprep.subr.bf16.mxu0 0
        %4818 = vmatpush1.bf16.msra.mxu0 %v4235
        %4819 = vmatprep.subr.bf16.mxu0 0
        %4820 = vmatpush1.bf16.msra.mxu0 %v4236
        %4821 = vmatprep.subr.bf16.mxu0 0
        %4822 = vmatpush1.bf16.msra.mxu0 %v4237
        %4823 = vmatprep.subr.bf16.mxu0 0
        %4824 = vmatpush1.bf16.msra.mxu0 %v4238
        %4825 = vmatprep.subr.bf16.mxu0 0
        %4826 = vmatpush1.bf16.msra.mxu0 %v4239
        %4827 = vmatprep.subr.bf16.mxu0 0
        %4828 = vmatpush1.bf16.msra.mxu0 %v4240
        %4829 = vmatprep.subr.bf16.mxu0 0
        %4830 = vmatpush1.bf16.msra.mxu0 %v4241
        %4831 = vmatprep.subr.bf16.mxu0 0
        %4832 = vmatpush1.bf16.msra.mxu0 %v4242
        %4833 = vmatprep.subr.bf16.mxu0 0
        %4834 = vmatpush1.bf16.msra.mxu0 %v4243
        %4835 = vmatprep.subr.bf16.mxu0 0
        %4836 = vmatpush1.bf16.msra.mxu0 %v4244
        %4837 = vmatprep.subr.bf16.mxu0 0
        %4838 = vmatpush1.bf16.msra.mxu0 %v4245
        %4839 = vmatprep.subr.bf16.mxu0 0
        %4840 = vmatpush1.bf16.msra.mxu0 %v4246
        %4841 = vmatprep.subr.bf16.mxu0 0
        %4842 = vmatpush1.bf16.msra.mxu0 %v4247
        %4843 = vmatprep.mubr.bf16.mxu0 %v3615
        %4844 = vmatmul.mubr.bf16.gmra.mrb[0].mxu0 %v3614
        %v4845 = vpop.f32.mrb[0].mxu0
        %v4846 = vadd.f32 %v4685, %v4845
        %v4847 = vpop.f32.mrb[0].mxu0
        %v4848 = vpop.f32.mrb[0].mxu0
        %v4849 = vadd.f32 %v4688, %v4848
        %v4850 = vpop.f32.mrb[0].mxu0
        %4851 = vmatprep.mubr.bf16.mxu0 %v3624
        %4852 = vmatmul.mubr.bf16.gmra.mrb[0].mxu0 %v3623
        %v4853 = vpop.f32.mrb[0].mxu0
        %v4854 = vadd.f32 %v4693, %v4853
        %v4855 = vpop.f32.mrb[0].mxu0
        %v4856 = vpop.f32.mrb[0].mxu0
        %v4857 = vadd.f32 %v4696, %v4856
        %v4858 = vpop.f32.mrb[0].mxu0
        %4859 = vmatprep.mubr.bf16.mxu0 %v3633
        %4860 = vmatmul.mubr.bf16.gmra.mrb[0].mxu0 %v3632
        %v4861 = vpop.f32.mrb[0].mxu0
        %v4862 = vadd.f32 %v4701, %v4861
        %v4863 = vpop.f32.mrb[0].mxu0
        %v4864 = vpop.f32.mrb[0].mxu0
        %v4865 = vadd.f32 %v4704, %v4864
        %v4866 = vpop.f32.mrb[0].mxu0
        %4867 = vmatprep.mubr.bf16.mxu0 %v3642
        %4868 = vmatmul.mubr.bf16.gmra.mrb[0].mxu0 %v3641
        %v4869 = vpop.f32.mrb[0].mxu0
        %v4870 = vadd.f32 %v4709, %v4869
        %v4871 = vpop.f32.mrb[0].mxu0
        %v4872 = vpop.f32.mrb[0].mxu0
        %v4873 = vadd.f32 %v4712, %v4872
        %v4874 = vpop.f32.mrb[0].mxu0
        %4875 = vmatprep.mubr.bf16.mxu0 %v3651
        %4876 = vmatmul.mubr.bf16.gmra.mrb[0].mxu0 %v3650
        %v4877 = vpop.f32.mrb[0].mxu0
        %v4878 = vadd.f32 %v4717, %v4877
        %v4879 = vpop.f32.mrb[0].mxu0
        %v4880 = vpop.f32.mrb[0].mxu0
        %v4881 = vadd.f32 %v4720, %v4880
        %v4882 = vpop.f32.mrb[0].mxu0
        %4883 = vmatprep.mubr.bf16.mxu0 %v3660
        %4884 = vmatmul.mubr.bf16.gmra.mrb[0].mxu0 %v3659
        %v4885 = vpop.f32.mrb[0].mxu0
        %v4886 = vadd.f32 %v4725, %v4885
        %v4887 = vpop.f32.mrb[0].mxu0
        %v4888 = vpop.f32.mrb[0].mxu0
        %v4889 = vadd.f32 %v4728, %v4888
        %v4890 = vpop.f32.mrb[0].mxu0
        %4891 = vmatprep.mubr.bf16.mxu0 %v3669
        %4892 = vmatmul.mubr.bf16.gmra.mrb[0].mxu0 %v3668
        %v4893 = vpop.f32.mrb[0].mxu0
        %v4894 = vadd.f32 %v4733, %v4893
        %v4895 = vpop.f32.mrb[0].mxu0
        %v4896 = vpop.f32.mrb[0].mxu0
        %v4897 = vadd.f32 %v4736, %v4896
        %v4898 = vpop.f32.mrb[0].mxu0
        %4899 = vmatprep.mubr.bf16.mxu0 %v3678
        %4900 = vmatmul.mubr.bf16.gmra.mrb[0].mxu0 %v3677
        %v4901 = vpop.f32.mrb[0].mxu0
        %v4902 = vadd.f32 %v4741, %v4901
        %v4903 = vpop.f32.mrb[0].mxu0
        %v4904 = vpop.f32.mrb[0].mxu0
        %v4905 = vadd.f32 %v4744, %v4904
        %v4906 = vpop.f32.mrb[0].mxu0
        %4907 = vmatprep.mubr.bf16.mxu0 %v3687
        %4908 = vmatmul.mubr.bf16.gmra.mrb[0].mxu0 %v3686
        %v4909 = vpop.f32.mrb[0].mxu0
        %v4910 = vadd.f32 %v4749, %v4909
        %v4911 = vpop.f32.mrb[0].mxu0
        %v4912 = vpop.f32.mrb[0].mxu0
        %v4913 = vadd.f32 %v4752, %v4912
        %v4914 = vpop.f32.mrb[0].mxu0
        %4915 = vmatprep.mubr.bf16.mxu0 %v3696
        %4916 = vmatmul.mubr.bf16.gmra.mrb[0].mxu0 %v3695
        %v4917 = vpop.f32.mrb[0].mxu0
        %v4918 = vadd.f32 %v4757, %v4917
        %v4919 = vpop.f32.mrb[0].mxu0
        %v4920 = vpop.f32.mrb[0].mxu0
        %v4921 = vadd.f32 %v4760, %v4920
        %v4922 = vpop.f32.mrb[0].mxu0
        %4923 = vmatprep.mubr.bf16.mxu0 %v3705
        %4924 = vmatmul.mubr.bf16.gmra.mrb[0].mxu0 %v3704
        %v4925 = vpop.f32.mrb[0].mxu0
        %v4926 = vadd.f32 %v4765, %v4925
        %v4927 = vpop.f32.mrb[0].mxu0
        %v4928 = vpop.f32.mrb[0].mxu0
        %v4929 = vadd.f32 %v4768, %v4928
        %v4930 = vpop.f32.mrb[0].mxu0
        %4931 = vmatprep.mubr.bf16.mxu0 %v3714
        %4932 = vmatmul.mubr.bf16.gmra.mrb[0].mxu0 %v3713
        %v4933 = vpop.f32.mrb[0].mxu0
        %v4934 = vadd.f32 %v4773, %v4933
        %v4935 = vpop.f32.mrb[0].mxu0
        %v4936 = vpop.f32.mrb[0].mxu0
        %v4937 = vadd.f32 %v4776, %v4936
        %v4938 = vpop.f32.mrb[0].mxu0
        %4939 = vmatprep.mubr.bf16.mxu0 %v3723
        %4940 = vmatmul.mubr.bf16.gmra.mrb[0].mxu0 %v3722
        %v4941 = vpop.f32.mrb[0].mxu0
        %v4942 = vadd.f32 %v4781, %v4941
        %v4943 = vpop.f32.mrb[0].mxu0
        %v4944 = vpop.f32.mrb[0].mxu0
        %v4945 = vadd.f32 %v4784, %v4944
        %v4946 = vpop.f32.mrb[0].mxu0
        %4947 = vmatprep.mubr.bf16.mxu0 %v3732
        %4948 = vmatmul.mubr.bf16.gmra.mrb[0].mxu0 %v3731
        %v4949 = vpop.f32.mrb[0].mxu0
        %v4950 = vadd.f32 %v4789, %v4949
        %v4951 = vpop.f32.mrb[0].mxu0
        %v4952 = vpop.f32.mrb[0].mxu0
        %v4953 = vadd.f32 %v4792, %v4952
        %v4954 = vpop.f32.mrb[0].mxu0
        %4955 = vmatprep.mubr.bf16.mxu0 %v3741
        %4956 = vmatmul.mubr.bf16.gmra.mrb[0].mxu0 %v3740
        %v4957 = vpop.f32.mrb[0].mxu0
        %v4958 = vadd.f32 %v4797, %v4957
        %v4959 = vpop.f32.mrb[0].mxu0
        %v4960 = vpop.f32.mrb[0].mxu0
        %v4961 = vadd.f32 %v4800, %v4960
        %v4962 = vpop.f32.mrb[0].mxu0
        %4963 = vmatprep.mubr.bf16.mxu0 %v3750
        %4964 = vmatmul.mubr.bf16.gmra.mrb[0].mxu0 %v3749
        %v4965 = vpop.f32.mrb[0].mxu0
        %v4966 = vadd.f32 %v4805, %v4965
        %v4967 = vpop.f32.mrb[0].mxu0
        %v4968 = vpop.f32.mrb[0].mxu0
        %v4969 = vadd.f32 %v4808, %v4968
        %v4970 = vpop.f32.mrb[0].mxu0
        %4971 = vdwg.mxu0
        %4972 = vmatprep.subr.bf16.mxu0 0
        %4973 = vmatpush1.bf16.msra.mxu0 %v4248
        %4974 = vmatprep.subr.bf16.mxu0 0
        %4975 = vmatpush1.bf16.msra.mxu0 %v4249
        %4976 = vmatprep.subr.bf16.mxu0 0
        %4977 = vmatpush1.bf16.msra.mxu0 %v4250
        %4978 = vmatprep.subr.bf16.mxu0 0
        %4979 = vmatpush1.bf16.msra.mxu0 %v4251
        %4980 = vmatprep.subr.bf16.mxu0 0
        %4981 = vmatpush1.bf16.msra.mxu0 %v4252
        %4982 = vmatprep.subr.bf16.mxu0 0
        %4983 = vmatpush1.bf16.msra.mxu0 %v4253
        %4984 = vmatprep.subr.bf16.mxu0 0
        %4985 = vmatpush1.bf16.msra.mxu0 %v4254
        %4986 = vmatprep.subr.bf16.mxu0 0
        %4987 = vmatpush1.bf16.msra.mxu0 %v4255
        %4988 = vmatprep.subr.bf16.mxu0 0
        %4989 = vmatpush1.bf16.msra.mxu0 0
        %4990 = vmatprep.subr.bf16.mxu0 0
        %4991 = vmatpush1.bf16.msra.mxu0 0
        %4992 = vmatprep.subr.bf16.mxu0 0
        %4993 = vmatpush1.bf16.msra.mxu0 0
        %4994 = vmatprep.subr.bf16.mxu0 0
        %4995 = vmatpush1.bf16.msra.mxu0 0
        %4996 = vmatprep.subr.bf16.mxu0 0
        %4997 = vmatpush1.bf16.msra.mxu0 0
        %4998 = vmatprep.subr.bf16.mxu0 0
        %4999 = vmatpush1.bf16.msra.mxu0 0
        %5000 = vmatprep.subr.bf16.mxu0 0
        %5001 = vmatpush1.bf16.msra.mxu0 0
        %5002 = vmatprep.subr.bf16.mxu0 0
        %5003 = vmatpush1.bf16.msra.mxu0 0
        %5004 = vmatprep.mubr.bf16.mxu0 0
        %5005 = vmatmul.mubr.bf16.gmra.mrb[0].mxu0 %v3616
        %v5006 = vpop.f32.mrb[0].mxu0
        %v5007 = vadd.f32 %v4846, %v5006
        %v5008 = vpop.f32.mrb[0].mxu0
        %v5009 = vpop.f32.mrb[0].mxu0
        %v5010 = vadd.f32 %v4849, %v5009
        %v5011 = vpop.f32.mrb[0].mxu0
        %5012 = vmatprep.mubr.bf16.mxu0 0
        %5013 = vmatmul.mubr.bf16.gmra.mrb[0].mxu0 %v3625
        %v5014 = vpop.f32.mrb[0].mxu0
        %v5015 = vadd.f32 %v4854, %v5014
        %v5016 = vpop.f32.mrb[0].mxu0
        %v5017 = vpop.f32.mrb[0].mxu0
        %v5018 = vadd.f32 %v4857, %v5017
        %v5019 = vpop.f32.mrb[0].mxu0
        %5020 = vmatprep.mubr.bf16.mxu0 0
        %5021 = vmatmul.mubr.bf16.gmra.mrb[0].mxu0 %v3634
        %v5022 = vpop.f32.mrb[0].mxu0
        %v5023 = vadd.f32 %v4862, %v5022
        %v5024 = vpop.f32.mrb[0].mxu0
        %v5025 = vpop.f32.mrb[0].mxu0
        %v5026 = vadd.f32 %v4865, %v5025
        %v5027 = vpop.f32.mrb[0].mxu0
        %5028 = vmatprep.mubr.bf16.mxu0 0
        %5029 = vmatmul.mubr.bf16.gmra.mrb[0].mxu0 %v3643
        %v5030 = vpop.f32.mrb[0].mxu0
        %v5031 = vadd.f32 %v4870, %v5030
        %v5032 = vpop.f32.mrb[0].mxu0
        %v5033 = vpop.f32.mrb[0].mxu0
        %v5034 = vadd.f32 %v4873, %v5033
        %v5035 = vpop.f32.mrb[0].mxu0
        %5036 = vmatprep.mubr.bf16.mxu0 0
        %5037 = vmatmul.mubr.bf16.gmra.mrb[0].mxu0 %v3652
        %v5038 = vpop.f32.mrb[0].mxu0
        %v5039 = vadd.f32 %v4878, %v5038
        %v5040 = vpop.f32.mrb[0].mxu0
        %v5041 = vpop.f32.mrb[0].mxu0
        %v5042 = vadd.f32 %v4881, %v5041
        %v5043 = vpop.f32.mrb[0].mxu0
        %5044 = vmatprep.mubr.bf16.mxu0 0
        %5045 = vmatmul.mubr.bf16.gmra.mrb[0].mxu0 %v3661
        %v5046 = vpop.f32.mrb[0].mxu0
        %v5047 = vadd.f32 %v4886, %v5046
        %v5048 = vpop.f32.mrb[0].mxu0
        %v5049 = vpop.f32.mrb[0].mxu0
        %v5050 = vadd.f32 %v4889, %v5049
        %v5051 = vpop.f32.mrb[0].mxu0
        %5052 = vmatprep.mubr.bf16.mxu0 0
        %5053 = vmatmul.mubr.bf16.gmra.mrb[0].mxu0 %v3670
        %v5054 = vpop.f32.mrb[0].mxu0
        %v5055 = vadd.f32 %v4894, %v5054
        %v5056 = vpop.f32.mrb[0].mxu0
        %v5057 = vpop.f32.mrb[0].mxu0
        %v5058 = vadd.f32 %v4897, %v5057
        %v5059 = vpop.f32.mrb[0].mxu0
        %5060 = vmatprep.mubr.bf16.mxu0 0
        %5061 = vmatmul.mubr.bf16.gmra.mrb[0].mxu0 %v3679
        %v5062 = vpop.f32.mrb[0].mxu0
        %v5063 = vadd.f32 %v4902, %v5062
        %v5064 = vpop.f32.mrb[0].mxu0
        %v5065 = vpop.f32.mrb[0].mxu0
        %v5066 = vadd.f32 %v4905, %v5065
        %v5067 = vpop.f32.mrb[0].mxu0
        %5068 = vmatprep.mubr.bf16.mxu0 0
        %5069 = vmatmul.mubr.bf16.gmra.mrb[0].mxu0 %v3688
        %v5070 = vpop.f32.mrb[0].mxu0
        %v5071 = vadd.f32 %v4910, %v5070
        %v5072 = vpop.f32.mrb[0].mxu0
        %v5073 = vpop.f32.mrb[0].mxu0
        %v5074 = vadd.f32 %v4913, %v5073
        %v5075 = vpop.f32.mrb[0].mxu0
        %5076 = vmatprep.mubr.bf16.mxu0 0
        %5077 = vmatmul.mubr.bf16.gmra.mrb[0].mxu0 %v3697
        %v5078 = vpop.f32.mrb[0].mxu0
        %v5079 = vadd.f32 %v4918, %v5078
        %v5080 = vpop.f32.mrb[0].mxu0
        %v5081 = vpop.f32.mrb[0].mxu0
        %v5082 = vadd.f32 %v4921, %v5081
        %v5083 = vpop.f32.mrb[0].mxu0
        %5084 = vmatprep.mubr.bf16.mxu0 0
        %5085 = vmatmul.mubr.bf16.gmra.mrb[0].mxu0 %v3706
        %v5086 = vpop.f32.mrb[0].mxu0
        %v5087 = vadd.f32 %v4926, %v5086
        %v5088 = vpop.f32.mrb[0].mxu0
        %v5089 = vpop.f32.mrb[0].mxu0
        %v5090 = vadd.f32 %v4929, %v5089
        %v5091 = vpop.f32.mrb[0].mxu0
        %5092 = vmatprep.mubr.bf16.mxu0 0
        %5093 = vmatmul.mubr.bf16.gmra.mrb[0].mxu0 %v3715
        %v5094 = vpop.f32.mrb[0].mxu0
        %v5095 = vadd.f32 %v4934, %v5094
        %v5096 = vpop.f32.mrb[0].mxu0
        %v5097 = vpop.f32.mrb[0].mxu0
        %v5098 = vadd.f32 %v4937, %v5097
        %v5099 = vpop.f32.mrb[0].mxu0
        %5100 = vmatprep.mubr.bf16.mxu0 0
        %5101 = vmatmul.mubr.bf16.gmra.mrb[0].mxu0 %v3724
        %v5102 = vpop.f32.mrb[0].mxu0
        %v5103 = vadd.f32 %v4942, %v5102
        %v5104 = vpop.f32.mrb[0].mxu0
        %v5105 = vpop.f32.mrb[0].mxu0
        %v5106 = vadd.f32 %v4945, %v5105
        %v5107 = vpop.f32.mrb[0].mxu0
        %5108 = vmatprep.mubr.bf16.mxu0 0
        %5109 = vmatmul.mubr.bf16.gmra.mrb[0].mxu0 %v3733
        %v5110 = vpop.f32.mrb[0].mxu0
        %v5111 = vadd.f32 %v4950, %v5110
        %v5112 = vpop.f32.mrb[0].mxu0
        %v5113 = vpop.f32.mrb[0].mxu0
        %v5114 = vadd.f32 %v4953, %v5113
        %v5115 = vpop.f32.mrb[0].mxu0
        %5116 = vmatprep.mubr.bf16.mxu0 0
        %5117 = vmatmul.mubr.bf16.gmra.mrb[0].mxu0 %v3742
        %v5118 = vpop.f32.mrb[0].mxu0
        %v5119 = vadd.f32 %v4958, %v5118
        %v5120 = vpop.f32.mrb[0].mxu0
        %v5121 = vpop.f32.mrb[0].mxu0
        %v5122 = vadd.f32 %v4961, %v5121
        %v5123 = vpop.f32.mrb[0].mxu0
        %5124 = vmatprep.mubr.bf16.mxu0 0
        %5125 = vmatmul.mubr.bf16.gmra.mrb[0].mxu0 %v3751
        %v5126 = vpop.f32.mrb[0].mxu0
        %v5127 = vadd.f32 %v4966, %v5126
        %v5128 = vpop.f32.mrb[0].mxu0
        %v5129 = vpop.f32.mrb[0].mxu0
        %v5130 = vadd.f32 %v4969, %v5129
        %v5131 = vpop.f32.mrb[0].mxu0
        %5132 = vdwg.mxu0
        %v5133 = vld [vmem:[%s5] sm:$0x1]
        %v5135 = vlaneseq
        %v5136 = vshrl.u32 %v5135, 7
        %v5137 = vsub.s32 0, %v5136
        %v5138 = vrot.slane %v5133, %v5137
        %v5140 = vmul.f32 %v5007, %v5138
        %v5141 = vmul.f32 %v5010, %v5138
        %v5142 = vmul.f32 %v5015, %v5138
        %v5143 = vmul.f32 %v5018, %v5138
        %v5144 = vmul.f32 %v5023, %v5138
        %v5145 = vmul.f32 %v5026, %v5138
        %v5146 = vmul.f32 %v5031, %v5138
        %v5147 = vmul.f32 %v5034, %v5138
        %v5148 = vmul.f32 %v5039, %v5138
        %v5149 = vmul.f32 %v5042, %v5138
        %v5150 = vmul.f32 %v5047, %v5138
        %v5151 = vmul.f32 %v5050, %v5138
        %v5152 = vmul.f32 %v5055, %v5138
        %v5153 = vmul.f32 %v5058, %v5138
        %v5154 = vmul.f32 %v5063, %v5138
        %v5155 = vmul.f32 %v5066, %v5138
        %v5156 = vmul.f32 %v5071, %v5138
        %v5157 = vmul.f32 %v5074, %v5138
        %v5158 = vmul.f32 %v5079, %v5138
        %v5159 = vmul.f32 %v5082, %v5138
        %v5160 = vmul.f32 %v5087, %v5138
        %v5161 = vmul.f32 %v5090, %v5138
        %v5162 = vmul.f32 %v5095, %v5138
        %v5163 = vmul.f32 %v5098, %v5138
        %v5164 = vmul.f32 %v5103, %v5138
        %v5165 = vmul.f32 %v5106, %v5138
        %v5166 = vmul.f32 %v5111, %v5138
        %v5167 = vmul.f32 %v5114, %v5138
        %v5168 = vmul.f32 %v5119, %v5138
        %v5169 = vmul.f32 %v5122, %v5138
        %v5170 = vmul.f32 %v5127, %v5138
        %v5171 = vmul.f32 %v5130, %v5138
        %v5172 = vld [vmem:[%s6] sm:$0x1]
        %v5174 = vlaneseq
        %v5175 = vshrl.u32 %v5174, 7
        %v5176 = vsub.s32 0, %v5175
        %v5177 = vrot.slane %v5172, %v5176
        %v5179 = vadd.f32 %v5140, %v5177
        %v5180 = vadd.f32 %v5141, %v5177
        %v5181 = vadd.f32 %v5142, %v5177
        %v5182 = vadd.f32 %v5143, %v5177
        %v5183 = vadd.f32 %v5144, %v5177
        %v5184 = vadd.f32 %v5145, %v5177
        %v5185 = vadd.f32 %v5146, %v5177
        %v5186 = vadd.f32 %v5147, %v5177
        %v5187 = vadd.f32 %v5148, %v5177
        %v5188 = vadd.f32 %v5149, %v5177
        %v5189 = vadd.f32 %v5150, %v5177
        %v5190 = vadd.f32 %v5151, %v5177
        %v5191 = vadd.f32 %v5152, %v5177
        %v5192 = vadd.f32 %v5153, %v5177
        %v5193 = vadd.f32 %v5154, %v5177
        %v5194 = vadd.f32 %v5155, %v5177
        %v5195 = vadd.f32 %v5156, %v5177
        %v5196 = vadd.f32 %v5157, %v5177
        %v5197 = vadd.f32 %v5158, %v5177
        %v5198 = vadd.f32 %v5159, %v5177
        %v5199 = vadd.f32 %v5160, %v5177
        %v5200 = vadd.f32 %v5161, %v5177
        %v5201 = vadd.f32 %v5162, %v5177
        %v5202 = vadd.f32 %v5163, %v5177
        %v5203 = vadd.f32 %v5164, %v5177
        %v5204 = vadd.f32 %v5165, %v5177
        %v5205 = vadd.f32 %v5166, %v5177
        %v5206 = vadd.f32 %v5167, %v5177
        %v5207 = vadd.f32 %v5168, %v5177
        %v5208 = vadd.f32 %v5169, %v5177
        %v5209 = vadd.f32 %v5170, %v5177
        %v5210 = vadd.f32 %v5171, %v5177
        %v5211 = vld [vmem:[#allocation4] sm:$0xff]
        %v5212 = vld [vmem:[#allocation4 + $0x8] sm:$0xff]
        %v5213 = vld [vmem:[#allocation4 + $0x10] sm:$0xff]
        %v5214 = vld [vmem:[#allocation4 + $0x18] sm:$0xff]
        %v5215 = vld [vmem:[#allocation4 + $0x20] sm:$0xff]
        %v5216 = vld [vmem:[#allocation4 + $0x28] sm:$0xff]
        %v5217 = vld [vmem:[#allocation4 + $0x30] sm:$0xff]
        %v5218 = vld [vmem:[#allocation4 + $0x38] sm:$0xff]
        %v5219 = vld [vmem:[#allocation4 + $0x40] sm:$0xff]
        %v5220 = vld [vmem:[#allocation4 + $0x48] sm:$0xff]
        %v5221 = vld [vmem:[#allocation4 + $0x50] sm:$0xff]
        %v5222 = vld [vmem:[#allocation4 + $0x58] sm:$0xff]
        %v5223 = vld [vmem:[#allocation4 + $0x60] sm:$0xff]
        %v5224 = vld [vmem:[#allocation4 + $0x68] sm:$0xff]
        %v5225 = vld [vmem:[#allocation4 + $0x70] sm:$0xff]
        %v5226 = vld [vmem:[#allocation4 + $0x78] sm:$0xff]
        %v5227 = vld [vmem:[#allocation4 + $0x80] sm:$0xff]
        %v5228 = vld [vmem:[#allocation4 + $0x88] sm:$0xff]
        %v5229 = vld [vmem:[#allocation4 + $0x90] sm:$0xff]
        %v5230 = vld [vmem:[#allocation4 + $0x98] sm:$0xff]
        %v5231 = vld [vmem:[#allocation4 + $0xa0] sm:$0xff]
        %v5232 = vld [vmem:[#allocation4 + $0xa8] sm:$0xff]
        %v5233 = vld [vmem:[#allocation4 + $0xb0] sm:$0xff]
        %v5234 = vld [vmem:[#allocation4 + $0xb8] sm:$0xff]
        %v5235 = vld [vmem:[#allocation4 + $0xc0] sm:$0xff]
        %v5236 = vld [vmem:[#allocation4 + $0xc8] sm:$0xff]
        %v5237 = vld [vmem:[#allocation4 + $0xd0] sm:$0xff]
        %v5238 = vld [vmem:[#allocation4 + $0xd8] sm:$0xff]
        %v5239 = vld [vmem:[#allocation4 + $0xe0] sm:$0xff]
        %v5240 = vld [vmem:[#allocation4 + $0xe8] sm:$0xff]
        %v5241 = vld [vmem:[#allocation4 + $0xf0] sm:$0xff]
        %v5242 = vld [vmem:[#allocation4 + $0xf8] sm:$0xff]
        %v5243 = vadd.f32 %v5179, %v5211
        %v5244 = vadd.f32 %v5180, %v5212
        %v5245 = vadd.f32 %v5181, %v5213
        %v5246 = vadd.f32 %v5182, %v5214
        %v5247 = vadd.f32 %v5183, %v5215
        %v5248 = vadd.f32 %v5184, %v5216
        %v5249 = vadd.f32 %v5185, %v5217
        %v5250 = vadd.f32 %v5186, %v5218
        %v5251 = vadd.f32 %v5187, %v5219
        %v5252 = vadd.f32 %v5188, %v5220
        %v5253 = vadd.f32 %v5189, %v5221
        %v5254 = vadd.f32 %v5190, %v5222
        %v5255 = vadd.f32 %v5191, %v5223
        %v5256 = vadd.f32 %v5192, %v5224
        %v5257 = vadd.f32 %v5193, %v5225
        %v5258 = vadd.f32 %v5194, %v5226
        %v5259 = vadd.f32 %v5195, %v5227
        %v5260 = vadd.f32 %v5196, %v5228
        %v5261 = vadd.f32 %v5197, %v5229
        %v5262 = vadd.f32 %v5198, %v5230
        %v5263 = vadd.f32 %v5199, %v5231
        %v5264 = vadd.f32 %v5200, %v5232
        %v5265 = vadd.f32 %v5201, %v5233
        %v5266 = vadd.f32 %v5202, %v5234
        %v5267 = vadd.f32 %v5203, %v5235
        %v5268 = vadd.f32 %v5204, %v5236
        %v5269 = vadd.f32 %v5205, %v5237
        %v5270 = vadd.f32 %v5206, %v5238
        %v5271 = vadd.f32 %v5207, %v5239
        %v5272 = vadd.f32 %v5208, %v5240
        %v5273 = vadd.f32 %v5209, %v5241
        %v5274 = vadd.f32 %v5210, %v5242
        %v5275 = vmax.f32 %v5243, 0.0
        %v5276 = vmax.f32 %v5244, 0.0
        %v5277 = vmax.f32 %v5245, 0.0
        %v5278 = vmax.f32 %v5246, 0.0
        %v5279 = vmax.f32 %v5247, 0.0
        %v5280 = vmax.f32 %v5248, 0.0
        %v5281 = vmax.f32 %v5249, 0.0
        %v5282 = vmax.f32 %v5250, 0.0
        %v5283 = vmax.f32 %v5251, 0.0
        %v5284 = vmax.f32 %v5252, 0.0
        %v5285 = vmax.f32 %v5253, 0.0
        %v5286 = vmax.f32 %v5254, 0.0
        %v5287 = vmax.f32 %v5255, 0.0
        %v5288 = vmax.f32 %v5256, 0.0
        %v5289 = vmax.f32 %v5257, 0.0
        %v5290 = vmax.f32 %v5258, 0.0
        %v5291 = vmax.f32 %v5259, 0.0
        %v5292 = vmax.f32 %v5260, 0.0
        %v5293 = vmax.f32 %v5261, 0.0
        %v5294 = vmax.f32 %v5262, 0.0
        %v5295 = vmax.f32 %v5263, 0.0
        %v5296 = vmax.f32 %v5264, 0.0
        %v5297 = vmax.f32 %v5265, 0.0
        %v5298 = vmax.f32 %v5266, 0.0
        %v5299 = vmax.f32 %v5267, 0.0
        %v5300 = vmax.f32 %v5268, 0.0
        %v5301 = vmax.f32 %v5269, 0.0
        %v5302 = vmax.f32 %v5270, 0.0
        %v5303 = vmax.f32 %v5271, 0.0
        %v5304 = vmax.f32 %v5272, 0.0
        %v5305 = vmax.f32 %v5273, 0.0
        %v5306 = vmax.f32 %v5274, 0.0
        %v5307 = vmin.f32 %v5275, 6.0
        %v5308 = vmin.f32 %v5276, 6.0
        %v5309 = vmin.f32 %v5277, 6.0
        %v5310 = vmin.f32 %v5278, 6.0
        %v5311 = vmin.f32 %v5279, 6.0
        %v5312 = vmin.f32 %v5280, 6.0
        %v5313 = vmin.f32 %v5281, 6.0
        %v5314 = vmin.f32 %v5282, 6.0
        %v5315 = vmin.f32 %v5283, 6.0
        %v5316 = vmin.f32 %v5284, 6.0
        %v5317 = vmin.f32 %v5285, 6.0
        %v5318 = vmin.f32 %v5286, 6.0
        %v5319 = vmin.f32 %v5287, 6.0
        %v5320 = vmin.f32 %v5288, 6.0
        %v5321 = vmin.f32 %v5289, 6.0
        %v5322 = vmin.f32 %v5290, 6.0
        %v5323 = vmin.f32 %v5291, 6.0
        %v5324 = vmin.f32 %v5292, 6.0
        %v5325 = vmin.f32 %v5293, 6.0
        %v5326 = vmin.f32 %v5294, 6.0
        %v5327 = vmin.f32 %v5295, 6.0
        %v5328 = vmin.f32 %v5296, 6.0
        %v5329 = vmin.f32 %v5297, 6.0
        %v5330 = vmin.f32 %v5298, 6.0
        %v5331 = vmin.f32 %v5299, 6.0
        %v5332 = vmin.f32 %v5300, 6.0
        %v5333 = vmin.f32 %v5301, 6.0
        %v5334 = vmin.f32 %v5302, 6.0
        %v5335 = vmin.f32 %v5303, 6.0
        %v5336 = vmin.f32 %v5304, 6.0
        %v5337 = vmin.f32 %v5305, 6.0
        %v5338 = vmin.f32 %v5306, 6.0
        %5339 = vst [vmem:[%s352] sm:$0xff] %v5307
        %5340 = vst [vmem:[%s352 + $0x8] sm:$0xff] %v5308
        %5341 = vst [vmem:[%s352 + $0x10] sm:$0xff] %v5309
        %5342 = vst [vmem:[%s352 + $0x18] sm:$0xff] %v5310
        %5343 = vst [vmem:[%s352 + $0x20] sm:$0xff] %v5311
        %5344 = vst [vmem:[%s352 + $0x28] sm:$0xff] %v5312
        %5345 = vst [vmem:[%s352 + $0x30] sm:$0xff] %v5313
        %5346 = vst [vmem:[%s352 + $0x38] sm:$0xff] %v5314
        %5347 = vst [vmem:[%s352 + $0x40] sm:$0xff] %v5315
        %5348 = vst [vmem:[%s352 + $0x48] sm:$0xff] %v5316
        %5349 = vst [vmem:[%s352 + $0x50] sm:$0xff] %v5317
        %5350 = vst [vmem:[%s352 + $0x58] sm:$0xff] %v5318
        %5351 = vst [vmem:[%s352 + $0x60] sm:$0xff] %v5319
        %5352 = vst [vmem:[%s352 + $0x68] sm:$0xff] %v5320
        %5353 = vst [vmem:[%s352 + $0x70] sm:$0xff] %v5321
        %5354 = vst [vmem:[%s352 + $0x78] sm:$0xff] %v5322
        %5355 = vst [vmem:[%s352 + $0x80] sm:$0xff] %v5323
        %5356 = vst [vmem:[%s352 + $0x88] sm:$0xff] %v5324
        %5357 = vst [vmem:[%s352 + $0x90] sm:$0xff] %v5325
        %5358 = vst [vmem:[%s352 + $0x98] sm:$0xff] %v5326
        %5359 = vst [vmem:[%s352 + $0xa0] sm:$0xff] %v5327
        %5360 = vst [vmem:[%s352 + $0xa8] sm:$0xff] %v5328
        %5361 = vst [vmem:[%s352 + $0xb0] sm:$0xff] %v5329
        %5362 = vst [vmem:[%s352 + $0xb8] sm:$0xff] %v5330
        %5363 = vst [vmem:[%s352 + $0xc0] sm:$0xff] %v5331
        %5364 = vst [vmem:[%s352 + $0xc8] sm:$0xff] %v5332
        %5365 = vst [vmem:[%s352 + $0xd0] sm:$0xff] %v5333
        %5366 = vst [vmem:[%s352 + $0xd8] sm:$0xff] %v5334
        %5367 = vst [vmem:[%s352 + $0xe0] sm:$0xff] %v5335
        %5368 = vst [vmem:[%s352 + $0xe8] sm:$0xff] %v5336
        %5369 = vst [vmem:[%s352 + $0xf0] sm:$0xff] %v5337
        %5370 = vst [vmem:[%s352 + $0xf8] sm:$0xff] %v5338
        %s5371 = sand.u32 %s247, 1
        %s5372 = scalar_lea.sflag [#allocation6], %s5371
        %s5373 = sand.u32 %s247, 1
        %s5374 = smul.addr %s5373, 256
        %s5375 = scalar_lea.vmem [#allocation5], %s5374
        // Predicated region
        $region61: #{tpu_custom_call.1} parent=59 // pred_check
          %p5376 = pneg %p257
        $region62: #{tpu_custom_call.1} parent=59 // pred_check_branch
          %5378 = sbr.rel (%p5376) target = $region64
        $region63: #{tpu_custom_call.1} parent=59 // pred_region
          %s5380 = ssub.s32 4096, 4096
          %5381 = vsyncadd %s5372, %s5380
          %s5382 = smul.addr %s24, 32
          %s5383 = smul.addr %s5382, 128
          %s5384 = scalar_lea.hbm %s10, %s5383
          %s5385 = sshll.u32 %s5375, 4
          %s5386 = int_to_ptr.vmem [resolvable:$true] %s5385
          %5391 = dma.vmem_to_hbm [thread:$0]  %s5386, 4096, %s5384, %s5372, 128, 128, 8
        $region64: #{tpu_custom_call.1} parent=59 // pred_fallthru
          _
      $region60: #{tpu_custom_call.1} parent=5 // pred_fallthru
        _
      %p5392 = scmp.le.s32.totalorder 2, %s19
      // Predicated region
      $region65: #{tpu_custom_call.1} parent=5 // pred_check
        %p5393 = pneg %p5392
      $region66: #{tpu_custom_call.1} parent=5 // pred_check_branch
        %5395 = sbr.rel (%p5393) target = $region68
      $region67: #{tpu_custom_call.1} parent=5 // pred_region
        %s5396 = ssub.s32 %s19, 2
        // Predicated region
        $region69: #{tpu_custom_call.1} parent=67 // pred_check
          %p5397 = pneg %p263
        $region70: #{tpu_custom_call.1} parent=67 // pred_check_branch
          %5399 = sbr.rel (%p5397) target = $region72
        $region71: #{tpu_custom_call.1} parent=67 // pred_region
          %s5400 = sand.u32 %s248, 1
          %s5401 = scalar_lea.sflag [#allocation6], %s5400
          %s5402 = sand.u32 %s248, 1
          %s5403 = smul.addr %s5402, 256
          %s5404 = scalar_lea.vmem [#allocation5], %s5403
          %5405 = dma.done %s5401, 4096
        $region72: #{tpu_custom_call.1} parent=67 // pred_fallthru
          _
      $region68: #{tpu_custom_call.1} parent=5 // pred_fallthru
        _
    $region6: #{tpu_custom_call.1} parent=1 // loop_footer
      %s23 = sadd.s32 1, %s19
    $region7: #{tpu_custom_call.1} parent=1 // loop_footer_branch
      %18 = sbr.rel target = $region3
    $region8: #{tpu_custom_call.1} parent=1 // loop_exit
      _
    %5406 = vsyncpa [#allocation6], 1
    %s5407 = scalar_lea.sflag [#allocation6], 1
    %5408 = vsyncpa %s5407, 1

</llo_original>
